<compile_context>
chip_gen: v7x
topology: tpu7x:2x2x1
jax: 0.10.0
libtpu: 0.0.40
codegen_flags: <defaults>
</compile_context>

<pallas_src>
import functools
import math

import jax
import jax.numpy as jnp
from jax.experimental import pallas as pl
from jax.experimental.pallas import tpu as pltpu

_VMEM_LIMIT = 32 * 1024 * 1024   # explicit scoped-VMEM budget; fits v7x's 64 MiB


# ---------------------------------------------------------------------------
# Kernel 1: transformer encoder, one layer per grid step (layer-streamed).
# grid = (batch_blocks [parallel], num_layers [arbitrary]); the output block is
# resident across the layer axis and doubles as the activation carry.
# ---------------------------------------------------------------------------
def _encoder_layer_kernel(
    x_ref, pe_ref, encw_ref, encb_ref,
    wqkv_ref, bqkv_ref, wo_ref, bo_ref,
    ln1g_ref, ln1b_ref, w1_ref, b1_ref, w2_ref, b2_ref, ln2g_ref, ln2b_ref,
    out_ref,
    *, num_heads, nb_block, l_attn, scale,
):
    f32, bf16 = jnp.float32, jnp.bfloat16
    E = out_ref.shape[-1]
    dh = E // num_heads
    Mb = nb_block * l_attn

    def layer_norm(v, g, b):
        mu = jnp.mean(v, axis=-1, keepdims=True)
        cen = v - mu
        var = jnp.mean(cen * cen, axis=-1, keepdims=True)
        return cen * jax.lax.rsqrt(var + 1e-5) * g + b

    # Layer 0 of each batch block: input projection, sqrt(ninp) scale, pos-enc.
    @pl.when(pl.program_id(1) == 0)
    def _init():
        xi = jnp.dot(x_ref[...].astype(bf16), encw_ref[...],
                     preferred_element_type=f32) + encb_ref[...]
        xi = xi * scale
        xi = (xi.reshape(nb_block, l_attn, E) + pe_ref[...]).reshape(Mb, E)
        out_ref[...] = xi

    x = out_ref[...]            # activations carried in the resident output block

    # ---- multi-head self attention (packed QKV; 1/sqrt(dh) folded into Wq) ----
    qkv = (jnp.dot(x.astype(bf16), wqkv_ref[...], preferred_element_type=f32)
           + bqkv_ref[...])
    qkv3 = qkv.reshape(nb_block, l_attn, 3 * E)
    heads = []
    for h in range(num_heads):
        q_h = qkv3[:, :, h * dh:(h + 1) * dh].astype(bf16)
        k_h = qkv3[:, :, E + h * dh:E + (h + 1) * dh].astype(bf16)
        v_h = qkv3[:, :, 2 * E + h * dh:2 * E + (h + 1) * dh].astype(bf16)
        s = jnp.einsum("bid,bjd->bij", q_h, k_h, preferred_element_type=f32)
        s = s - jnp.max(s, axis=-1, keepdims=True)
        p = jnp.exp(s)
        p = p * pl.reciprocal(jnp.sum(p, axis=-1, keepdims=True), approx=True)
        heads.append(jnp.einsum("bij,bjd->bid", p.astype(bf16), v_h,
                                preferred_element_type=f32))
    # concat(heads) then ONE full-K (Mb, E) @ (E, E) output projection.
    o_cat = jnp.concatenate(heads, axis=-1).reshape(Mb, E).astype(bf16)
    attn = jnp.dot(o_cat, wo_ref[...], preferred_element_type=f32) + bo_ref[...]
    x = layer_norm(x + attn, ln1g_ref[...], ln1b_ref[...])

    # ---- feed forward (relu) ----
    ff = jnp.dot(x.astype(bf16), w1_ref[...], preferred_element_type=f32) + b1_ref[...]
    ff = jnp.maximum(ff, 0.0)
    ff = jnp.dot(ff.astype(bf16), w2_ref[...], preferred_element_type=f32) + b2_ref[...]
    x = layer_norm(x + ff, ln2g_ref[...], ln2b_ref[...])

    out_ref[...] = x.astype(out_ref.dtype)


def fused_transformer_encoder(x_flat, pe, packed, *, num_heads, n_batch, l_attn, nb_grid):
    E = packed["enc_b"].shape[-1]
    num_layers = packed["wqkv"].shape[0]
    ntoken = x_flat.shape[-1]
    nb_block = n_batch // nb_grid
    Mb = nb_block * l_attn

    def full_spec(a):
        nd = a.ndim
        return pl.BlockSpec(a.shape, lambda b, l, _nd=nd: (0,) * _nd)

    def layer_spec(a):
        nd = a.ndim
        return pl.BlockSpec((None,) + tuple(a.shape[1:]),
                            lambda b, l, _nd=nd: (l,) + (0,) * (_nd - 1))

    operands = (
        x_flat, pe, packed["enc_w"], packed["enc_b"],
        packed["wqkv"], packed["bqkv"], packed["wo"], packed["bo"],
        packed["ln1g"], packed["ln1b"],
        packed["w1"], packed["b1"], packed["w2"], packed["b2"],
        packed["ln2g"], packed["ln2b"],
    )
    in_specs = [
        pl.BlockSpec((Mb, ntoken), lambda b, l: (b, 0)),   # src rows (per batch block)
        full_spec(pe),
        full_spec(packed["enc_w"]), full_spec(packed["enc_b"]),
        layer_spec(packed["wqkv"]), layer_spec(packed["bqkv"]),
        layer_spec(packed["wo"]), layer_spec(packed["bo"]),
        layer_spec(packed["ln1g"]), layer_spec(packed["ln1b"]),
        layer_spec(packed["w1"]), layer_spec(packed["b1"]),
        layer_spec(packed["w2"]), layer_spec(packed["b2"]),
        layer_spec(packed["ln2g"]), layer_spec(packed["ln2b"]),
    ]
    kernel = functools.partial(
        _encoder_layer_kernel, num_heads=num_heads,
        nb_block=nb_block, l_attn=l_attn, scale=math.sqrt(float(E)))
    return pl.pallas_call(
        kernel,
        grid=(nb_grid, num_layers),
        in_specs=in_specs,
        out_specs=pl.BlockSpec((Mb, E), lambda b, l: (b, 0)),
        out_shape=jax.ShapeDtypeStruct((n_batch * l_attn, E), jnp.float32),
        compiler_params=pltpu.CompilerParams(
            dimension_semantics=("parallel", "arbitrary"),
            vmem_limit_bytes=_VMEM_LIMIT),
    )(*operands)


# ---------------------------------------------------------------------------
# Kernel 2: greedy LSTM decoder.  Output head folded into the recurrence so the
# serial loop has ONE matmul per step; outputs computed by a single batched
# matmul after the loop.  Decode rows are independent -> 'parallel' grid axis.
# ---------------------------------------------------------------------------
def _lstm_decoder_kernel(h0_ref, pre0_ref, whh_ref, wrec_ref, brec_ref,
                         wout_ref, bout_ref, out_ref, hseq_ref,
                         *, hidden_dim, max_len):
    f32 = jnp.float32
    H = hidden_dim
    nb = h0_ref.shape[0]

    whh = whh_ref[...]
    wrec = wrec_ref[...]
    brec = brec_ref[...]

    def cell(gates, c):                      # nn.LSTM gate order [i, f, g, o]
        i_g = jax.nn.sigmoid(gates[:, 0 * H:1 * H])
        f_g = jax.nn.sigmoid(gates[:, 1 * H:2 * H])
        g_g = jnp.tanh(gates[:, 2 * H:3 * H])
        o_g = jax.nn.sigmoid(gates[:, 3 * H:4 * H])
        c_new = f_g * c + i_g * g_g
        h_new = o_g * jnp.tanh(c_new)
        return h_new, c_new

    h0 = h0_ref[...].astype(f32)             # hidden and cell both seeded from
    # step 0: input is tgt[:, 0]; its W_ih projection (pre0) is precomputed.
    gates0 = jnp.dot(h0, whh, preferred_element_type=f32) + pre0_ref[...]
    h, c = cell(gates0, h0)
    hseq_ref[0] = h

    # steps 1..T-1: fed-back input folded into the recurrence:
    #   gates_t = h_t @ (W_hh + W_out W_ih) + (b + b_out W_ih)
    def step(t, carry):
        h, c = carry
        gates = jnp.dot(h, wrec, preferred_element_type=f32) + brec
        h, c = cell(gates, c)
        hseq_ref[t] = h
        return (h, c)
    jax.lax.fori_loop(1, max_len, step, (h, c))

    # Single lane-dense batched output head for all decode steps.
    hs = hseq_ref[...].reshape(max_len * nb, H)
    y = jnp.dot(hs, wout_ref[...], preferred_element_type=f32) + bout_ref[...]
    out_ref[...] = y.reshape(max_len, nb, out_ref.shape[-1]).astype(out_ref.dtype)


def fused_lstm_decoder(h0, x0, packed, *, max_len):
    n_dec, H = h0.shape
    ntoken = packed["out_b"].shape[-1]
    # One-off projection of the first (teacher-provided) input frame.
    pre0 = jnp.dot(x0, packed["lstm_wih"]) + packed["lstm_b"]        # (n_dec, 4H)

    # Split independent decode rows across 2 TCs only when (8,128)-tileable.
    dec_grid = 2 if n_dec % 16 == 0 else 1
    nb = n_dec // dec_grid

    operands = (h0, pre0, packed["lstm_whh"], packed["lstm_wrec"],
                packed["lstm_brec"], packed["out_w"], packed["out_b"])

    def full_spec(a):
        nd = a.ndim
        return pl.BlockSpec(a.shape, lambda b, _nd=nd: (0,) * _nd)

    in_specs = [
        pl.BlockSpec((nb, H), lambda b: (b, 0)),
        pl.BlockSpec((nb, 4 * H), lambda b: (b, 0)),
        full_spec(packed["lstm_whh"]), full_spec(packed["lstm_wrec"]),
        full_spec(packed["lstm_brec"]),
        full_spec(packed["out_w"]), full_spec(packed["out_b"]),
    ]
    kernel = functools.partial(_lstm_decoder_kernel, hidden_dim=H, max_len=max_len)
    return pl.pallas_call(
        kernel,
        grid=(dec_grid,),
        in_specs=in_specs,
        out_specs=pl.BlockSpec((max_len, nb, ntoken), lambda b: (0, b, 0)),
        out_shape=jax.ShapeDtypeStruct((max_len, n_dec, ntoken), jnp.float32),
        scratch_shapes=[pltpu.VMEM((max_len, nb, H), jnp.float32)],
        compiler_params=pltpu.CompilerParams(
            dimension_semantics=("parallel",),
            vmem_limit_bytes=_VMEM_LIMIT),
    )(*operands)


# ---------------------------------------------------------------------------
# JAX glue: layout flattening, positional-encoding table, forward pass
# ---------------------------------------------------------------------------
def positional_encoding_table(length, d_model):
    pos = jnp.arange(length, dtype=jnp.float32)[:, None]
    div = jnp.exp(jnp.arange(0, d_model, 2, dtype=jnp.float32)
                  * (-math.log(10000.0) / d_model))
    pe = jnp.zeros((length, d_model), jnp.float32)
    pe = pe.at[:, 0::2].set(jnp.sin(pos * div))
    pe = pe.at[:, 1::2].set(jnp.cos(pos * div))
    return pe


def transformer_lstm_forward(packed, src, tgt, *, num_heads, max_len=None):
    """Eval-mode forward of TransformerLSTMModel (2 pallas_calls total)."""
    l_attn, n_batch, ntoken = src.shape      # dim0 = attended axis, dim1 = batch axis
    E = packed["enc_b"].shape[-1]
    hidden_dim = packed["lstm_whh"].shape[0]
    assert hidden_dim == E, "LSTM hidden_dim must equal ninp (encoder state seeds LSTM state)"
    assert tgt.shape[0] == l_attn and tgt.shape[2] == ntoken

    # Flatten to (encoder-batch major, attended-axis minor) rows once, in XLA.
    x_flat = jnp.transpose(src, (1, 0, 2)).reshape(n_batch * l_attn, ntoken)
    pe = positional_encoding_table(l_attn, E)          # broadcast-added in-kernel

    # 2 batch blocks (v7x 2nd TensorCore) only when the row block stays tileable.
    nb_grid = 2 if (n_batch % 2 == 0 and ((n_batch // 2) * l_attn) % 8 == 0) else 1
    enc_out = fused_transformer_encoder(
        x_flat, pe, packed, num_heads=num_heads,
        n_batch=n_batch, l_attn=l_attn, nb_grid=nb_grid)      # (n_batch*l_attn, E)
    enc_state = enc_out[(n_batch - 1) * l_attn:, :]           # mem[:, -1] -> (l_attn, E)

    steps = tgt.shape[1] if max_len is None else max_len
    x0 = tgt[:, 0, :]                                         # first target frame
    out_tbn = fused_lstm_decoder(enc_state, x0, packed, max_len=steps)  # (T, B, ntoken)
    return jnp.transpose(out_tbn, (1, 0, 2))                  # batch-first, like LSTMDecoder


# ---------------------------------------------------------------------------
# Deterministic synthetic parameters + packing
# (QKV packed with 1/sqrt(dh) folded into Wq; encoder matmul weights in bf16;
#  LSTM output head folded into the recurrence.)
# ---------------------------------------------------------------------------
def init_params(key, ntoken, ninp, hidden_dim, num_layers):
    keys = iter(jax.random.split(key, 512))

    def xavier(shape):
        fan_in, fan_out = shape
        lim = math.sqrt(6.0 / (fan_in + fan_out))
        return jax.random.uniform(next(keys), shape, jnp.float32, -lim, lim)

    def uni(shape, lim):
        return jax.random.uniform(next(keys), shape, jnp.float32, -lim, lim)

    enc_layers = [dict(
        wq=xavier((ninp, ninp)), bq=jnp.zeros((ninp,), jnp.float32),
        wk=xavier((ninp, ninp)), bk=jnp.zeros((ninp,), jnp.float32),
        wv=xavier((ninp, ninp)), bv=jnp.zeros((ninp,), jnp.float32),
        wo=xavier((ninp, ninp)), bo=jnp.zeros((ninp,), jnp.float32),
        w1=xavier((ninp, hidden_dim)), b1=jnp.zeros((hidden_dim,), jnp.float32),
        w2=xavier((hidden_dim, ninp)), b2=jnp.zeros((ninp,), jnp.float32),
        ln1g=jnp.ones((ninp,), jnp.float32), ln1b=jnp.zeros((ninp,), jnp.float32),
        ln2g=jnp.ones((ninp,), jnp.float32), ln2b=jnp.zeros((ninp,), jnp.float32),
    ) for _ in range(num_layers)]

    return dict(
        encoder=dict(w=uni((ntoken, ninp), 0.1), b=jnp.zeros((ninp,), jnp.float32)),
        enc_layers=enc_layers,
        lstm=dict(                                   # nn.LSTM, gate order [i, f, g, o]
            w_ih=uni((ntoken, 4 * hidden_dim), 0.08),
            w_hh=uni((hidden_dim, 4 * hidden_dim), 0.08),
            b_ih=uni((4 * hidden_dim,), 0.08),
            b_hh=uni((4 * hidden_dim,), 0.08),
        ),
        out=dict(w=uni((hidden_dim, ntoken), 0.08), b=uni((ntoken,), 0.08)),
    )


def pack_params(p, num_heads):
    E = p["encoder"]["w"].shape[1]
    dh = E // num_heads
    scaling = 1.0 / math.sqrt(dh)             # fold MHA's q-scaling into Wq / bq
    layers = p["enc_layers"]
    bf16 = jnp.bfloat16

    def stack_w(name):                        # (L, in, out) bf16 MXU operands
        return jnp.stack([lp[name] for lp in layers]).astype(bf16)

    def stack_b(name):                        # (L, 1, out) f32
        return jnp.stack([lp[name][None, :] for lp in layers])

    wqkv = jnp.stack([jnp.concatenate(
        [lp["wq"] * scaling, lp["wk"], lp["wv"]], axis=1)
        for lp in layers]).astype(bf16)                                   # (L, E, 3E)
    bqkv = jnp.stack([jnp.concatenate(
        [lp["bq"] * scaling, lp["bk"], lp["bv"]])[None, :] for lp in layers])  # (L, 1, 3E)

    wih, whh = p["lstm"]["w_ih"], p["lstm"]["w_hh"]
    bg = (p["lstm"]["b_ih"] + p["lstm"]["b_hh"])[None, :]
    wout, bout = p["out"]["w"], p["out"]["b"][None, :]
    # Greedy feedback x_t = h_t @ Wout + bout folded into the recurrence:
    #   gates_t = h_t @ (Whh + Wout Wih) + (b + bout Wih)
    wrec = whh + jnp.dot(wout, wih)
    brec = bg + jnp.dot(bout, wih)

    return dict(
        enc_w=p["encoder"]["w"].astype(bf16), enc_b=p["encoder"]["b"][None, :],
        wqkv=wqkv, bqkv=bqkv,
        wo=stack_w("wo"), bo=stack_b("bo"),
        ln1g=stack_b("ln1g"), ln1b=stack_b("ln1b"),
        w1=stack_w("w1"), b1=stack_b("b1"),
        w2=stack_w("w2"), b2=stack_b("b2"),
        ln2g=stack_b("ln2g"), ln2b=stack_b("ln2b"),
        lstm_wih=wih, lstm_whh=whh, lstm_b=bg,
        lstm_wrec=wrec, lstm_brec=brec,
        out_w=wout, out_b=bout,
    )


if __name__ == "__main__":
    NTOKEN, NINP, NHEADS, NLAYERS = 16, 32, 2, 2
    HIDDEN = NINP        # fairmotion instantiates with hidden_dim == ninp; the
                         # reference forward requires it (encoder state -> LSTM state)
    B, S, T = 4, 8, 4    # src (B, S, ntoken), tgt (B, T, ntoken), batch-first

    key = jax.random.PRNGKey(0)
    kp, ks, kt = jax.random.split(key, 3)
    params = init_params(kp, NTOKEN, NINP, HIDDEN, NLAYERS)
    packed = pack_params(params, num_heads=NHEADS)

    src = jax.random.normal(ks, (B, S, NTOKEN), jnp.float32)
    tgt = jax.random.normal(kt, (B, T, NTOKEN), jnp.float32)

    fwd = jax.jit(functools.partial(transformer_lstm_forward, num_heads=NHEADS))
    out = fwd(packed, src, tgt)
    jax.block_until_ready(out)

    assert out.shape == (B, T, NTOKEN)
    assert bool(jnp.all(jnp.isfinite(out)))
    print("KERNEL_OK")
</pallas_src>

<mosaic_0001>
module attributes {stable_mosaic.version = 11 : i64} {
  func.func @_encoder_layer_kernel(%arg0: i32, %arg1: i32, %arg2: memref<16x16xf32, #tpu.memory_space<vmem>>, %arg3: memref<4x32xf32, #tpu.memory_space<vmem>>, %arg4: memref<16x32xbf16, #tpu.memory_space<vmem>>, %arg5: memref<1x32xf32, #tpu.memory_space<vmem>>, %arg6: memref<1x32x96xbf16, #tpu.memory_space<vmem>>, %arg7: memref<1x1x96xf32, #tpu.memory_space<vmem>>, %arg8: memref<1x32x32xbf16, #tpu.memory_space<vmem>>, %arg9: memref<1x1x32xf32, #tpu.memory_space<vmem>>, %arg10: memref<1x1x32xf32, #tpu.memory_space<vmem>>, %arg11: memref<1x1x32xf32, #tpu.memory_space<vmem>>, %arg12: memref<1x32x32xbf16, #tpu.memory_space<vmem>>, %arg13: memref<1x1x32xf32, #tpu.memory_space<vmem>>, %arg14: memref<1x32x32xbf16, #tpu.memory_space<vmem>>, %arg15: memref<1x1x32xf32, #tpu.memory_space<vmem>>, %arg16: memref<1x1x32xf32, #tpu.memory_space<vmem>>, %arg17: memref<1x1x32xf32, #tpu.memory_space<vmem>>, %arg18: memref<16x32xf32, #tpu.memory_space<vmem>>) attributes {dimension_semantics = [#tpu.dimension_semantics<parallel>, #tpu.dimension_semantics<arbitrary>], iteration_bounds = array<i64: 2, 2>, scalar_prefetch = 0 : i64, scratch_operands = 0 : i64, tpu.core_type = #tpu.core_type<tc>, window_params = [{transform_indices = @transform_0, window_bounds = array<i64: 16, 16>}, {pipeline_mode = #tpu.pipeline_mode<synchronous>, transform_indices = @transform_1, window_bounds = array<i64: 4, 32>}, {pipeline_mode = #tpu.pipeline_mode<synchronous>, transform_indices = @transform_2, window_bounds = array<i64: 16, 32>}, {pipeline_mode = #tpu.pipeline_mode<synchronous>, transform_indices = @transform_3, window_bounds = array<i64: 1, 32>}, {transform_indices = @transform_4, window_bounds = array<i64: 1, 32, 96>}, {transform_indices = @transform_5, window_bounds = array<i64: 1, 1, 96>}, {transform_indices = @transform_6, window_bounds = array<i64: 1, 32, 32>}, {transform_indices = @transform_7, window_bounds = array<i64: 1, 1, 32>}, {transform_indices = @transform_8, window_bounds = array<i64: 1, 1, 32>}, {transform_indices = @transform_9, window_bounds = array<i64: 1, 1, 32>}, {transform_indices = @transform_10, window_bounds = array<i64: 1, 32, 32>}, {transform_indices = @transform_11, window_bounds = array<i64: 1, 1, 32>}, {transform_indices = @transform_12, window_bounds = array<i64: 1, 32, 32>}, {transform_indices = @transform_13, window_bounds = array<i64: 1, 1, 32>}, {transform_indices = @transform_14, window_bounds = array<i64: 1, 1, 32>}, {transform_indices = @transform_15, window_bounds = array<i64: 1, 1, 32>}, {transform_indices = @transform_16, window_bounds = array<i64: 16, 32>}]} {
    %c0_i32 = arith.constant 0 : i32
    %0 = arith.cmpi eq, %arg1, %c0_i32 : i32
    %1 = arith.extui %0 : i1 to i32
    %c0_i32_0 = arith.constant 0 : i32
    %2 = arith.cmpi ne, %1, %c0_i32_0 : i32
    scf.if %2 {
      %c0_62 = arith.constant 0 : index
      %c0_63 = arith.constant 0 : index
      %130 = vector.load %arg2[%c0_62, %c0_63] : memref<16x16xf32, #tpu.memory_space<vmem>>, vector<16x16xf32>
      %131 = arith.truncf %130 : vector<16x16xf32> to vector<16x16xbf16>
      %c0_64 = arith.constant 0 : index
      %c0_65 = arith.constant 0 : index
      %132 = vector.load %arg4[%c0_64, %c0_65] : memref<16x32xbf16, #tpu.memory_space<vmem>>, vector<16x32xbf16>
      %cst_66 = arith.constant dense<0.000000e+00> : vector<16x32xf32>
      %133 = tpu.matmul %131, %132, %cst_66 {dimension_numbers = #tpu.dot_dimension_numbers<[1], [0], [0], [1], [0, 0, 1, 1], [], []>} : vector<16x16xbf16>, vector<16x32xbf16>, vector<16x32xf32> -> vector<16x32xf32>
      %c0_67 = arith.constant 0 : index
      %c0_68 = arith.constant 0 : index
      %134 = vector.load %arg5[%c0_67, %c0_68] : memref<1x32xf32, #tpu.memory_space<vmem>>, vector<1x32xf32>
      %135 = vector.broadcast %134 : vector<1x32xf32> to vector<16x32xf32>
      %136 = arith.addf %133, %135 : vector<16x32xf32>
      %cst_69 = arith.constant 5.65685415 : f32
      %137 = vector.broadcast %cst_69 : f32 to vector<16x32xf32>
      %138 = arith.mulf %136, %137 : vector<16x32xf32>
      %139 = vector.shape_cast %138 : vector<16x32xf32> to vector<4x4x32xf32>
      %c0_70 = arith.constant 0 : index
      %c0_71 = arith.constant 0 : index
      %140 = vector.load %arg3[%c0_70, %c0_71] : memref<4x32xf32, #tpu.memory_space<vmem>>, vector<4x32xf32>
      %141 = vector.shape_cast %140 : vector<4x32xf32> to vector<1x4x32xf32>
      %142 = vector.broadcast %141 : vector<1x4x32xf32> to vector<4x4x32xf32>
      %143 = arith.addf %139, %142 : vector<4x4x32xf32>
      %144 = vector.shape_cast %143 : vector<4x4x32xf32> to vector<16x32xf32>
      %c0_72 = arith.constant 0 : index
      %c0_73 = arith.constant 0 : index
      %145 = vector.load %arg18[%c0_72, %c0_73] : memref<16x32xf32, #tpu.memory_space<vmem>>, vector<16x32xf32>
      tpu.vector_store %arg18[%c0_72, %c0_73], %144 {strides = array<i32>} : memref<16x32xf32, #tpu.memory_space<vmem>>, vector<16x32xf32>,
    } else {
    }
    %c0 = arith.constant 0 : index
    %c0_1 = arith.constant 0 : index
    %3 = vector.load %arg18[%c0, %c0_1] : memref<16x32xf32, #tpu.memory_space<vmem>>, vector<16x32xf32>
    %4 = arith.truncf %3 : vector<16x32xf32> to vector<16x32xbf16>
    %c0_2 = arith.constant 0 : index
    %c0_3 = arith.constant 0 : index
    %c0_4 = arith.constant 0 : index
    %5 = vector.load %arg6[%c0_2, %c0_3, %c0_4] : memref<1x32x96xbf16, #tpu.memory_space<vmem>>, vector<1x32x96xbf16>
    %6 = vector.shape_cast %5 : vector<1x32x96xbf16> to vector<32x96xbf16>
    %cst = arith.constant dense<0.000000e+00> : vector<16x96xf32>
    %7 = tpu.matmul %4, %6, %cst {dimension_numbers = #tpu.dot_dimension_numbers<[1], [0], [0], [1], [0, 0, 1, 1], [], []>} : vector<16x32xbf16>, vector<32x96xbf16>, vector<16x96xf32> -> vector<16x96xf32>
    %c0_5 = arith.constant 0 : index
    %c0_6 = arith.constant 0 : index
    %c0_7 = arith.constant 0 : index
    %8 = vector.load %arg7[%c0_5, %c0_6, %c0_7] : memref<1x1x96xf32, #tpu.memory_space<vmem>>, vector<1x1x96xf32>
    %9 = vector.shape_cast %8 : vector<1x1x96xf32> to vector<1x96xf32>
    %10 = vector.broadcast %9 : vector<1x96xf32> to vector<16x96xf32>
    %11 = arith.addf %7, %10 : vector<16x96xf32>
    %12 = vector.shape_cast %11 : vector<16x96xf32> to vector<4x4x96xf32>
    %13 = vector.extract_strided_slice %12 {offsets = [0, 0, 0], sizes = [4, 4, 16], strides = [1, 1, 1]} : vector<4x4x96xf32> to vector<4x4x16xf32>
    %14 = arith.truncf %13 : vector<4x4x16xf32> to vector<4x4x16xbf16>
    %15 = vector.extract_strided_slice %12 {offsets = [0, 0, 32], sizes = [4, 4, 16], strides = [1, 1, 1]} : vector<4x4x96xf32> to vector<4x4x16xf32>
    %16 = arith.truncf %15 : vector<4x4x16xf32> to vector<4x4x16xbf16>
    %17 = vector.extract_strided_slice %12 {offsets = [0, 0, 64], sizes = [4, 4, 16], strides = [1, 1, 1]} : vector<4x4x96xf32> to vector<4x4x16xf32>
    %18 = arith.truncf %17 : vector<4x4x16xf32> to vector<4x4x16xbf16>
    "tpu.trace_start"() <{level = 10 : i32, message = "bid,bjd->bij"}> : () -> ()
    %cst_8 = arith.constant dense<0.000000e+00> : vector<4x4x4xf32>
    %19 = tpu.matmul %14, %16, %cst_8 {dimension_numbers = #tpu.dot_dimension_numbers<[2], [2], [1], [1], [0, 0, 0, 1, 1, 1], [0], [0]>} : vector<4x4x16xbf16>, vector<4x4x16xbf16>, vector<4x4x4xf32> -> vector<4x4x4xf32>
    "tpu.trace_stop"() : () -> ()
    %cst_9 = arith.constant dense<0xFF800000> : vector<4x4xf32>
    %20 = vector.multi_reduction <maximumf>, %19, %cst_9 [2] : vector<4x4x4xf32> to vector<4x4xf32>
    %21 = vector.shape_cast %20 : vector<4x4xf32> to vector<4x4x1xf32>
    %22 = vector.broadcast %21 : vector<4x4x1xf32> to vector<4x4x4xf32>
    %23 = arith.subf %19, %22 : vector<4x4x4xf32>
    %24 = math.exp %23 : vector<4x4x4xf32>
    %cst_10 = arith.constant dense<0.000000e+00> : vector<4x4xf32>
    %25 = vector.multi_reduction <add>, %24, %cst_10 [2] : vector<4x4x4xf32> to vector<4x4xf32>
    %26 = vector.shape_cast %25 : vector<4x4xf32> to vector<4x4x1xf32>
    %27 = tpu.reciprocal %26 {approx = true} : vector<4x4x1xf32> -> vector<4x4x1xf32>
    %28 = vector.broadcast %27 : vector<4x4x1xf32> to vector<4x4x4xf32>
    %29 = arith.mulf %24, %28 : vector<4x4x4xf32>
    %30 = arith.truncf %29 : vector<4x4x4xf32> to vector<4x4x4xbf16>
    "tpu.trace_start"() <{level = 10 : i32, message = "bij,bjd->bid"}> : () -> ()
    %cst_11 = arith.constant dense<0.000000e+00> : vector<4x4x16xf32>
    %31 = tpu.matmul %30, %18, %cst_11 {dimension_numbers = #tpu.dot_dimension_numbers<[2], [1], [1], [2], [0, 0, 0, 1, 1, 2], [0], [0]>} : vector<4x4x4xbf16>, vector<4x4x16xbf16>, vector<4x4x16xf32> -> vector<4x4x16xf32>
    "tpu.trace_stop"() : () -> ()
    %32 = vector.extract_strided_slice %12 {offsets = [0, 0, 16], sizes = [4, 4, 16], strides = [1, 1, 1]} : vector<4x4x96xf32> to vector<4x4x16xf32>
    %33 = arith.truncf %32 : vector<4x4x16xf32> to vector<4x4x16xbf16>
    %34 = vector.extract_strided_slice %12 {offsets = [0, 0, 48], sizes = [4, 4, 16], strides = [1, 1, 1]} : vector<4x4x96xf32> to vector<4x4x16xf32>
    %35 = arith.truncf %34 : vector<4x4x16xf32> to vector<4x4x16xbf16>
    %36 = vector.extract_strided_slice %12 {offsets = [0, 0, 80], sizes = [4, 4, 16], strides = [1, 1, 1]} : vector<4x4x96xf32> to vector<4x4x16xf32>
    %37 = arith.truncf %36 : vector<4x4x16xf32> to vector<4x4x16xbf16>
    "tpu.trace_start"() <{level = 10 : i32, message = "bid,bjd->bij"}> : () -> ()
    %cst_12 = arith.constant dense<0.000000e+00> : vector<4x4x4xf32>
    %38 = tpu.matmul %33, %35, %cst_12 {dimension_numbers = #tpu.dot_dimension_numbers<[2], [2], [1], [1], [0, 0, 0, 1, 1, 1], [0], [0]>} : vector<4x4x16xbf16>, vector<4x4x16xbf16>, vector<4x4x4xf32> -> vector<4x4x4xf32>
    "tpu.trace_stop"() : () -> ()
    %cst_13 = arith.constant dense<0xFF800000> : vector<4x4xf32>
    %39 = vector.multi_reduction <maximumf>, %38, %cst_13 [2] : vector<4x4x4xf32> to vector<4x4xf32>
    %40 = vector.shape_cast %39 : vector<4x4xf32> to vector<4x4x1xf32>
    %41 = vector.broadcast %40 : vector<4x4x1xf32> to vector<4x4x4xf32>
    %42 = arith.subf %38, %41 : vector<4x4x4xf32>
    %43 = math.exp %42 : vector<4x4x4xf32>
    %cst_14 = arith.constant dense<0.000000e+00> : vector<4x4xf32>
    %44 = vector.multi_reduction <add>, %43, %cst_14 [2] : vector<4x4x4xf32> to vector<4x4xf32>
    %45 = vector.shape_cast %44 : vector<4x4xf32> to vector<4x4x1xf32>
    %46 = tpu.reciprocal %45 {approx = true} : vector<4x4x1xf32> -> vector<4x4x1xf32>
    %47 = vector.broadcast %46 : vector<4x4x1xf32> to vector<4x4x4xf32>
    %48 = arith.mulf %43, %47 : vector<4x4x4xf32>
    %49 = arith.truncf %48 : vector<4x4x4xf32> to vector<4x4x4xbf16>
    "tpu.trace_start"() <{level = 10 : i32, message = "bij,bjd->bid"}> : () -> ()
    %cst_15 = arith.constant dense<0.000000e+00> : vector<4x4x16xf32>
    %50 = tpu.matmul %49, %37, %cst_15 {dimension_numbers = #tpu.dot_dimension_numbers<[2], [1], [1], [2], [0, 0, 0, 1, 1, 2], [0], [0]>} : vector<4x4x4xbf16>, vector<4x4x16xbf16>, vector<4x4x16xf32> -> vector<4x4x16xf32>
    "tpu.trace_stop"() : () -> ()
    %51 = tpu.concatenate %31, %50 in 2 : vector<4x4x16xf32>, vector<4x4x16xf32> -> vector<4x4x32xf32>
    %52 = vector.shape_cast %51 : vector<4x4x32xf32> to vector<16x32xf32>
    %53 = arith.truncf %52 : vector<16x32xf32> to vector<16x32xbf16>
    %c0_16 = arith.constant 0 : index
    %c0_17 = arith.constant 0 : index
    %c0_18 = arith.constant 0 : index
    %54 = vector.load %arg8[%c0_16, %c0_17, %c0_18] : memref<1x32x32xbf16, #tpu.memory_space<vmem>>, vector<1x32x32xbf16>
    %55 = vector.shape_cast %54 : vector<1x32x32xbf16> to vector<32x32xbf16>
    %cst_19 = arith.constant dense<0.000000e+00> : vector<16x32xf32>
    %56 = tpu.matmul %53, %55, %cst_19 {dimension_numbers = #tpu.dot_dimension_numbers<[1], [0], [0], [1], [0, 0, 1, 1], [], []>} : vector<16x32xbf16>, vector<32x32xbf16>, vector<16x32xf32> -> vector<16x32xf32>
    %c0_20 = arith.constant 0 : index
    %c0_21 = arith.constant 0 : index
    %c0_22 = arith.constant 0 : index
    %57 = vector.load %arg9[%c0_20, %c0_21, %c0_22] : memref<1x1x32xf32, #tpu.memory_space<vmem>>, vector<1x1x32xf32>
    %58 = vector.shape_cast %57 : vector<1x1x32xf32> to vector<1x32xf32>
    %59 = vector.broadcast %58 : vector<1x32xf32> to vector<16x32xf32>
    %60 = arith.addf %56, %59 : vector<16x32xf32>
    %61 = arith.addf %3, %60 : vector<16x32xf32>
    %c0_23 = arith.constant 0 : index
    %c0_24 = arith.constant 0 : index
    %c0_25 = arith.constant 0 : index
    %62 = vector.load %arg10[%c0_23, %c0_24, %c0_25] : memref<1x1x32xf32, #tpu.memory_space<vmem>>, vector<1x1x32xf32>
    %63 = vector.shape_cast %62 : vector<1x1x32xf32> to vector<1x32xf32>
    %c0_26 = arith.constant 0 : index
    %c0_27 = arith.constant 0 : index
    %c0_28 = arith.constant 0 : index
    %64 = vector.load %arg11[%c0_26, %c0_27, %c0_28] : memref<1x1x32xf32, #tpu.memory_space<vmem>>, vector<1x1x32xf32>
    %65 = vector.shape_cast %64 : vector<1x1x32xf32> to vector<1x32xf32>
    %cst_29 = arith.constant dense<0.000000e+00> : vector<16xf32>
    %66 = vector.multi_reduction <add>, %61, %cst_29 [1] : vector<16x32xf32> to vector<16xf32>
    %67 = vector.shape_cast %66 : vector<16xf32> to vector<16x1xf32>
    %cst_30 = arith.constant 3.200000e+01 : f32
    %68 = vector.broadcast %cst_30 : f32 to vector<16x1xf32>
    %69 = arith.divf %67, %68 : vector<16x1xf32>
    %70 = vector.broadcast %69 : vector<16x1xf32> to vector<16x32xf32>
    %71 = arith.subf %61, %70 : vector<16x32xf32>
    %72 = arith.mulf %71, %71 : vector<16x32xf32>
    %cst_31 = arith.constant dense<0.000000e+00> : vector<16xf32>
    %73 = vector.multi_reduction <add>, %72, %cst_31 [1] : vector<16x32xf32> to vector<16xf32>
    %74 = vector.shape_cast %73 : vector<16xf32> to vector<16x1xf32>
    %cst_32 = arith.constant 3.200000e+01 : f32
    %75 = vector.broadcast %cst_32 : f32 to vector<16x1xf32>
    %76 = arith.divf %74, %75 : vector<16x1xf32>
    %cst_33 = arith.constant 9.99999974E-6 : f32
    %77 = vector.broadcast %cst_33 : f32 to vector<16x1xf32>
    %78 = arith.addf %76, %77 : vector<16x1xf32>
    %79 = math.rsqrt %78 : vector<16x1xf32>
    %80 = vector.broadcast %79 : vector<16x1xf32> to vector<16x32xf32>
    %81 = arith.mulf %71, %80 : vector<16x32xf32>
    %82 = vector.broadcast %63 : vector<1x32xf32> to vector<16x32xf32>
    %83 = arith.mulf %81, %82 : vector<16x32xf32>
    %84 = vector.broadcast %65 : vector<1x32xf32> to vector<16x32xf32>
    %85 = arith.addf %83, %84 : vector<16x32xf32>
    %86 = arith.truncf %85 : vector<16x32xf32> to vector<16x32xbf16>
    %c0_34 = arith.constant 0 : index
    %c0_35 = arith.constant 0 : index
    %c0_36 = arith.constant 0 : index
    %87 = vector.load %arg12[%c0_34, %c0_35, %c0_36] : memref<1x32x32xbf16, #tpu.memory_space<vmem>>, vector<1x32x32xbf16>
    %88 = vector.shape_cast %87 : vector<1x32x32xbf16> to vector<32x32xbf16>
    %cst_37 = arith.constant dense<0.000000e+00> : vector<16x32xf32>
    %89 = tpu.matmul %86, %88, %cst_37 {dimension_numbers = #tpu.dot_dimension_numbers<[1], [0], [0], [1], [0, 0, 1, 1], [], []>} : vector<16x32xbf16>, vector<32x32xbf16>, vector<16x32xf32> -> vector<16x32xf32>
    %c0_38 = arith.constant 0 : index
    %c0_39 = arith.constant 0 : index
    %c0_40 = arith.constant 0 : index
    %90 = vector.load %arg13[%c0_38, %c0_39, %c0_40] : memref<1x1x32xf32, #tpu.memory_space<vmem>>, vector<1x1x32xf32>
    %91 = vector.shape_cast %90 : vector<1x1x32xf32> to vector<1x32xf32>
    %92 = vector.broadcast %91 : vector<1x32xf32> to vector<16x32xf32>
    %93 = arith.addf %89, %92 : vector<16x32xf32>
    %cst_41 = arith.constant 0.000000e+00 : f32
    %94 = vector.broadcast %cst_41 : f32 to vector<16x32xf32>
    %95 = arith.maximumf %93, %94 : vector<16x32xf32>
    %96 = arith.truncf %95 : vector<16x32xf32> to vector<16x32xbf16>
    %c0_42 = arith.constant 0 : index
    %c0_43 = arith.constant 0 : index
    %c0_44 = arith.constant 0 : index
    %97 = vector.load %arg14[%c0_42, %c0_43, %c0_44] : memref<1x32x32xbf16, #tpu.memory_space<vmem>>, vector<1x32x32xbf16>
    %98 = vector.shape_cast %97 : vector<1x32x32xbf16> to vector<32x32xbf16>
    %cst_45 = arith.constant dense<0.000000e+00> : vector<16x32xf32>
    %99 = tpu.matmul %96, %98, %cst_45 {dimension_numbers = #tpu.dot_dimension_numbers<[1], [0], [0], [1], [0, 0, 1, 1], [], []>} : vector<16x32xbf16>, vector<32x32xbf16>, vector<16x32xf32> -> vector<16x32xf32>
    %c0_46 = arith.constant 0 : index
    %c0_47 = arith.constant 0 : index
    %c0_48 = arith.constant 0 : index
    %100 = vector.load %arg15[%c0_46, %c0_47, %c0_48] : memref<1x1x32xf32, #tpu.memory_space<vmem>>, vector<1x1x32xf32>
    %101 = vector.shape_cast %100 : vector<1x1x32xf32> to vector<1x32xf32>
    %102 = vector.broadcast %101 : vector<1x32xf32> to vector<16x32xf32>
    %103 = arith.addf %99, %102 : vector<16x32xf32>
    %104 = arith.addf %85, %103 : vector<16x32xf32>
    %c0_49 = arith.constant 0 : index
    %c0_50 = arith.constant 0 : index
    %c0_51 = arith.constant 0 : index
    %105 = vector.load %arg16[%c0_49, %c0_50, %c0_51] : memref<1x1x32xf32, #tpu.memory_space<vmem>>, vector<1x1x32xf32>
    %106 = vector.shape_cast %105 : vector<1x1x32xf32> to vector<1x32xf32>
    %c0_52 = arith.constant 0 : index
    %c0_53 = arith.constant 0 : index
    %c0_54 = arith.constant 0 : index
    %107 = vector.load %arg17[%c0_52, %c0_53, %c0_54] : memref<1x1x32xf32, #tpu.memory_space<vmem>>, vector<1x1x32xf32>
    %108 = vector.shape_cast %107 : vector<1x1x32xf32> to vector<1x32xf32>
    %cst_55 = arith.constant dense<0.000000e+00> : vector<16xf32>
    %109 = vector.multi_reduction <add>, %104, %cst_55 [1] : vector<16x32xf32> to vector<16xf32>
    %110 = vector.shape_cast %109 : vector<16xf32> to vector<16x1xf32>
    %cst_56 = arith.constant 3.200000e+01 : f32
    %111 = vector.broadcast %cst_56 : f32 to vector<16x1xf32>
    %112 = arith.divf %110, %111 : vector<16x1xf32>
    %113 = vector.broadcast %112 : vector<16x1xf32> to vector<16x32xf32>
    %114 = arith.subf %104, %113 : vector<16x32xf32>
    %115 = arith.mulf %114, %114 : vector<16x32xf32>
    %cst_57 = arith.constant dense<0.000000e+00> : vector<16xf32>
    %116 = vector.multi_reduction <add>, %115, %cst_57 [1] : vector<16x32xf32> to vector<16xf32>
    %117 = vector.shape_cast %116 : vector<16xf32> to vector<16x1xf32>
    %cst_58 = arith.constant 3.200000e+01 : f32
    %118 = vector.broadcast %cst_58 : f32 to vector<16x1xf32>
    %119 = arith.divf %117, %118 : vector<16x1xf32>
    %cst_59 = arith.constant 9.99999974E-6 : f32
    %120 = vector.broadcast %cst_59 : f32 to vector<16x1xf32>
    %121 = arith.addf %119, %120 : vector<16x1xf32>
    %122 = math.rsqrt %121 : vector<16x1xf32>
    %123 = vector.broadcast %122 : vector<16x1xf32> to vector<16x32xf32>
    %124 = arith.mulf %114, %123 : vector<16x32xf32>
    %125 = vector.broadcast %106 : vector<1x32xf32> to vector<16x32xf32>
    %126 = arith.mulf %124, %125 : vector<16x32xf32>
    %127 = vector.broadcast %108 : vector<1x32xf32> to vector<16x32xf32>
    %128 = arith.addf %126, %127 : vector<16x32xf32>
    %c0_60 = arith.constant 0 : index
    %c0_61 = arith.constant 0 : index
    %129 = vector.load %arg18[%c0_60, %c0_61] : memref<16x32xf32, #tpu.memory_space<vmem>>, vector<16x32xf32>
    tpu.vector_store %arg18[%c0_60, %c0_61], %128 {strides = array<i32>} : memref<16x32xf32, #tpu.memory_space<vmem>>, vector<16x32xf32>,
    return
  }
  func.func @transform_0(%arg0: i32, %arg1: i32) -> (i32, i32) {
    %c0_i32 = arith.constant 0 : i32
    %c0_i32_0 = arith.constant 0 : i32
    return %arg0, %c0_i32 : i32, i32
  }
  func.func @transform_1(%arg0: i32, %arg1: i32) -> (i32, i32) {
    %c0_i32 = arith.constant 0 : i32
    %c0_i32_0 = arith.constant 0 : i32
    %c0_i32_1 = arith.constant 0 : i32
    return %c0_i32, %c0_i32_0 : i32, i32
  }
  func.func @transform_2(%arg0: i32, %arg1: i32) -> (i32, i32) {
    %c0_i32 = arith.constant 0 : i32
    %c0_i32_0 = arith.constant 0 : i32
    %c0_i32_1 = arith.constant 0 : i32
    return %c0_i32, %c0_i32_0 : i32, i32
  }
  func.func @transform_3(%arg0: i32, %arg1: i32) -> (i32, i32) {
    %c0_i32 = arith.constant 0 : i32
    %c0_i32_0 = arith.constant 0 : i32
    %c0_i32_1 = arith.constant 0 : i32
    return %c0_i32, %c0_i32_0 : i32, i32
  }
  func.func @transform_4(%arg0: i32, %arg1: i32) -> (i32, i32, i32) {
    %c0_i32 = arith.constant 0 : i32
    %c0_i32_0 = arith.constant 0 : i32
    %c0_i32_1 = arith.constant 0 : i32
    return %arg1, %c0_i32, %c0_i32_0 : i32, i32, i32
  }
  func.func @transform_5(%arg0: i32, %arg1: i32) -> (i32, i32, i32) {
    %c0_i32 = arith.constant 0 : i32
    %c0_i32_0 = arith.constant 0 : i32
    %c0_i32_1 = arith.constant 0 : i32
    return %arg1, %c0_i32, %c0_i32_0 : i32, i32, i32
  }
  func.func @transform_6(%arg0: i32, %arg1: i32) -> (i32, i32, i32) {
    %c0_i32 = arith.constant 0 : i32
    %c0_i32_0 = arith.constant 0 : i32
    %c0_i32_1 = arith.constant 0 : i32
    return %arg1, %c0_i32, %c0_i32_0 : i32, i32, i32
  }
  func.func @transform_7(%arg0: i32, %arg1: i32) -> (i32, i32, i32) {
    %c0_i32 = arith.constant 0 : i32
    %c0_i32_0 = arith.constant 0 : i32
    %c0_i32_1 = arith.constant 0 : i32
    return %arg1, %c0_i32, %c0_i32_0 : i32, i32, i32
  }
  func.func @transform_8(%arg0: i32, %arg1: i32) -> (i32, i32, i32) {
    %c0_i32 = arith.constant 0 : i32
    %c0_i32_0 = arith.constant 0 : i32
    %c0_i32_1 = arith.constant 0 : i32
    return %arg1, %c0_i32, %c0_i32_0 : i32, i32, i32
  }
  func.func @transform_9(%arg0: i32, %arg1: i32) -> (i32, i32, i32) {
    %c0_i32 = arith.constant 0 : i32
    %c0_i32_0 = arith.constant 0 : i32
    %c0_i32_1 = arith.constant 0 : i32
    return %arg1, %c0_i32, %c0_i32_0 : i32, i32, i32
  }
  func.func @transform_10(%arg0: i32, %arg1: i32) -> (i32, i32, i32) {
    %c0_i32 = arith.constant 0 : i32
    %c0_i32_0 = arith.constant 0 : i32
    %c0_i32_1 = arith.constant 0 : i32
    return %arg1, %c0_i32, %c0_i32_0 : i32, i32, i32
  }
  func.func @transform_11(%arg0: i32, %arg1: i32) -> (i32, i32, i32) {
    %c0_i32 = arith.constant 0 : i32
    %c0_i32_0 = arith.constant 0 : i32
    %c0_i32_1 = arith.constant 0 : i32
    return %arg1, %c0_i32, %c0_i32_0 : i32, i32, i32
  }
  func.func @transform_12(%arg0: i32, %arg1: i32) -> (i32, i32, i32) {
    %c0_i32 = arith.constant 0 : i32
    %c0_i32_0 = arith.constant 0 : i32
    %c0_i32_1 = arith.constant 0 : i32
    return %arg1, %c0_i32, %c0_i32_0 : i32, i32, i32
  }
  func.func @transform_13(%arg0: i32, %arg1: i32) -> (i32, i32, i32) {
    %c0_i32 = arith.constant 0 : i32
    %c0_i32_0 = arith.constant 0 : i32
    %c0_i32_1 = arith.constant 0 : i32
    return %arg1, %c0_i32, %c0_i32_0 : i32, i32, i32
  }
  func.func @transform_14(%arg0: i32, %arg1: i32) -> (i32, i32, i32) {
    %c0_i32 = arith.constant 0 : i32
    %c0_i32_0 = arith.constant 0 : i32
    %c0_i32_1 = arith.constant 0 : i32
    return %arg1, %c0_i32, %c0_i32_0 : i32, i32, i32
  }
  func.func @transform_15(%arg0: i32, %arg1: i32) -> (i32, i32, i32) {
    %c0_i32 = arith.constant 0 : i32
    %c0_i32_0 = arith.constant 0 : i32
    %c0_i32_1 = arith.constant 0 : i32
    return %arg1, %c0_i32, %c0_i32_0 : i32, i32, i32
  }
  func.func @transform_16(%arg0: i32, %arg1: i32) -> (i32, i32) {
    %c0_i32 = arith.constant 0 : i32
    %c0_i32_0 = arith.constant 0 : i32
    return %arg0, %c0_i32 : i32, i32
  }
}

module attributes {stable_mosaic.version = 11 : i64} {
  func.func @_lstm_decoder_kernel(%arg0: i32, %arg1: memref<4x32xf32, #tpu.memory_space<vmem>>, %arg2: memref<4x128xf32, #tpu.memory_space<vmem>>, %arg3: memref<32x128xf32, #tpu.memory_space<vmem>>, %arg4: memref<32x128xf32, #tpu.memory_space<vmem>>, %arg5: memref<1x128xf32, #tpu.memory_space<vmem>>, %arg6: memref<32x16xf32, #tpu.memory_space<vmem>>, %arg7: memref<1x16xf32, #tpu.memory_space<vmem>>, %arg8: memref<4x4x16xf32, #tpu.memory_space<vmem>>, %arg9: memref<4x4x32xf32, #tpu.memory_space<vmem>>) attributes {dimension_semantics = [#tpu.dimension_semantics<parallel>], iteration_bounds = array<i64: 1>, scalar_prefetch = 0 : i64, scratch_operands = 1 : i64, tpu.core_type = #tpu.core_type<tc>, window_params = [{transform_indices = @transform_0, window_bounds = array<i64: 4, 32>}, {transform_indices = @transform_1, window_bounds = array<i64: 4, 128>}, {pipeline_mode = #tpu.pipeline_mode<synchronous>, transform_indices = @transform_2, window_bounds = array<i64: 32, 128>}, {pipeline_mode = #tpu.pipeline_mode<synchronous>, transform_indices = @transform_3, window_bounds = array<i64: 32, 128>}, {pipeline_mode = #tpu.pipeline_mode<synchronous>, transform_indices = @transform_4, window_bounds = array<i64: 1, 128>}, {pipeline_mode = #tpu.pipeline_mode<synchronous>, transform_indices = @transform_5, window_bounds = array<i64: 32, 16>}, {pipeline_mode = #tpu.pipeline_mode<synchronous>, transform_indices = @transform_6, window_bounds = array<i64: 1, 16>}, {transform_indices = @transform_7, window_bounds = array<i64: 4, 4, 16>}]} {
    %c0 = arith.constant 0 : index
    %c0_0 = arith.constant 0 : index
    %0 = vector.load %arg3[%c0, %c0_0] : memref<32x128xf32, #tpu.memory_space<vmem>>, vector<32x128xf32>
    %c0_1 = arith.constant 0 : index
    %c0_2 = arith.constant 0 : index
    %1 = vector.load %arg4[%c0_1, %c0_2] : memref<32x128xf32, #tpu.memory_space<vmem>>, vector<32x128xf32>
    %c0_3 = arith.constant 0 : index
    %c0_4 = arith.constant 0 : index
    %2 = vector.load %arg5[%c0_3, %c0_4] : memref<1x128xf32, #tpu.memory_space<vmem>>, vector<1x128xf32>
    %c0_5 = arith.constant 0 : index
    %c0_6 = arith.constant 0 : index
    %3 = vector.load %arg1[%c0_5, %c0_6] : memref<4x32xf32, #tpu.memory_space<vmem>>, vector<4x32xf32>
    %cst = arith.constant dense<0.000000e+00> : vector<4x128xf32>
    %4 = tpu.matmul %3, %0, %cst {dimension_numbers = #tpu.dot_dimension_numbers<[1], [0], [0], [1], [0, 0, 1, 1], [], []>} : vector<4x32xf32>, vector<32x128xf32>, vector<4x128xf32> -> vector<4x128xf32>
    %c0_7 = arith.constant 0 : index
    %c0_8 = arith.constant 0 : index
    %5 = vector.load %arg2[%c0_7, %c0_8] : memref<4x128xf32, #tpu.memory_space<vmem>>, vector<4x128xf32>
    %6 = arith.addf %4, %5 : vector<4x128xf32>
    %7 = vector.extract_strided_slice %6 {offsets = [0, 0], sizes = [4, 32], strides = [1, 1]} : vector<4x128xf32> to vector<4x32xf32>
    %8 = arith.negf %7 : vector<4x32xf32>
    %9 = math.exp %8 : vector<4x32xf32>
    %cst_9 = arith.constant 1.000000e+00 : f32
    %10 = vector.broadcast %cst_9 : f32 to vector<4x32xf32>
    %11 = arith.addf %10, %9 : vector<4x32xf32>
    %12 = arith.divf %10, %11 : vector<4x32xf32>
    %13 = vector.extract_strided_slice %6 {offsets = [0, 32], sizes = [4, 32], strides = [1, 1]} : vector<4x128xf32> to vector<4x32xf32>
    %14 = arith.negf %13 : vector<4x32xf32>
    %15 = math.exp %14 : vector<4x32xf32>
    %cst_10 = arith.constant 1.000000e+00 : f32
    %16 = vector.broadcast %cst_10 : f32 to vector<4x32xf32>
    %17 = arith.addf %16, %15 : vector<4x32xf32>
    %18 = arith.divf %16, %17 : vector<4x32xf32>
    %19 = vector.extract_strided_slice %6 {offsets = [0, 64], sizes = [4, 32], strides = [1, 1]} : vector<4x128xf32> to vector<4x32xf32>
    %20 = math.tanh %19 : vector<4x32xf32>
    %21 = vector.extract_strided_slice %6 {offsets = [0, 96], sizes = [4, 32], strides = [1, 1]} : vector<4x128xf32> to vector<4x32xf32>
    %22 = arith.negf %21 : vector<4x32xf32>
    %23 = math.exp %22 : vector<4x32xf32>
    %cst_11 = arith.constant 1.000000e+00 : f32
    %24 = vector.broadcast %cst_11 : f32 to vector<4x32xf32>
    %25 = arith.addf %24, %23 : vector<4x32xf32>
    %26 = arith.divf %24, %25 : vector<4x32xf32>
    %27 = arith.mulf %18, %3 : vector<4x32xf32>
    %28 = arith.mulf %12, %20 : vector<4x32xf32>
    %29 = arith.addf %27, %28 : vector<4x32xf32>
    %30 = math.tanh %29 : vector<4x32xf32>
    %31 = arith.mulf %26, %30 : vector<4x32xf32>
    %c0_12 = arith.constant 0 : index
    %c0_13 = arith.constant 0 : index
    %c0_14 = arith.constant 0 : index
    %32 = vector.load %arg9[%c0_12, %c0_13, %c0_14] : memref<4x4x32xf32, #tpu.memory_space<vmem>>, vector<1x4x32xf32>
    %33 = vector.shape_cast %32 : vector<1x4x32xf32> to vector<4x32xf32>
    %34 = vector.shape_cast %31 : vector<4x32xf32> to vector<1x4x32xf32>
    tpu.vector_store %arg9[%c0_12, %c0_13, %c0_14], %34 {strides = array<i32>} : memref<4x4x32xf32, #tpu.memory_space<vmem>>, vector<1x4x32xf32>,
    %c1_i32 = arith.constant 1 : i32
    %c3_i32 = arith.constant 3 : i32
    %35 = arith.addi %c1_i32, %c3_i32 : i32
    %c1_i32_15 = arith.constant 1 : i32
    %36:2 = scf.for %arg10 = %c1_i32 to %35 step %c1_i32_15 iter_args(%arg11 = %31, %arg12 = %29) -> (vector<4x32xf32>, vector<4x32xf32>)  : i32 {
      %cst_28 = arith.constant dense<0.000000e+00> : vector<4x128xf32>
      %46 = tpu.matmul %arg11, %1, %cst_28 {dimension_numbers = #tpu.dot_dimension_numbers<[1], [0], [0], [1], [0, 0, 1, 1], [], []>} : vector<4x32xf32>, vector<32x128xf32>, vector<4x128xf32> -> vector<4x128xf32>
      %47 = vector.broadcast %2 : vector<1x128xf32> to vector<4x128xf32>
      %48 = arith.addf %46, %47 : vector<4x128xf32>
      %49 = vector.extract_strided_slice %48 {offsets = [0, 0], sizes = [4, 32], strides = [1, 1]} : vector<4x128xf32> to vector<4x32xf32>
      %50 = arith.negf %49 : vector<4x32xf32>
      %51 = math.exp %50 : vector<4x32xf32>
      %cst_29 = arith.constant 1.000000e+00 : f32
      %52 = vector.broadcast %cst_29 : f32 to vector<4x32xf32>
      %53 = arith.addf %52, %51 : vector<4x32xf32>
      %54 = arith.divf %52, %53 : vector<4x32xf32>
      %55 = vector.extract_strided_slice %48 {offsets = [0, 32], sizes = [4, 32], strides = [1, 1]} : vector<4x128xf32> to vector<4x32xf32>
      %56 = arith.negf %55 : vector<4x32xf32>
      %57 = math.exp %56 : vector<4x32xf32>
      %cst_30 = arith.constant 1.000000e+00 : f32
      %58 = vector.broadcast %cst_30 : f32 to vector<4x32xf32>
      %59 = arith.addf %58, %57 : vector<4x32xf32>
      %60 = arith.divf %58, %59 : vector<4x32xf32>
      %61 = vector.extract_strided_slice %48 {offsets = [0, 64], sizes = [4, 32], strides = [1, 1]} : vector<4x128xf32> to vector<4x32xf32>
      %62 = math.tanh %61 : vector<4x32xf32>
      %63 = vector.extract_strided_slice %48 {offsets = [0, 96], sizes = [4, 32], strides = [1, 1]} : vector<4x128xf32> to vector<4x32xf32>
      %64 = arith.negf %63 : vector<4x32xf32>
      %65 = math.exp %64 : vector<4x32xf32>
      %cst_31 = arith.constant 1.000000e+00 : f32
      %66 = vector.broadcast %cst_31 : f32 to vector<4x32xf32>
      %67 = arith.addf %66, %65 : vector<4x32xf32>
      %68 = arith.divf %66, %67 : vector<4x32xf32>
      %69 = arith.mulf %60, %arg12 : vector<4x32xf32>
      %70 = arith.mulf %54, %62 : vector<4x32xf32>
      %71 = arith.addf %69, %70 : vector<4x32xf32>
      %72 = math.tanh %71 : vector<4x32xf32>
      %73 = arith.mulf %68, %72 : vector<4x32xf32>
      %74 = arith.index_cast %arg10 : i32 to index
      %c0_32 = arith.constant 0 : index
      %c0_33 = arith.constant 0 : index
      %75 = vector.load %arg9[%74, %c0_32, %c0_33] : memref<4x4x32xf32, #tpu.memory_space<vmem>>, vector<1x4x32xf32>
      %76 = vector.shape_cast %75 : vector<1x4x32xf32> to vector<4x32xf32>
      %77 = vector.shape_cast %73 : vector<4x32xf32> to vector<1x4x32xf32>
      tpu.vector_store %arg9[%74, %c0_32, %c0_33], %77 {strides = array<i32>} : memref<4x4x32xf32, #tpu.memory_space<vmem>>, vector<1x4x32xf32>,
      scf.yield %73, %71 : vector<4x32xf32>, vector<4x32xf32>
    }
    %c3_i32_16 = arith.constant 3 : i32
    %c0_17 = arith.constant 0 : index
    %c0_18 = arith.constant 0 : index
    %c0_19 = arith.constant 0 : index
    %37 = vector.load %arg9[%c0_17, %c0_18, %c0_19] : memref<4x4x32xf32, #tpu.memory_space<vmem>>, vector<4x4x32xf32>
    %38 = vector.shape_cast %37 : vector<4x4x32xf32> to vector<16x32xf32>
    %c0_20 = arith.constant 0 : index
    %c0_21 = arith.constant 0 : index
    %39 = vector.load %arg6[%c0_20, %c0_21] : memref<32x16xf32, #tpu.memory_space<vmem>>, vector<32x16xf32>
    %cst_22 = arith.constant dense<0.000000e+00> : vector<16x16xf32>
    %40 = tpu.matmul %38, %39, %cst_22 {dimension_numbers = #tpu.dot_dimension_numbers<[1], [0], [0], [1], [0, 0, 1, 1], [], []>} : vector<16x32xf32>, vector<32x16xf32>, vector<16x16xf32> -> vector<16x16xf32>
    %c0_23 = arith.constant 0 : index
    %c0_24 = arith.constant 0 : index
    %41 = vector.load %arg7[%c0_23, %c0_24] : memref<1x16xf32, #tpu.memory_space<vmem>>, vector<1x16xf32>
    %42 = vector.broadcast %41 : vector<1x16xf32> to vector<16x16xf32>
    %43 = arith.addf %40, %42 : vector<16x16xf32>
    %44 = vector.shape_cast %43 : vector<16x16xf32> to vector<4x4x16xf32>
    %c0_25 = arith.constant 0 : index
    %c0_26 = arith.constant 0 : index
    %c0_27 = arith.constant 0 : index
    %45 = vector.load %arg8[%c0_25, %c0_26, %c0_27] : memref<4x4x16xf32, #tpu.memory_space<vmem>>, vector<4x4x16xf32>
    tpu.vector_store %arg8[%c0_25, %c0_26, %c0_27], %44 {strides = array<i32>} : memref<4x4x16xf32, #tpu.memory_space<vmem>>, vector<4x4x16xf32>,
    return
  }
  func.func @transform_0(%arg0: i32) -> (i32, i32) {
    %c0_i32 = arith.constant 0 : i32
    %c0_i32_0 = arith.constant 0 : i32
    return %arg0, %c0_i32 : i32, i32
  }
  func.func @transform_1(%arg0: i32) -> (i32, i32) {
    %c0_i32 = arith.constant 0 : i32
    %c0_i32_0 = arith.constant 0 : i32
    return %arg0, %c0_i32 : i32, i32
  }
  func.func @transform_2(%arg0: i32) -> (i32, i32) {
    %c0_i32 = arith.constant 0 : i32
    %c0_i32_0 = arith.constant 0 : i32
    %c0_i32_1 = arith.constant 0 : i32
    return %c0_i32, %c0_i32_0 : i32, i32
  }
  func.func @transform_3(%arg0: i32) -> (i32, i32) {
    %c0_i32 = arith.constant 0 : i32
    %c0_i32_0 = arith.constant 0 : i32
    %c0_i32_1 = arith.constant 0 : i32
    return %c0_i32, %c0_i32_0 : i32, i32
  }
  func.func @transform_4(%arg0: i32) -> (i32, i32) {
    %c0_i32 = arith.constant 0 : i32
    %c0_i32_0 = arith.constant 0 : i32
    %c0_i32_1 = arith.constant 0 : i32
    return %c0_i32, %c0_i32_0 : i32, i32
  }
  func.func @transform_5(%arg0: i32) -> (i32, i32) {
    %c0_i32 = arith.constant 0 : i32
    %c0_i32_0 = arith.constant 0 : i32
    %c0_i32_1 = arith.constant 0 : i32
    return %c0_i32, %c0_i32_0 : i32, i32
  }
  func.func @transform_6(%arg0: i32) -> (i32, i32) {
    %c0_i32 = arith.constant 0 : i32
    %c0_i32_0 = arith.constant 0 : i32
    %c0_i32_1 = arith.constant 0 : i32
    return %c0_i32, %c0_i32_0 : i32, i32
  }
  func.func @transform_7(%arg0: i32) -> (i32, i32, i32) {
    %c0_i32 = arith.constant 0 : i32
    %c0_i32_0 = arith.constant 0 : i32
    %c0_i32_1 = arith.constant 0 : i32
    return %c0_i32, %arg0, %c0_i32_0 : i32, i32, i32
  }
}

</mosaic_0001>

<llo_original>
// kernel: transformer_lstm_forward.3
$region0: #{transformer_lstm_forward.3}
  #allocation0 [shape = 'u32[]', space=smem, size = 0x4, offset = 0x4, fixed_abs, tag = 'smem constant byte address 0x4 - core index']
  #allocation1 [shape = 'u32[144,128]{1,0:T(1,128)}', space=vmem, size = 0x12000, scoped, tag = 'internal scratch']
  #allocation2 [shape = 'f32[4,4,32]{2,1,0:T(4,128)}', space=vmem, size = 0x2000, scoped, tag = 'scratch operand']
  %s0 = inlined_call_operand.vmem [shape: f32[4,32], index: 0, kind: input, shape index: {}]
  %s1 = inlined_call_operand.vmem [shape: f32[4,128], index: 1, kind: input, shape index: {}]
  %s2 = inlined_call_operand.vmem [shape: f32[32,128], index: 2, kind: input, shape index: {}]
  %s3 = inlined_call_operand.vmem [shape: f32[32,128], index: 3, kind: input, shape index: {}]
  %s4 = inlined_call_operand.vmem [shape: f32[1,128], index: 4, kind: input, shape index: {}]
  %s5 = inlined_call_operand.vmem [shape: f32[32,16], index: 5, kind: input, shape index: {}]
  %s6 = inlined_call_operand.vmem [shape: f32[1,16], index: 6, kind: input, shape index: {}]
  %s7 = inlined_call_operand.vmem [shape: f32[4,4,16], index: 7, kind: output, shape index: {}]
  %s8 = sld [smem:[#allocation0]]
  $region45: #{transformer_lstm_forward.3} parent=0
    _
  %s10 = ssub.s32 1, %s8
  %s11 = scalar_select 0, %s10, %s8
  // Predicated region
  $region2: #{transformer_lstm_forward.3} parent=0 // pred_check
    _
  $region3: #{transformer_lstm_forward.3} parent=0 // pred_check_branch
    %13 = sbr.rel (0) target = $region5
  $region4: #{transformer_lstm_forward.3} parent=0 // pred_region
    _
  $region5: #{transformer_lstm_forward.3} parent=0 // pred_fallthru
    _
  // Predicated region
  $region6: #{transformer_lstm_forward.3} parent=0 // pred_check
    _
  $region7: #{transformer_lstm_forward.3} parent=0 // pred_check_branch
    %15 = sbr.rel (0) target = $region9
  $region8: #{transformer_lstm_forward.3} parent=0 // pred_region
    _
  $region9: #{transformer_lstm_forward.3} parent=0 // pred_fallthru
    _
  // Predicated region
  $region10: #{transformer_lstm_forward.3} parent=0 // pred_check
    _
  $region11: #{transformer_lstm_forward.3} parent=0 // pred_check_branch
    %17 = sbr.rel (0) target = $region13
  $region12: #{transformer_lstm_forward.3} parent=0 // pred_region
    _
  $region13: #{transformer_lstm_forward.3} parent=0 // pred_fallthru
    _
  // Predicated region
  $region14: #{transformer_lstm_forward.3} parent=0 // pred_check
    _
  $region15: #{transformer_lstm_forward.3} parent=0 // pred_check_branch
    %19 = sbr.rel (0) target = $region17
  $region16: #{transformer_lstm_forward.3} parent=0 // pred_region
    _
  $region17: #{transformer_lstm_forward.3} parent=0 // pred_fallthru
    _
  // Predicated region
  $region18: #{transformer_lstm_forward.3} parent=0 // pred_check
    _
  $region19: #{transformer_lstm_forward.3} parent=0 // pred_check_branch
    %21 = sbr.rel (0) target = $region21
  $region20: #{transformer_lstm_forward.3} parent=0 // pred_region
    _
  $region21: #{transformer_lstm_forward.3} parent=0 // pred_fallthru
    _
  // Predicated region
  $region22: #{transformer_lstm_forward.3} parent=0 // pred_check
    _
  $region23: #{transformer_lstm_forward.3} parent=0 // pred_check_branch
    %23 = sbr.rel (0) target = $region25
  $region24: #{transformer_lstm_forward.3} parent=0 // pred_region
    _
  $region25: #{transformer_lstm_forward.3} parent=0 // pred_fallthru
    _
  // Predicated region
  $region26: #{transformer_lstm_forward.3} parent=0 // pred_check
    _
  $region27: #{transformer_lstm_forward.3} parent=0 // pred_check_branch
    %25 = sbr.rel (0) target = $region29
  $region28: #{transformer_lstm_forward.3} parent=0 // pred_region
    _
  $region29: #{transformer_lstm_forward.3} parent=0 // pred_fallthru
    _
  %v26 = vld [vmem:[%s2] sm:$0xff]
  %v27 = vld [vmem:[%s2 + $0x8] sm:$0xff]
  %v28 = vld [vmem:[%s2 + $0x10] sm:$0xff]
  %v29 = vld [vmem:[%s2 + $0x18] sm:$0xff]
  %v30 = vld [vmem:[%s3] sm:$0xff]
  %v31 = vld [vmem:[%s3 + $0x8] sm:$0xff]
  %v32 = vld [vmem:[%s3 + $0x10] sm:$0xff]
  %v33 = vld [vmem:[%s3 + $0x18] sm:$0xff]
  %v34 = vld [vmem:[%s4] sm:$0x1]
  %v35 = vld [vmem:[%s0] sm:$0xf]
  %v36 = vld [vmem:[%s1] sm:$0xf]
  %vm37 = vcmask 261120
  %v39 = vsel %vm37, %v35, 0
  %41 = vmatprep.subr.mxu0 0.0
  %42 = vmatpush1.msra.mxu0 %v26
  %43 = vmatprep.subr.mxu0 0.0
  %44 = vmatpush1.msra.mxu0 %v27
  %45 = vmatprep.subr.mxu0 0.0
  %46 = vmatpush1.msra.mxu0 %v28
  %47 = vmatprep.subr.mxu0 0.0
  %48 = vmatpush1.msra.mxu0 %v29
  %49 = vmatprep.subr.mxu0 0.0
  %50 = vmatpush1.msra.mxu0 0.0
  %51 = vmatprep.subr.mxu0 0.0
  %52 = vmatpush1.msra.mxu0 0.0
  %53 = vmatprep.subr.mxu0 0.0
  %54 = vmatpush1.msra.mxu0 0.0
  %55 = vmatprep.subr.mxu0 0.0
  %56 = vmatpush1.msra.mxu0 0.0
  %57 = vmatprep.subr.mxu0 0.0
  %58 = vmatpush1.msra.mxu0 0.0
  %59 = vmatprep.subr.mxu0 0.0
  %60 = vmatpush1.msra.mxu0 0.0
  %61 = vmatprep.subr.mxu0 0.0
  %62 = vmatpush1.msra.mxu0 0.0
  %63 = vmatprep.subr.mxu0 0.0
  %64 = vmatpush1.msra.mxu0 0.0
  %65 = vmatprep.subr.mxu0 0.0
  %66 = vmatpush1.msra.mxu0 0.0
  %67 = vmatprep.subr.mxu0 0.0
  %68 = vmatpush1.msra.mxu0 0.0
  %69 = vmatprep.subr.mxu0 0.0
  %70 = vmatpush1.msra.mxu0 0.0
  %71 = vmatprep.subr.mxu0 0.0
  %72 = vmatpush1.msra.mxu0 0.0
  %73 = vmatprep.subr.mxu0 0.0
  %74 = vmatpush1.msra.mxu0 0.0
  %75 = vmatprep.subr.mxu0 0.0
  %76 = vmatpush1.msra.mxu0 0.0
  %77 = vmatprep.subr.mxu0 0.0
  %78 = vmatpush1.msra.mxu0 0.0
  %79 = vmatprep.subr.mxu0 0.0
  %80 = vmatpush1.msra.mxu0 0.0
  %81 = vmatprep.subr.mxu0 0.0
  %82 = vmatpush1.msra.mxu0 0.0
  %83 = vmatprep.subr.mxu0 0.0
  %84 = vmatpush1.msra.mxu0 0.0
  %85 = vmatprep.subr.mxu0 0.0
  %86 = vmatpush1.msra.mxu0 0.0
  %87 = vmatprep.subr.mxu0 0.0
  %88 = vmatpush1.msra.mxu0 0.0
  %89 = vmatprep.subr.mxu0 0.0
  %90 = vmatpush1.msra.mxu0 0.0
  %91 = vmatprep.subr.mxu0 0.0
  %92 = vmatpush1.msra.mxu0 0.0
  %93 = vmatprep.subr.mxu0 0.0
  %94 = vmatpush1.msra.mxu0 0.0
  %95 = vmatprep.subr.mxu0 0.0
  %96 = vmatpush1.msra.mxu0 0.0
  %97 = vmatprep.subr.mxu0 0.0
  %98 = vmatpush1.msra.mxu0 0.0
  %99 = vmatprep.subr.mxu0 0.0
  %100 = vmatpush1.msra.mxu0 0.0
  %101 = vmatprep.subr.mxu0 0.0
  %102 = vmatpush1.msra.mxu0 0.0
  %103 = vmatprep.subr.mxu0 0.0
  %104 = vmatpush1.msra.mxu0 0.0
  %105 = vmatprep.mubr.f32.mxu0 0.0
  %106 = vmatmul.mubr.f32.gmra.mrb[0].mxu0 %v39
  %v107 = vpop.f32.mrb[0].mxu0
  %v108 = vadd.f32 %v36, %v107
  %v109 = vpop.f32.mrb[0].mxu0
  %110 = vdwg.mxu0
  %v111 = vxor.u32 %v108, 2147483648
  %v112 = vmul.f32 %v111, 1.442695
  %v113 = vpow.pop %v112
  %v114 = vadd.f32 %v113, 1.0
  %v115 = vrcp.pop %v114
  %v116 = vmul.f32 1.0, %v115
  %v117 = vtanh.pop %v108
  %118 = vrot.lane.b32.xlu0 %v35, 32
  %v119 = vpop.permute.xlu0 %118
  %v121 = vmul.f32 %v116, %v119
  %123 = vrot.lane.b32.xlu0 %v117, 64
  %v124 = vpop.permute.xlu0 %123
  %v126 = vmul.f32 %v116, %v124
  %128 = vrot.lane.b32.xlu0 %v126, 32
  %v129 = vpop.permute.xlu0 %128
  %v131 = vadd.f32 %v121, %v129
  %v132 = vtanh.pop %v131
  %134 = vrot.lane.b32.xlu0 %v132, 64
  %v135 = vpop.permute.xlu0 %134
  %v137 = vmul.f32 %v116, %v135
  %139 = vrot.lane.b32.xlu0 %v137, 32
  %v140 = vpop.permute.xlu0 %139
  %vm142 = vcmask 257024
  %143 = vst.msk [vmem:[#allocation2] sm:$0xf] %vm142, %v140
  loop: start=1, step=1, limit=4
  $region30: #{transformer_lstm_forward.3} parent=0 // loop_pre_header
    _
  $region31: #{transformer_lstm_forward.3} parent=0 // loop_header
    %s145 = sphi 1, %s149
    %p146 = scmp.ge.s32.totalorder %s145, 4
    %v150 = vphi %v137, %v256
    %v151 = vphi %v131, %v250
  $region32: #{transformer_lstm_forward.3} parent=0 // loop_header_branch
    %148 = sbr.rel (%p146) target = $region36
  $region33: #{transformer_lstm_forward.3} parent=0 // loop_body
    %v153 = vlaneseq
    %v154 = vshrl.u32 %v153, 7
    %v155 = vsub.s32 0, %v154
    %v156 = vrot.slane %v34, %v155
    %159 = vrot.lane.b32.xlu0 %v150, 32
    %v160 = vpop.permute.xlu0 %159
    %v161 = vsel %vm37, %v160, 0
    %163 = vmatprep.subr.mxu0 0.0
    %164 = vmatpush1.msra.mxu0 %v30
    %165 = vmatprep.subr.mxu0 0.0
    %166 = vmatpush1.msra.mxu0 %v31
    %167 = vmatprep.subr.mxu0 0.0
    %168 = vmatpush1.msra.mxu0 %v32
    %169 = vmatprep.subr.mxu0 0.0
    %170 = vmatpush1.msra.mxu0 %v33
    %171 = vmatprep.subr.mxu0 0.0
    %172 = vmatpush1.msra.mxu0 0.0
    %173 = vmatprep.subr.mxu0 0.0
    %174 = vmatpush1.msra.mxu0 0.0
    %175 = vmatprep.subr.mxu0 0.0
    %176 = vmatpush1.msra.mxu0 0.0
    %177 = vmatprep.subr.mxu0 0.0
    %178 = vmatpush1.msra.mxu0 0.0
    %179 = vmatprep.subr.mxu0 0.0
    %180 = vmatpush1.msra.mxu0 0.0
    %181 = vmatprep.subr.mxu0 0.0
    %182 = vmatpush1.msra.mxu0 0.0
    %183 = vmatprep.subr.mxu0 0.0
    %184 = vmatpush1.msra.mxu0 0.0
    %185 = vmatprep.subr.mxu0 0.0
    %186 = vmatpush1.msra.mxu0 0.0
    %187 = vmatprep.subr.mxu0 0.0
    %188 = vmatpush1.msra.mxu0 0.0
    %189 = vmatprep.subr.mxu0 0.0
    %190 = vmatpush1.msra.mxu0 0.0
    %191 = vmatprep.subr.mxu0 0.0
    %192 = vmatpush1.msra.mxu0 0.0
    %193 = vmatprep.subr.mxu0 0.0
    %194 = vmatpush1.msra.mxu0 0.0
    %195 = vmatprep.subr.mxu0 0.0
    %196 = vmatpush1.msra.mxu0 0.0
    %197 = vmatprep.subr.mxu0 0.0
    %198 = vmatpush1.msra.mxu0 0.0
    %199 = vmatprep.subr.mxu0 0.0
    %200 = vmatpush1.msra.mxu0 0.0
    %201 = vmatprep.subr.mxu0 0.0
    %202 = vmatpush1.msra.mxu0 0.0
    %203 = vmatprep.subr.mxu0 0.0
    %204 = vmatpush1.msra.mxu0 0.0
    %205 = vmatprep.subr.mxu0 0.0
    %206 = vmatpush1.msra.mxu0 0.0
    %207 = vmatprep.subr.mxu0 0.0
    %208 = vmatpush1.msra.mxu0 0.0
    %209 = vmatprep.subr.mxu0 0.0
    %210 = vmatpush1.msra.mxu0 0.0
    %211 = vmatprep.subr.mxu0 0.0
    %212 = vmatpush1.msra.mxu0 0.0
    %213 = vmatprep.subr.mxu0 0.0
    %214 = vmatpush1.msra.mxu0 0.0
    %215 = vmatprep.subr.mxu0 0.0
    %216 = vmatpush1.msra.mxu0 0.0
    %217 = vmatprep.subr.mxu0 0.0
    %218 = vmatpush1.msra.mxu0 0.0
    %219 = vmatprep.subr.mxu0 0.0
    %220 = vmatpush1.msra.mxu0 0.0
    %221 = vmatprep.subr.mxu0 0.0
    %222 = vmatpush1.msra.mxu0 0.0
    %223 = vmatprep.subr.mxu0 0.0
    %224 = vmatpush1.msra.mxu0 0.0
    %225 = vmatprep.subr.mxu0 0.0
    %226 = vmatpush1.msra.mxu0 0.0
    %227 = vmatprep.mubr.f32.mxu0 0.0
    %228 = vmatmul.mubr.f32.gmra.mrb[0].mxu0 %v161
    %v229 = vpop.f32.mrb[0].mxu0
    %v230 = vadd.f32 %v156, %v229
    %v231 = vpop.f32.mrb[0].mxu0
    %232 = vdwg.mxu0
    %v233 = vxor.u32 %v230, 2147483648
    %v234 = vmul.f32 %v233, 1.442695
    %v235 = vpow.pop %v234
    %v236 = vadd.f32 %v235, 1.0
    %v237 = vrcp.pop %v236
    %v238 = vmul.f32 1.0, %v237
    %v239 = vtanh.pop %v230
    %v240 = vmul.f32 %v238, %v151
    %242 = vrot.lane.b32.xlu0 %v239, 64
    %v243 = vpop.permute.xlu0 %242
    %v245 = vmul.f32 %v238, %v243
    %247 = vrot.lane.b32.xlu0 %v245, 32
    %v248 = vpop.permute.xlu0 %247
    %v250 = vadd.f32 %v240, %v248
    %v251 = vtanh.pop %v250
    %253 = vrot.lane.b32.xlu0 %v251, 64
    %v254 = vpop.permute.xlu0 %253
    %v256 = vmul.f32 %v238, %v254
    %258 = vrot.lane.b32.xlu0 %v256, 32
    %v259 = vpop.permute.xlu0 %258
    %s261 = smul.u32 %s145, 4
    %s262 = scalar_lea.vmem [#allocation2], %s261
    %263 = vst.msk [vmem:[%s262] sm:$0xf] %vm142, %v259
  $region34: #{transformer_lstm_forward.3} parent=0 // loop_footer
    %s149 = sadd.s32 1, %s145
  $region35: #{transformer_lstm_forward.3} parent=0 // loop_footer_branch
    %144 = sbr.rel target = $region31
  $region36: #{transformer_lstm_forward.3} parent=0 // loop_exit
    _
  %v264 = vld [vmem:[#allocation2] sm:$0xf]
  %v265 = vld [vmem:[#allocation2 + $0x4] sm:$0xf]
  %v266 = vld [vmem:[#allocation2 + $0x8] sm:$0xf]
  %v267 = vld [vmem:[#allocation2 + $0xc] sm:$0xf]
  %v268 = vld [vmem:[%s5] sm:$0xff]
  %v269 = vld [vmem:[%s5 + $0x8] sm:$0xff]
  %v270 = vld [vmem:[%s5 + $0x10] sm:$0xff]
  %v271 = vld [vmem:[%s5 + $0x18] sm:$0xff]
  %v272 = vld [vmem:[%s6] sm:$0x1]
  %v274 = vlaneseq
  %v275 = vshrl.u32 %v274, 7
  %v276 = vsub.s32 0, %v275
  %v277 = vrot.slane %v272, %v276
  %v283 = vcombine.low %v264, %v265
  %v284 = vcombine.low %v266, %v267
  %v285 = vsel %vm37, %v283, 0
  %v287 = vsel %vm37, %v284, 0
  %289 = vmatprep.subr.mxu0 0.0
  %290 = vmatpush1.msra.mxu0 %v268
  %291 = vmatprep.subr.mxu0 0.0
  %292 = vmatpush1.msra.mxu0 %v269
  %293 = vmatprep.subr.mxu0 0.0
  %294 = vmatpush1.msra.mxu0 %v270
  %295 = vmatprep.subr.mxu0 0.0
  %296 = vmatpush1.msra.mxu0 %v271
  %297 = vmatprep.subr.mxu0 0.0
  %298 = vmatpush1.msra.mxu0 0.0
  %299 = vmatprep.subr.mxu0 0.0
  %300 = vmatpush1.msra.mxu0 0.0
  %301 = vmatprep.subr.mxu0 0.0
  %302 = vmatpush1.msra.mxu0 0.0
  %303 = vmatprep.subr.mxu0 0.0
  %304 = vmatpush1.msra.mxu0 0.0
  %305 = vmatprep.subr.mxu0 0.0
  %306 = vmatpush1.msra.mxu0 0.0
  %307 = vmatprep.subr.mxu0 0.0
  %308 = vmatpush1.msra.mxu0 0.0
  %309 = vmatprep.subr.mxu0 0.0
  %310 = vmatpush1.msra.mxu0 0.0
  %311 = vmatprep.subr.mxu0 0.0
  %312 = vmatpush1.msra.mxu0 0.0
  %313 = vmatprep.subr.mxu0 0.0
  %314 = vmatpush1.msra.mxu0 0.0
  %315 = vmatprep.subr.mxu0 0.0
  %316 = vmatpush1.msra.mxu0 0.0
  %317 = vmatprep.subr.mxu0 0.0
  %318 = vmatpush1.msra.mxu0 0.0
  %319 = vmatprep.subr.mxu0 0.0
  %320 = vmatpush1.msra.mxu0 0.0
  %321 = vmatprep.subr.mxu0 0.0
  %322 = vmatpush1.msra.mxu0 0.0
  %323 = vmatprep.subr.mxu0 0.0
  %324 = vmatpush1.msra.mxu0 0.0
  %325 = vmatprep.subr.mxu0 0.0
  %326 = vmatpush1.msra.mxu0 0.0
  %327 = vmatprep.subr.mxu0 0.0
  %328 = vmatpush1.msra.mxu0 0.0
  %329 = vmatprep.subr.mxu0 0.0
  %330 = vmatpush1.msra.mxu0 0.0
  %331 = vmatprep.subr.mxu0 0.0
  %332 = vmatpush1.msra.mxu0 0.0
  %333 = vmatprep.subr.mxu0 0.0
  %334 = vmatpush1.msra.mxu0 0.0
  %335 = vmatprep.subr.mxu0 0.0
  %336 = vmatpush1.msra.mxu0 0.0
  %337 = vmatprep.subr.mxu0 0.0
  %338 = vmatpush1.msra.mxu0 0.0
  %339 = vmatprep.subr.mxu0 0.0
  %340 = vmatpush1.msra.mxu0 0.0
  %341 = vmatprep.subr.mxu0 0.0
  %342 = vmatpush1.msra.mxu0 0.0
  %343 = vmatprep.subr.mxu0 0.0
  %344 = vmatpush1.msra.mxu0 0.0
  %345 = vmatprep.subr.mxu0 0.0
  %346 = vmatpush1.msra.mxu0 0.0
  %347 = vmatprep.subr.mxu0 0.0
  %348 = vmatpush1.msra.mxu0 0.0
  %349 = vmatprep.subr.mxu0 0.0
  %350 = vmatpush1.msra.mxu0 0.0
  %351 = vmatprep.subr.mxu0 0.0
  %352 = vmatpush1.msra.mxu0 0.0
  %353 = vmatprep.mubr.f32.mxu0 0.0
  %354 = vmatmul.mubr.f32.gmra.mrb[0].mxu0 %v285
  %v355 = vpop.f32.mrb[0].mxu0
  %v356 = vadd.f32 %v277, %v355
  %v357 = vpop.f32.mrb[0].mxu0
  %358 = vmatprep.mubr.f32.mxu0 0.0
  %359 = vmatmul.mubr.f32.gmra.mrb[0].mxu0 %v287
  %v360 = vpop.f32.mrb[0].mxu0
  %v361 = vadd.f32 %v277, %v360
  %v362 = vpop.f32.mrb[0].mxu0
  %363 = vdwg.mxu0
  %v366 = vcombine.high %v356, %v356
  %v367 = vcombine.high %v361, %v361
  %vm370 = vcmask 125952
  %371 = vst.msk [vmem:[%s7] sm:$0xf] %vm370, %v356
  %372 = vst.msk [vmem:[%s7 + $0x4] sm:$0xf] %vm370, %v366
  %373 = vst.msk [vmem:[%s7 + $0x8] sm:$0xf] %vm370, %v361
  %374 = vst.msk [vmem:[%s7 + $0xc] sm:$0xf] %vm370, %v367
  // Predicated region
  $region37: #{transformer_lstm_forward.3} parent=0 // pred_check
    _
  $region38: #{transformer_lstm_forward.3} parent=0 // pred_check_branch
    %376 = sbr.rel (0) target = $region40
  $region39: #{transformer_lstm_forward.3} parent=0 // pred_region
    _
  $region40: #{transformer_lstm_forward.3} parent=0 // pred_fallthru
    _
  // Predicated region
  $region41: #{transformer_lstm_forward.3} parent=0 // pred_check
    _
  $region42: #{transformer_lstm_forward.3} parent=0 // pred_check_branch
    %378 = sbr.rel (0) target = $region44
  $region43: #{transformer_lstm_forward.3} parent=0 // pred_region
    _
  $region44: #{transformer_lstm_forward.3} parent=0 // pred_fallthru
    _

// kernel: transformer_lstm_forward.2
$region0: #{transformer_lstm_forward.2}
  #allocation0 [shape = 'u32[]', space=smem, size = 0x4, offset = 0x4, fixed_abs, tag = 'smem constant byte address 0x4 - core index']
  #allocation1 [shape = 'u32[144,128]{1,0:T(1,128)}', space=vmem, size = 0x12000, scoped, tag = 'internal scratch']
  %s0 = inlined_call_operand.vmem [shape: f32[32,16], index: 0, kind: input, shape index: {}]
  %s1 = inlined_call_operand.vmem [shape: f32[4,32], index: 1, kind: input, shape index: {}]
  %s2 = inlined_call_operand.vmem [shape: bf16[16,32], index: 2, kind: input, shape index: {}]
  %s3 = inlined_call_operand.vmem [shape: f32[1,32], index: 3, kind: input, shape index: {}]
  %s4 = inlined_call_operand.vmem [shape: bf16[2,32,96], index: 4, kind: input, shape index: {}]
  %s5 = inlined_call_operand.vmem [shape: f32[2,1,96], index: 5, kind: input, shape index: {}]
  %s6 = inlined_call_operand.vmem [shape: bf16[2,32,32], index: 6, kind: input, shape index: {}]
  %s7 = inlined_call_operand.vmem [shape: f32[2,1,32], index: 7, kind: input, shape index: {}]
  %s8 = inlined_call_operand.vmem [shape: f32[2,1,32], index: 8, kind: input, shape index: {}]
  %s9 = inlined_call_operand.vmem [shape: f32[2,1,32], index: 9, kind: input, shape index: {}]
  %s10 = inlined_call_operand.vmem [shape: bf16[2,32,32], index: 10, kind: input, shape index: {}]
  %s11 = inlined_call_operand.vmem [shape: f32[2,1,32], index: 11, kind: input, shape index: {}]
  %s12 = inlined_call_operand.vmem [shape: bf16[2,32,32], index: 12, kind: input, shape index: {}]
  %s13 = inlined_call_operand.vmem [shape: f32[2,1,32], index: 13, kind: input, shape index: {}]
  %s14 = inlined_call_operand.vmem [shape: f32[2,1,32], index: 14, kind: input, shape index: {}]
  %s15 = inlined_call_operand.vmem [shape: f32[2,1,32], index: 15, kind: input, shape index: {}]
  %s16 = inlined_call_operand.vmem [shape: f32[32,32], index: 16, kind: output, shape index: {}]
  %s17 = sld [smem:[#allocation0]]
  $region101: #{transformer_lstm_forward.2} parent=0
    _
  %s19 = ssub.s32 1, %s17
  %s20 = scalar_select 0, %s19, %s17
  loop: start=0, step=1, limit=6
  $region2: #{transformer_lstm_forward.2} parent=0 // loop_pre_header
    _
  $region3: #{transformer_lstm_forward.2} parent=0 // loop_header
    %s22 = sphi 0, %s26
    %p23 = scmp.ge.s32.totalorder %s22, 6
    %s29 = sphi 0, %s41
    %s30 = sphi 0, %s37
    %s31 = sphi 0, %s29
    %s32 = sphi 0, %s30
    %s33 = sphi 0, %s31
    %s34 = sphi 0, %s32
    %s44 = sphi 0, %s46
    %s47 = sphi 0, %s44
    %s48 = sphi 0, %s47
    %s64 = sphi 0, %s48
    %s68 = sphi 0, %s68
    %s70 = sphi 0, %s68
    %s71 = sphi 0, %s70
    %s85 = sphi 0, %s71
    %s89 = sphi 0, %s89
    %s91 = sphi 0, %s89
    %s92 = sphi 0, %s91
    %s106 = sphi 0, %s92
    %s110 = sphi 0, %s110
    %s112 = sphi 0, %s110
    %s113 = sphi 0, %s112
    %s127 = sphi 0, %s113
    %s133 = sphi 0, %s135
    %s136 = sphi 0, %s133
    %s137 = sphi 0, %s136
    %s153 = sphi 0, %s137
    %s159 = sphi 0, %s161
    %s162 = sphi 0, %s159
    %s163 = sphi 0, %s162
    %s179 = sphi 0, %s163
    %s185 = sphi 0, %s187
    %s188 = sphi 0, %s185
    %s189 = sphi 0, %s188
    %s205 = sphi 0, %s189
    %s211 = sphi 0, %s213
    %s214 = sphi 0, %s211
    %s215 = sphi 0, %s214
    %s231 = sphi 0, %s215
    %s237 = sphi 0, %s239
    %s240 = sphi 0, %s237
    %s241 = sphi 0, %s240
    %s257 = sphi 0, %s241
    %s263 = sphi 0, %s265
    %s266 = sphi 0, %s263
    %s267 = sphi 0, %s266
    %s283 = sphi 0, %s267
    %s289 = sphi 0, %s291
    %s292 = sphi 0, %s289
    %s293 = sphi 0, %s292
    %s309 = sphi 0, %s293
    %s315 = sphi 0, %s317
    %s318 = sphi 0, %s315
    %s319 = sphi 0, %s318
    %s335 = sphi 0, %s319
    %s341 = sphi 0, %s343
    %s344 = sphi 0, %s341
    %s345 = sphi 0, %s344
    %s361 = sphi 0, %s345
    %s367 = sphi 0, %s369
    %s370 = sphi 0, %s367
    %s371 = sphi 0, %s370
    %s387 = sphi 0, %s371
    %s393 = sphi 0, %s395
    %s396 = sphi 0, %s393
    %s397 = sphi 0, %s396
    %s413 = sphi 0, %s397
    %s419 = sphi 0, %s421
    %s422 = sphi 0, %s419
    %s423 = sphi 0, %s422
    %s439 = sphi 0, %s423
    %s445 = sphi 0, %s447
    %s448 = sphi 0, %s445
    %s449 = sphi 0, %s448
    %s465 = sphi 0, %s449
  $region4: #{transformer_lstm_forward.2} parent=0 // loop_header_branch
    %25 = sbr.rel (%p23) target = $region8
  $region5: #{transformer_lstm_forward.2} parent=0 // loop_body
    %s27 = ssub.s32 %s22, 1
    %s28 = ssub.s32 %s22, 2
    %s35 = sadd.s32 1, %s30
    %p36 = scmp.ge.s32.totalorder %s35, 2
    %s37 = scalar_select %p36, 0, %s35
    %s38 = sadd.s32 1, %s29
    %s39 = scalar_select %p36, %s38, %s29
    %p40 = scmp.ge.s32.totalorder %s39, 2
    %s41 = scalar_select %p40, 0, %s39
    %s42 = ssub.s32 %s29, %s41
    %p43 = scmp.eq.s32.totalorder %s42, 0
    %s45 = sadd.s32 %s44, 1
    %s46 = scalar_select %p43, %s44, %s45
    %p49 = pneg %p43
    %p50 = scmp.eq.s32.totalorder %s22, 3
    %p51 = por %p49, %p50
    %p52 = scmp.ne.s32.totalorder %s44, %s47
    %p53 = scmp.eq.s32.totalorder %s22, 0
    %p54 = por %p52, %p53
    %p55 = scmp.ne.s32.totalorder %s44, %s47
    %p56 = scmp.eq.s32.totalorder %s27, 3
    %p57 = por %p55, %p56
    %p58 = scmp.ne.s32.totalorder %s47, %s48
    %p59 = scmp.eq.s32.totalorder %s27, 0
    %p60 = por %p58, %p59
    %p61 = scmp.ne.s32.totalorder %s47, %s48
    %p62 = scmp.eq.s32.totalorder %s28, 3
    %p63 = por %p61, %p62
    %p65 = scmp.ne.s32.totalorder %s48, %s64
    %p66 = scmp.eq.s32.totalorder %s28, 0
    %p67 = por %p65, %p66
    %s69 = sadd.s32 %s68, 1
    %p72 = scmp.eq.s32.totalorder %s22, 3
    %p73 = scmp.ne.s32.totalorder %s68, %s70
    %p74 = scmp.eq.s32.totalorder %s22, 0
    %p75 = por %p73, %p74
    %p76 = scmp.ne.s32.totalorder %s68, %s70
    %p77 = scmp.eq.s32.totalorder %s27, 3
    %p78 = por %p76, %p77
    %p79 = scmp.ne.s32.totalorder %s70, %s71
    %p80 = scmp.eq.s32.totalorder %s27, 0
    %p81 = por %p79, %p80
    %p82 = scmp.ne.s32.totalorder %s70, %s71
    %p83 = scmp.eq.s32.totalorder %s28, 3
    %p84 = por %p82, %p83
    %p86 = scmp.ne.s32.totalorder %s71, %s85
    %p87 = scmp.eq.s32.totalorder %s28, 0
    %p88 = por %p86, %p87
    %s90 = sadd.s32 %s89, 1
    %p93 = scmp.eq.s32.totalorder %s22, 3
    %p94 = scmp.ne.s32.totalorder %s89, %s91
    %p95 = scmp.eq.s32.totalorder %s22, 0
    %p96 = por %p94, %p95
    %p97 = scmp.ne.s32.totalorder %s89, %s91
    %p98 = scmp.eq.s32.totalorder %s27, 3
    %p99 = por %p97, %p98
    %p100 = scmp.ne.s32.totalorder %s91, %s92
    %p101 = scmp.eq.s32.totalorder %s27, 0
    %p102 = por %p100, %p101
    %p103 = scmp.ne.s32.totalorder %s91, %s92
    %p104 = scmp.eq.s32.totalorder %s28, 3
    %p105 = por %p103, %p104
    %p107 = scmp.ne.s32.totalorder %s92, %s106
    %p108 = scmp.eq.s32.totalorder %s28, 0
    %p109 = por %p107, %p108
    %s111 = sadd.s32 %s110, 1
    %p114 = scmp.eq.s32.totalorder %s22, 3
    %p115 = scmp.ne.s32.totalorder %s110, %s112
    %p116 = scmp.eq.s32.totalorder %s22, 0
    %p117 = por %p115, %p116
    %p118 = scmp.ne.s32.totalorder %s110, %s112
    %p119 = scmp.eq.s32.totalorder %s27, 3
    %p120 = por %p118, %p119
    %p121 = scmp.ne.s32.totalorder %s112, %s113
    %p122 = scmp.eq.s32.totalorder %s27, 0
    %p123 = por %p121, %p122
    %p124 = scmp.ne.s32.totalorder %s112, %s113
    %p125 = scmp.eq.s32.totalorder %s28, 3
    %p126 = por %p124, %p125
    %p128 = scmp.ne.s32.totalorder %s113, %s127
    %p129 = scmp.eq.s32.totalorder %s28, 0
    %p130 = por %p128, %p129
    %s131 = ssub.s32 %s30, %s37
    %p132 = scmp.eq.s32.totalorder %s131, 0
    %s134 = sadd.s32 %s133, 1
    %s135 = scalar_select %p132, %s133, %s134
    %p138 = pneg %p132
    %p139 = scmp.eq.s32.totalorder %s22, 3
    %p140 = por %p138, %p139
    %p141 = scmp.ne.s32.totalorder %s133, %s136
    %p142 = scmp.eq.s32.totalorder %s22, 0
    %p143 = por %p141, %p142
    %p144 = scmp.ne.s32.totalorder %s133, %s136
    %p145 = scmp.eq.s32.totalorder %s27, 3
    %p146 = por %p144, %p145
    %p147 = scmp.ne.s32.totalorder %s136, %s137
    %p148 = scmp.eq.s32.totalorder %s27, 0
    %p149 = por %p147, %p148
    %p150 = scmp.ne.s32.totalorder %s136, %s137
    %p151 = scmp.eq.s32.totalorder %s28, 3
    %p152 = por %p150, %p151
    %p154 = scmp.ne.s32.totalorder %s137, %s153
    %p155 = scmp.eq.s32.totalorder %s28, 0
    %p156 = por %p154, %p155
    %s157 = ssub.s32 %s30, %s37
    %p158 = scmp.eq.s32.totalorder %s157, 0
    %s160 = sadd.s32 %s159, 1
    %s161 = scalar_select %p158, %s159, %s160
    %p164 = pneg %p158
    %p165 = scmp.eq.s32.totalorder %s22, 3
    %p166 = por %p164, %p165
    %p167 = scmp.ne.s32.totalorder %s159, %s162
    %p168 = scmp.eq.s32.totalorder %s22, 0
    %p169 = por %p167, %p168
    %p170 = scmp.ne.s32.totalorder %s159, %s162
    %p171 = scmp.eq.s32.totalorder %s27, 3
    %p172 = por %p170, %p171
    %p173 = scmp.ne.s32.totalorder %s162, %s163
    %p174 = scmp.eq.s32.totalorder %s27, 0
    %p175 = por %p173, %p174
    %p176 = scmp.ne.s32.totalorder %s162, %s163
    %p177 = scmp.eq.s32.totalorder %s28, 3
    %p178 = por %p176, %p177
    %p180 = scmp.ne.s32.totalorder %s163, %s179
    %p181 = scmp.eq.s32.totalorder %s28, 0
    %p182 = por %p180, %p181
    %s183 = ssub.s32 %s30, %s37
    %p184 = scmp.eq.s32.totalorder %s183, 0
    %s186 = sadd.s32 %s185, 1
    %s187 = scalar_select %p184, %s185, %s186
    %p190 = pneg %p184
    %p191 = scmp.eq.s32.totalorder %s22, 3
    %p192 = por %p190, %p191
    %p193 = scmp.ne.s32.totalorder %s185, %s188
    %p194 = scmp.eq.s32.totalorder %s22, 0
    %p195 = por %p193, %p194
    %p196 = scmp.ne.s32.totalorder %s185, %s188
    %p197 = scmp.eq.s32.totalorder %s27, 3
    %p198 = por %p196, %p197
    %p199 = scmp.ne.s32.totalorder %s188, %s189
    %p200 = scmp.eq.s32.totalorder %s27, 0
    %p201 = por %p199, %p200
    %p202 = scmp.ne.s32.totalorder %s188, %s189
    %p203 = scmp.eq.s32.totalorder %s28, 3
    %p204 = por %p202, %p203
    %p206 = scmp.ne.s32.totalorder %s189, %s205
    %p207 = scmp.eq.s32.totalorder %s28, 0
    %p208 = por %p206, %p207
    %s209 = ssub.s32 %s30, %s37
    %p210 = scmp.eq.s32.totalorder %s209, 0
    %s212 = sadd.s32 %s211, 1
    %s213 = scalar_select %p210, %s211, %s212
    %p216 = pneg %p210
    %p217 = scmp.eq.s32.totalorder %s22, 3
    %p218 = por %p216, %p217
    %p219 = scmp.ne.s32.totalorder %s211, %s214
    %p220 = scmp.eq.s32.totalorder %s22, 0
    %p221 = por %p219, %p220
    %p222 = scmp.ne.s32.totalorder %s211, %s214
    %p223 = scmp.eq.s32.totalorder %s27, 3
    %p224 = por %p222, %p223
    %p225 = scmp.ne.s32.totalorder %s214, %s215
    %p226 = scmp.eq.s32.totalorder %s27, 0
    %p227 = por %p225, %p226
    %p228 = scmp.ne.s32.totalorder %s214, %s215
    %p229 = scmp.eq.s32.totalorder %s28, 3
    %p230 = por %p228, %p229
    %p232 = scmp.ne.s32.totalorder %s215, %s231
    %p233 = scmp.eq.s32.totalorder %s28, 0
    %p234 = por %p232, %p233
    %s235 = ssub.s32 %s30, %s37
    %p236 = scmp.eq.s32.totalorder %s235, 0
    %s238 = sadd.s32 %s237, 1
    %s239 = scalar_select %p236, %s237, %s238
    %p242 = pneg %p236
    %p243 = scmp.eq.s32.totalorder %s22, 3
    %p244 = por %p242, %p243
    %p245 = scmp.ne.s32.totalorder %s237, %s240
    %p246 = scmp.eq.s32.totalorder %s22, 0
    %p247 = por %p245, %p246
    %p248 = scmp.ne.s32.totalorder %s237, %s240
    %p249 = scmp.eq.s32.totalorder %s27, 3
    %p250 = por %p248, %p249
    %p251 = scmp.ne.s32.totalorder %s240, %s241
    %p252 = scmp.eq.s32.totalorder %s27, 0
    %p253 = por %p251, %p252
    %p254 = scmp.ne.s32.totalorder %s240, %s241
    %p255 = scmp.eq.s32.totalorder %s28, 3
    %p256 = por %p254, %p255
    %p258 = scmp.ne.s32.totalorder %s241, %s257
    %p259 = scmp.eq.s32.totalorder %s28, 0
    %p260 = por %p258, %p259
    %s261 = ssub.s32 %s30, %s37
    %p262 = scmp.eq.s32.totalorder %s261, 0
    %s264 = sadd.s32 %s263, 1
    %s265 = scalar_select %p262, %s263, %s264
    %p268 = pneg %p262
    %p269 = scmp.eq.s32.totalorder %s22, 3
    %p270 = por %p268, %p269
    %p271 = scmp.ne.s32.totalorder %s263, %s266
    %p272 = scmp.eq.s32.totalorder %s22, 0
    %p273 = por %p271, %p272
    %p274 = scmp.ne.s32.totalorder %s263, %s266
    %p275 = scmp.eq.s32.totalorder %s27, 3
    %p276 = por %p274, %p275
    %p277 = scmp.ne.s32.totalorder %s266, %s267
    %p278 = scmp.eq.s32.totalorder %s27, 0
    %p279 = por %p277, %p278
    %p280 = scmp.ne.s32.totalorder %s266, %s267
    %p281 = scmp.eq.s32.totalorder %s28, 3
    %p282 = por %p280, %p281
    %p284 = scmp.ne.s32.totalorder %s267, %s283
    %p285 = scmp.eq.s32.totalorder %s28, 0
    %p286 = por %p284, %p285
    %s287 = ssub.s32 %s30, %s37
    %p288 = scmp.eq.s32.totalorder %s287, 0
    %s290 = sadd.s32 %s289, 1
    %s291 = scalar_select %p288, %s289, %s290
    %p294 = pneg %p288
    %p295 = scmp.eq.s32.totalorder %s22, 3
    %p296 = por %p294, %p295
    %p297 = scmp.ne.s32.totalorder %s289, %s292
    %p298 = scmp.eq.s32.totalorder %s22, 0
    %p299 = por %p297, %p298
    %p300 = scmp.ne.s32.totalorder %s289, %s292
    %p301 = scmp.eq.s32.totalorder %s27, 3
    %p302 = por %p300, %p301
    %p303 = scmp.ne.s32.totalorder %s292, %s293
    %p304 = scmp.eq.s32.totalorder %s27, 0
    %p305 = por %p303, %p304
    %p306 = scmp.ne.s32.totalorder %s292, %s293
    %p307 = scmp.eq.s32.totalorder %s28, 3
    %p308 = por %p306, %p307
    %p310 = scmp.ne.s32.totalorder %s293, %s309
    %p311 = scmp.eq.s32.totalorder %s28, 0
    %p312 = por %p310, %p311
    %s313 = ssub.s32 %s30, %s37
    %p314 = scmp.eq.s32.totalorder %s313, 0
    %s316 = sadd.s32 %s315, 1
    %s317 = scalar_select %p314, %s315, %s316
    %p320 = pneg %p314
    %p321 = scmp.eq.s32.totalorder %s22, 3
    %p322 = por %p320, %p321
    %p323 = scmp.ne.s32.totalorder %s315, %s318
    %p324 = scmp.eq.s32.totalorder %s22, 0
    %p325 = por %p323, %p324
    %p326 = scmp.ne.s32.totalorder %s315, %s318
    %p327 = scmp.eq.s32.totalorder %s27, 3
    %p328 = por %p326, %p327
    %p329 = scmp.ne.s32.totalorder %s318, %s319
    %p330 = scmp.eq.s32.totalorder %s27, 0
    %p331 = por %p329, %p330
    %p332 = scmp.ne.s32.totalorder %s318, %s319
    %p333 = scmp.eq.s32.totalorder %s28, 3
    %p334 = por %p332, %p333
    %p336 = scmp.ne.s32.totalorder %s319, %s335
    %p337 = scmp.eq.s32.totalorder %s28, 0
    %p338 = por %p336, %p337
    %s339 = ssub.s32 %s30, %s37
    %p340 = scmp.eq.s32.totalorder %s339, 0
    %s342 = sadd.s32 %s341, 1
    %s343 = scalar_select %p340, %s341, %s342
    %p346 = pneg %p340
    %p347 = scmp.eq.s32.totalorder %s22, 3
    %p348 = por %p346, %p347
    %p349 = scmp.ne.s32.totalorder %s341, %s344
    %p350 = scmp.eq.s32.totalorder %s22, 0
    %p351 = por %p349, %p350
    %p352 = scmp.ne.s32.totalorder %s341, %s344
    %p353 = scmp.eq.s32.totalorder %s27, 3
    %p354 = por %p352, %p353
    %p355 = scmp.ne.s32.totalorder %s344, %s345
    %p356 = scmp.eq.s32.totalorder %s27, 0
    %p357 = por %p355, %p356
    %p358 = scmp.ne.s32.totalorder %s344, %s345
    %p359 = scmp.eq.s32.totalorder %s28, 3
    %p360 = por %p358, %p359
    %p362 = scmp.ne.s32.totalorder %s345, %s361
    %p363 = scmp.eq.s32.totalorder %s28, 0
    %p364 = por %p362, %p363
    %s365 = ssub.s32 %s30, %s37
    %p366 = scmp.eq.s32.totalorder %s365, 0
    %s368 = sadd.s32 %s367, 1
    %s369 = scalar_select %p366, %s367, %s368
    %p372 = pneg %p366
    %p373 = scmp.eq.s32.totalorder %s22, 3
    %p374 = por %p372, %p373
    %p375 = scmp.ne.s32.totalorder %s367, %s370
    %p376 = scmp.eq.s32.totalorder %s22, 0
    %p377 = por %p375, %p376
    %p378 = scmp.ne.s32.totalorder %s367, %s370
    %p379 = scmp.eq.s32.totalorder %s27, 3
    %p380 = por %p378, %p379
    %p381 = scmp.ne.s32.totalorder %s370, %s371
    %p382 = scmp.eq.s32.totalorder %s27, 0
    %p383 = por %p381, %p382
    %p384 = scmp.ne.s32.totalorder %s370, %s371
    %p385 = scmp.eq.s32.totalorder %s28, 3
    %p386 = por %p384, %p385
    %p388 = scmp.ne.s32.totalorder %s371, %s387
    %p389 = scmp.eq.s32.totalorder %s28, 0
    %p390 = por %p388, %p389
    %s391 = ssub.s32 %s30, %s37
    %p392 = scmp.eq.s32.totalorder %s391, 0
    %s394 = sadd.s32 %s393, 1
    %s395 = scalar_select %p392, %s393, %s394
    %p398 = pneg %p392
    %p399 = scmp.eq.s32.totalorder %s22, 3
    %p400 = por %p398, %p399
    %p401 = scmp.ne.s32.totalorder %s393, %s396
    %p402 = scmp.eq.s32.totalorder %s22, 0
    %p403 = por %p401, %p402
    %p404 = scmp.ne.s32.totalorder %s393, %s396
    %p405 = scmp.eq.s32.totalorder %s27, 3
    %p406 = por %p404, %p405
    %p407 = scmp.ne.s32.totalorder %s396, %s397
    %p408 = scmp.eq.s32.totalorder %s27, 0
    %p409 = por %p407, %p408
    %p410 = scmp.ne.s32.totalorder %s396, %s397
    %p411 = scmp.eq.s32.totalorder %s28, 3
    %p412 = por %p410, %p411
    %p414 = scmp.ne.s32.totalorder %s397, %s413
    %p415 = scmp.eq.s32.totalorder %s28, 0
    %p416 = por %p414, %p415
    %s417 = ssub.s32 %s30, %s37
    %p418 = scmp.eq.s32.totalorder %s417, 0
    %s420 = sadd.s32 %s419, 1
    %s421 = scalar_select %p418, %s419, %s420
    %p424 = pneg %p418
    %p425 = scmp.eq.s32.totalorder %s22, 3
    %p426 = por %p424, %p425
    %p427 = scmp.ne.s32.totalorder %s419, %s422
    %p428 = scmp.eq.s32.totalorder %s22, 0
    %p429 = por %p427, %p428
    %p430 = scmp.ne.s32.totalorder %s419, %s422
    %p431 = scmp.eq.s32.totalorder %s27, 3
    %p432 = por %p430, %p431
    %p433 = scmp.ne.s32.totalorder %s422, %s423
    %p434 = scmp.eq.s32.totalorder %s27, 0
    %p435 = por %p433, %p434
    %p436 = scmp.ne.s32.totalorder %s422, %s423
    %p437 = scmp.eq.s32.totalorder %s28, 3
    %p438 = por %p436, %p437
    %p440 = scmp.ne.s32.totalorder %s423, %s439
    %p441 = scmp.eq.s32.totalorder %s28, 0
    %p442 = por %p440, %p441
    %s443 = ssub.s32 %s29, %s41
    %p444 = scmp.eq.s32.totalorder %s443, 0
    %s446 = sadd.s32 %s445, 1
    %s447 = scalar_select %p444, %s445, %s446
    %p450 = pneg %p444
    %p451 = scmp.eq.s32.totalorder %s22, 3
    %p452 = por %p450, %p451
    %p453 = scmp.ne.s32.totalorder %s445, %s448
    %p454 = scmp.eq.s32.totalorder %s22, 0
    %p455 = por %p453, %p454
    %p456 = scmp.ne.s32.totalorder %s445, %s448
    %p457 = scmp.eq.s32.totalorder %s27, 3
    %p458 = por %p456, %p457
    %p459 = scmp.ne.s32.totalorder %s448, %s449
    %p460 = scmp.eq.s32.totalorder %s27, 0
    %p461 = por %p459, %p460
    %p462 = scmp.ne.s32.totalorder %s448, %s449
    %p463 = scmp.eq.s32.totalorder %s28, 3
    %p464 = por %p462, %p463
    %p466 = scmp.ne.s32.totalorder %s449, %s465
    %p467 = scmp.eq.s32.totalorder %s28, 0
    %p468 = por %p466, %p467
    %p469 = scmp.le.s32.totalorder 1, %s22
    %p470 = scmp.lt.s32.totalorder %s22, 5
    %p471 = pnand %p469, %p470
    %p472 = pneg %p471
    // Predicated region
    $region9: #{transformer_lstm_forward.2} parent=5 // pred_check
      _
    $region10: #{transformer_lstm_forward.2} parent=5 // pred_check_branch
      %474 = sbr.rel (%p471) target = $region12
    $region11: #{transformer_lstm_forward.2} parent=5 // pred_region
      %s475 = ssub.s32 %s22, 1
      // Predicated region
      $region13: #{transformer_lstm_forward.2} parent=11 // pred_check
        %p476 = pneg %p81
      $region14: #{transformer_lstm_forward.2} parent=11 // pred_check_branch
        %478 = sbr.rel (%p476) target = $region16
      $region15: #{transformer_lstm_forward.2} parent=11 // pred_region
        _
      $region16: #{transformer_lstm_forward.2} parent=11 // pred_fallthru
        _
      // Predicated region
      $region17: #{transformer_lstm_forward.2} parent=11 // pred_check
        %p479 = pneg %p102
      $region18: #{transformer_lstm_forward.2} parent=11 // pred_check_branch
        %481 = sbr.rel (%p479) target = $region20
      $region19: #{transformer_lstm_forward.2} parent=11 // pred_region
        _
      $region20: #{transformer_lstm_forward.2} parent=11 // pred_fallthru
        _
      // Predicated region
      $region21: #{transformer_lstm_forward.2} parent=11 // pred_check
        %p482 = pneg %p123
      $region22: #{transformer_lstm_forward.2} parent=11 // pred_check_branch
        %484 = sbr.rel (%p482) target = $region24
      $region23: #{transformer_lstm_forward.2} parent=11 // pred_region
        _
      $region24: #{transformer_lstm_forward.2} parent=11 // pred_fallthru
        _
    $region12: #{transformer_lstm_forward.2} parent=5 // pred_fallthru
      _
    %p485 = scmp.lt.s32.totalorder %s22, 4
    // Predicated region
    $region25: #{transformer_lstm_forward.2} parent=5 // pred_check
      %p486 = pneg %p485
    $region26: #{transformer_lstm_forward.2} parent=5 // pred_check_branch
      %488 = sbr.rel (%p486) target = $region28
    $region27: #{transformer_lstm_forward.2} parent=5 // pred_region
      // Predicated region
      $region29: #{transformer_lstm_forward.2} parent=27 // pred_check
        %p489 = pneg %p54
      $region30: #{transformer_lstm_forward.2} parent=27 // pred_check_branch
        %491 = sbr.rel (%p489) target = $region32
      $region31: #{transformer_lstm_forward.2} parent=27 // pred_region
        %s492 = smul.u32 2, %s29
        %p493 = scmp.lt.s32.totalorder %s492, 3
        %s494 = scalar_select %p493, %s492, 3
        %s495 = smul.addr %s494, 8
        %s496 = scalar_lea.vmem %s0, %s495
        %s497 = smul.u32 2, %s29
      $region32: #{transformer_lstm_forward.2} parent=27 // pred_fallthru
        _
      // Predicated region
      $region33: #{transformer_lstm_forward.2} parent=27 // pred_check
        %p498 = pneg %p143
      $region34: #{transformer_lstm_forward.2} parent=27 // pred_check_branch
        %500 = sbr.rel (%p498) target = $region36
      $region35: #{transformer_lstm_forward.2} parent=27 // pred_region
        %p501 = scmp.lt.s32.totalorder %s30, 1
        %s502 = scalar_select %p501, %s30, 1
        %s503 = smul.addr %s502, 4
        %s504 = smul.addr %s503, 4
        %s505 = scalar_lea.vmem %s4, %s504
      $region36: #{transformer_lstm_forward.2} parent=27 // pred_fallthru
        _
      // Predicated region
      $region37: #{transformer_lstm_forward.2} parent=27 // pred_check
        %p506 = pneg %p169
      $region38: #{transformer_lstm_forward.2} parent=27 // pred_check_branch
        %508 = sbr.rel (%p506) target = $region40
      $region39: #{transformer_lstm_forward.2} parent=27 // pred_region
        %p509 = scmp.lt.s32.totalorder %s30, 1
        %s510 = scalar_select %p509, %s30, 1
        %s511 = scalar_lea.vmem %s5, %s510
      $region40: #{transformer_lstm_forward.2} parent=27 // pred_fallthru
        _
      // Predicated region
      $region41: #{transformer_lstm_forward.2} parent=27 // pred_check
        %p512 = pneg %p195
      $region42: #{transformer_lstm_forward.2} parent=27 // pred_check_branch
        %514 = sbr.rel (%p512) target = $region44
      $region43: #{transformer_lstm_forward.2} parent=27 // pred_region
        %p515 = scmp.lt.s32.totalorder %s30, 1
        %s516 = scalar_select %p515, %s30, 1
        %s517 = smul.addr %s516, 4
        %s518 = smul.addr %s517, 4
        %s519 = scalar_lea.vmem %s6, %s518
      $region44: #{transformer_lstm_forward.2} parent=27 // pred_fallthru
        _
      // Predicated region
      $region45: #{transformer_lstm_forward.2} parent=27 // pred_check
        %p520 = pneg %p221
      $region46: #{transformer_lstm_forward.2} parent=27 // pred_check_branch
        %522 = sbr.rel (%p520) target = $region48
      $region47: #{transformer_lstm_forward.2} parent=27 // pred_region
        %p523 = scmp.lt.s32.totalorder %s30, 1
        %s524 = scalar_select %p523, %s30, 1
        %s525 = scalar_lea.vmem %s7, %s524
      $region48: #{transformer_lstm_forward.2} parent=27 // pred_fallthru
        _
      // Predicated region
      $region49: #{transformer_lstm_forward.2} parent=27 // pred_check
        %p526 = pneg %p247
      $region50: #{transformer_lstm_forward.2} parent=27 // pred_check_branch
        %528 = sbr.rel (%p526) target = $region52
      $region51: #{transformer_lstm_forward.2} parent=27 // pred_region
        %p529 = scmp.lt.s32.totalorder %s30, 1
        %s530 = scalar_select %p529, %s30, 1
        %s531 = scalar_lea.vmem %s8, %s530
      $region52: #{transformer_lstm_forward.2} parent=27 // pred_fallthru
        _
      // Predicated region
      $region53: #{transformer_lstm_forward.2} parent=27 // pred_check
        %p532 = pneg %p273
      $region54: #{transformer_lstm_forward.2} parent=27 // pred_check_branch
        %534 = sbr.rel (%p532) target = $region56
      $region55: #{transformer_lstm_forward.2} parent=27 // pred_region
        %p535 = scmp.lt.s32.totalorder %s30, 1
        %s536 = scalar_select %p535, %s30, 1
        %s537 = scalar_lea.vmem %s9, %s536
      $region56: #{transformer_lstm_forward.2} parent=27 // pred_fallthru
        _
      // Predicated region
      $region57: #{transformer_lstm_forward.2} parent=27 // pred_check
        %p538 = pneg %p299
      $region58: #{transformer_lstm_forward.2} parent=27 // pred_check_branch
        %540 = sbr.rel (%p538) target = $region60
      $region59: #{transformer_lstm_forward.2} parent=27 // pred_region
        %p541 = scmp.lt.s32.totalorder %s30, 1
        %s542 = scalar_select %p541, %s30, 1
        %s543 = smul.addr %s542, 4
        %s544 = smul.addr %s543, 4
        %s545 = scalar_lea.vmem %s10, %s544
      $region60: #{transformer_lstm_forward.2} parent=27 // pred_fallthru
        _
      // Predicated region
      $region61: #{transformer_lstm_forward.2} parent=27 // pred_check
        %p546 = pneg %p325
      $region62: #{transformer_lstm_forward.2} parent=27 // pred_check_branch
        %548 = sbr.rel (%p546) target = $region64
      $region63: #{transformer_lstm_forward.2} parent=27 // pred_region
        %p549 = scmp.lt.s32.totalorder %s30, 1
        %s550 = scalar_select %p549, %s30, 1
        %s551 = scalar_lea.vmem %s11, %s550
      $region64: #{transformer_lstm_forward.2} parent=27 // pred_fallthru
        _
      // Predicated region
      $region65: #{transformer_lstm_forward.2} parent=27 // pred_check
        %p552 = pneg %p351
      $region66: #{transformer_lstm_forward.2} parent=27 // pred_check_branch
        %554 = sbr.rel (%p552) target = $region68
      $region67: #{transformer_lstm_forward.2} parent=27 // pred_region
        %p555 = scmp.lt.s32.totalorder %s30, 1
        %s556 = scalar_select %p555, %s30, 1
        %s557 = smul.addr %s556, 4
        %s558 = smul.addr %s557, 4
        %s559 = scalar_lea.vmem %s12, %s558
      $region68: #{transformer_lstm_forward.2} parent=27 // pred_fallthru
        _
      // Predicated region
      $region69: #{transformer_lstm_forward.2} parent=27 // pred_check
        %p560 = pneg %p377
      $region70: #{transformer_lstm_forward.2} parent=27 // pred_check_branch
        %562 = sbr.rel (%p560) target = $region72
      $region71: #{transformer_lstm_forward.2} parent=27 // pred_region
        %p563 = scmp.lt.s32.totalorder %s30, 1
        %s564 = scalar_select %p563, %s30, 1
        %s565 = scalar_lea.vmem %s13, %s564
      $region72: #{transformer_lstm_forward.2} parent=27 // pred_fallthru
        _
      // Predicated region
      $region73: #{transformer_lstm_forward.2} parent=27 // pred_check
        %p566 = pneg %p403
      $region74: #{transformer_lstm_forward.2} parent=27 // pred_check_branch
        %568 = sbr.rel (%p566) target = $region76
      $region75: #{transformer_lstm_forward.2} parent=27 // pred_region
        %p569 = scmp.lt.s32.totalorder %s30, 1
        %s570 = scalar_select %p569, %s30, 1
        %s571 = scalar_lea.vmem %s14, %s570
      $region76: #{transformer_lstm_forward.2} parent=27 // pred_fallthru
        _
      // Predicated region
      $region77: #{transformer_lstm_forward.2} parent=27 // pred_check
        %p572 = pneg %p429
      $region78: #{transformer_lstm_forward.2} parent=27 // pred_check_branch
        %574 = sbr.rel (%p572) target = $region80
      $region79: #{transformer_lstm_forward.2} parent=27 // pred_region
        %p575 = scmp.lt.s32.totalorder %s30, 1
        %s576 = scalar_select %p575, %s30, 1
        %s577 = scalar_lea.vmem %s15, %s576
      $region80: #{transformer_lstm_forward.2} parent=27 // pred_fallthru
        _
    $region28: #{transformer_lstm_forward.2} parent=5 // pred_fallthru
      _
    %p578 = scmp.le.s32.totalorder 1, %s22
    %p579 = scmp.lt.s32.totalorder %s22, 5
    %p580 = pnand %p578, %p579
    %p581 = pneg %p580
    // Predicated region
    $region81: #{transformer_lstm_forward.2} parent=5 // pred_check
      _
    $region82: #{transformer_lstm_forward.2} parent=5 // pred_check_branch
      %583 = sbr.rel (%p580) target = $region84
    $region83: #{transformer_lstm_forward.2} parent=5 // pred_region
      %s584 = ssub.s32 %s22, 1
      %s585 = smul.u32 2, %s31
      %p586 = scmp.lt.s32.totalorder %s585, 3
      %s587 = scalar_select %p586, %s585, 3
      %s588 = smul.addr %s587, 8
      %s589 = scalar_lea.vmem %s0, %s588
      %p590 = pneg %p60
      %p591 = pneg %p57
      %p592 = pneg %p81
      %p593 = pneg %p78
      %p594 = pneg %p102
      %p595 = pneg %p99
      %p596 = pneg %p123
      %p597 = pneg %p120
      %p598 = scmp.lt.s32.totalorder %s32, 1
      %s599 = scalar_select %p598, %s32, 1
      %s600 = smul.addr %s599, 4
      %s601 = smul.addr %s600, 4
      %s602 = scalar_lea.vmem %s4, %s601
      %p603 = pneg %p149
      %p604 = pneg %p146
      %p605 = scmp.lt.s32.totalorder %s32, 1
      %s606 = scalar_select %p605, %s32, 1
      %s607 = scalar_lea.vmem %s5, %s606
      %p608 = pneg %p175
      %p609 = pneg %p172
      %p610 = scmp.lt.s32.totalorder %s32, 1
      %s611 = scalar_select %p610, %s32, 1
      %s612 = smul.addr %s611, 4
      %s613 = smul.addr %s612, 4
      %s614 = scalar_lea.vmem %s6, %s613
      %p615 = pneg %p201
      %p616 = pneg %p198
      %p617 = scmp.lt.s32.totalorder %s32, 1
      %s618 = scalar_select %p617, %s32, 1
      %s619 = scalar_lea.vmem %s7, %s618
      %p620 = pneg %p227
      %p621 = pneg %p224
      %p622 = scmp.lt.s32.totalorder %s32, 1
      %s623 = scalar_select %p622, %s32, 1
      %s624 = scalar_lea.vmem %s8, %s623
      %p625 = pneg %p253
      %p626 = pneg %p250
      %p627 = scmp.lt.s32.totalorder %s32, 1
      %s628 = scalar_select %p627, %s32, 1
      %s629 = scalar_lea.vmem %s9, %s628
      %p630 = pneg %p279
      %p631 = pneg %p276
      %p632 = scmp.lt.s32.totalorder %s32, 1
      %s633 = scalar_select %p632, %s32, 1
      %s634 = smul.addr %s633, 4
      %s635 = smul.addr %s634, 4
      %s636 = scalar_lea.vmem %s10, %s635
      %p637 = pneg %p305
      %p638 = pneg %p302
      %p639 = scmp.lt.s32.totalorder %s32, 1
      %s640 = scalar_select %p639, %s32, 1
      %s641 = scalar_lea.vmem %s11, %s640
      %p642 = pneg %p331
      %p643 = pneg %p328
      %p644 = scmp.lt.s32.totalorder %s32, 1
      %s645 = scalar_select %p644, %s32, 1
      %s646 = smul.addr %s645, 4
      %s647 = smul.addr %s646, 4
      %s648 = scalar_lea.vmem %s12, %s647
      %p649 = pneg %p357
      %p650 = pneg %p354
      %p651 = scmp.lt.s32.totalorder %s32, 1
      %s652 = scalar_select %p651, %s32, 1
      %s653 = scalar_lea.vmem %s13, %s652
      %p654 = pneg %p383
      %p655 = pneg %p380
      %p656 = scmp.lt.s32.totalorder %s32, 1
      %s657 = scalar_select %p656, %s32, 1
      %s658 = scalar_lea.vmem %s14, %s657
      %p659 = pneg %p409
      %p660 = pneg %p406
      %p661 = scmp.lt.s32.totalorder %s32, 1
      %s662 = scalar_select %p661, %s32, 1
      %s663 = scalar_lea.vmem %s15, %s662
      %p664 = pneg %p435
      %p665 = pneg %p432
      %p666 = pneg %p461
      %p667 = pneg %p458
      %s668 = smul.u32 2, %s31
      %p669 = scmp.lt.s32.totalorder %s668, 3
      %s670 = scalar_select %p669, %s668, 3
      %s671 = smul.addr %s670, 8
      %s672 = scalar_lea.vmem %s16, %s671
      %s673 = smul.u32 2, %s31
      %p674 = scmp.lt.s32.totalorder %s673, 3
      %s675 = scalar_select %p674, %s673, 3
      %s676 = smul.addr %s675, 8
      %s677 = scalar_lea.vmem %s0, %s676
      %s678 = smul.u32 2, %s31
      %p679 = scmp.lt.s32.totalorder %s32, 1
      %s680 = scalar_select %p679, %s32, 1
      %s681 = smul.addr %s680, 4
      %s682 = smul.addr %s681, 4
      %s683 = scalar_lea.vmem %s4, %s682
      %p684 = scmp.lt.s32.totalorder %s32, 1
      %s685 = scalar_select %p684, %s32, 1
      %s686 = scalar_lea.vmem %s5, %s685
      %p687 = scmp.lt.s32.totalorder %s32, 1
      %s688 = scalar_select %p687, %s32, 1
      %s689 = smul.addr %s688, 4
      %s690 = smul.addr %s689, 4
      %s691 = scalar_lea.vmem %s6, %s690
      %p692 = scmp.lt.s32.totalorder %s32, 1
      %s693 = scalar_select %p692, %s32, 1
      %s694 = scalar_lea.vmem %s7, %s693
      %p695 = scmp.lt.s32.totalorder %s32, 1
      %s696 = scalar_select %p695, %s32, 1
      %s697 = scalar_lea.vmem %s8, %s696
      %p698 = scmp.lt.s32.totalorder %s32, 1
      %s699 = scalar_select %p698, %s32, 1
      %s700 = scalar_lea.vmem %s9, %s699
      %p701 = scmp.lt.s32.totalorder %s32, 1
      %s702 = scalar_select %p701, %s32, 1
      %s703 = smul.addr %s702, 4
      %s704 = smul.addr %s703, 4
      %s705 = scalar_lea.vmem %s10, %s704
      %p706 = scmp.lt.s32.totalorder %s32, 1
      %s707 = scalar_select %p706, %s32, 1
      %s708 = scalar_lea.vmem %s11, %s707
      %p709 = scmp.lt.s32.totalorder %s32, 1
      %s710 = scalar_select %p709, %s32, 1
      %s711 = smul.addr %s710, 4
      %s712 = smul.addr %s711, 4
      %s713 = scalar_lea.vmem %s12, %s712
      %p714 = scmp.lt.s32.totalorder %s32, 1
      %s715 = scalar_select %p714, %s32, 1
      %s716 = scalar_lea.vmem %s13, %s715
      %p717 = scmp.lt.s32.totalorder %s32, 1
      %s718 = scalar_select %p717, %s32, 1
      %s719 = scalar_lea.vmem %s14, %s718
      %p720 = scmp.lt.s32.totalorder %s32, 1
      %s721 = scalar_select %p720, %s32, 1
      %s722 = scalar_lea.vmem %s15, %s721
      %s723 = smul.u32 2, %s31
      %p724 = scmp.lt.s32.totalorder %s723, 3
      %s725 = scalar_select %p724, %s723, 3
      %s726 = smul.addr %s725, 8
      %s727 = scalar_lea.vmem %s16, %s726
      %s728 = smul.u32 2, %s31
      %p730 = scmp.eq.s32.totalorder %s32, 0
      // Predicated region
      $region85: #{transformer_lstm_forward.2} parent=83 // pred_check
        %p731 = pneg %p730
      $region86: #{transformer_lstm_forward.2} parent=83 // pred_check_branch
        %733 = sbr.rel (%p731) target = $region88
      $region87: #{transformer_lstm_forward.2} parent=83 // pred_region
        %v734 = vld [vmem:[%s677] sm:$0xff]
        %v735 = vld [vmem:[%s677 + $0x8] sm:$0xff]
        %v736 = vpack.c.bf16 %v735, %v734
        %v737 = vld [vmem:[%s2] sm:$0xf]
        %v738 = vld [vmem:[%s2 + $0x4] sm:$0xf]
        %v739 = vld [vmem:[%s3] sm:$0x1]
        %v741 = vlaneseq
        %v742 = vshrl.u32 %v741, 7
        %v743 = vsub.s32 0, %v742
        %v744 = vrot.slane %v739, %v743
        %v748 = vunpack.c.l.b16 %v737
        %v749 = vunpack.c.l.b16 %v738
        %v750 = vpack.c.b16 %v749, %v748
        %vm752 = vcmask 130048
        %v754 = vsel %vm752, %v736, 0
        %756 = vmatprep.subr.bf16.mxu0 0
        %757 = vmatpush1.bf16.msra.mxu0 %v750
        %758 = vmatprep.subr.bf16.mxu0 0
        %759 = vmatpush1.bf16.msra.mxu0 0
        %760 = vmatprep.subr.bf16.mxu0 0
        %761 = vmatpush1.bf16.msra.mxu0 0
        %762 = vmatprep.subr.bf16.mxu0 0
        %763 = vmatpush1.bf16.msra.mxu0 0
        %764 = vmatprep.subr.bf16.mxu0 0
        %765 = vmatpush1.bf16.msra.mxu0 0
        %766 = vmatprep.subr.bf16.mxu0 0
        %767 = vmatpush1.bf16.msra.mxu0 0
        %768 = vmatprep.subr.bf16.mxu0 0
        %769 = vmatpush1.bf16.msra.mxu0 0
        %770 = vmatprep.subr.bf16.mxu0 0
        %771 = vmatpush1.bf16.msra.mxu0 0
        %772 = vmatprep.subr.bf16.mxu0 0
        %773 = vmatpush1.bf16.msra.mxu0 0
        %774 = vmatprep.subr.bf16.mxu0 0
        %775 = vmatpush1.bf16.msra.mxu0 0
        %776 = vmatprep.subr.bf16.mxu0 0
        %777 = vmatpush1.bf16.msra.mxu0 0
        %778 = vmatprep.subr.bf16.mxu0 0
        %779 = vmatpush1.bf16.msra.mxu0 0
        %780 = vmatprep.subr.bf16.mxu0 0
        %781 = vmatpush1.bf16.msra.mxu0 0
        %782 = vmatprep.subr.bf16.mxu0 0
        %783 = vmatpush1.bf16.msra.mxu0 0
        %784 = vmatprep.subr.bf16.mxu0 0
        %785 = vmatpush1.bf16.msra.mxu0 0
        %786 = vmatprep.subr.bf16.mxu0 0
        %787 = vmatpush1.bf16.msra.mxu0 0
        %788 = vmatprep.mubr.bf16.mxu0 0
        %789 = vmatmul.mubr.bf16.gmra.mrb[0].mxu0 %v754
        %v790 = vpop.f32.mrb[0].mxu0
        %v791 = vadd.f32 %v744, %v790
        %v792 = vpop.f32.mrb[0].mxu0
        %v793 = vpop.f32.mrb[0].mxu0
        %v794 = vadd.f32 %v744, %v793
        %v795 = vpop.f32.mrb[0].mxu0
        %796 = vdwg.mxu0
        %v797 = vmul.f32 %v791, 5.656854
        %v798 = vmul.f32 %v794, 5.656854
        %v801 = vcombine.high %v797, %v797
        %v802 = vcombine.high %v798, %v798
        %v805 = vld [vmem:[%s1] sm:$0xf]
        %v806 = vadd.f32 %v797, %v805
        %v807 = vadd.f32 %v801, %v805
        %v808 = vadd.f32 %v798, %v805
        %v809 = vadd.f32 %v802, %v805
        %v814 = vcombine.low %v806, %v807
        %v815 = vcombine.low %v808, %v809
        %vm818 = vcmask 261120
        %819 = vst.msk [vmem:[%s727] sm:$0xff] %vm818, %v814
        %820 = vst.msk [vmem:[%s727 + $0x8] sm:$0xff] %vm818, %v815
      $region88: #{transformer_lstm_forward.2} parent=83 // pred_fallthru
        _
      %v821 = vld [vmem:[%s727] sm:$0xff]
      %v822 = vld [vmem:[%s727 + $0x8] sm:$0xff]
      %v823 = vpack.c.bf16 %v822, %v821
      %v824 = vld [vmem:[%s683] sm:$0xf]
      %v825 = vld [vmem:[%s683 + $0x4] sm:$0xf]
      %v826 = vld [vmem:[%s683 + $0x8] sm:$0xf]
      %v827 = vld [vmem:[%s683 + $0xc] sm:$0xf]
      %v828 = vld [vmem:[%s686] sm:$0x1]
      %v830 = vlaneseq
      %v831 = vshrl.u32 %v830, 7
      %v832 = vsub.s32 0, %v831
      %v833 = vrot.slane %v828, %v832
      %v839 = vunpack.c.l.b16 %v824
      %v840 = vunpack.c.l.b16 %v825
      %v841 = vunpack.c.l.b16 %v826
      %v842 = vunpack.c.l.b16 %v827
      %v843 = vpack.c.b16 %v840, %v839
      %v844 = vpack.c.b16 %v842, %v841
      %vm847 = vcmask 261120
      %v849 = vsel %vm847, %v823, 0
      %851 = vmatprep.subr.bf16.mxu0 0
      %852 = vmatpush1.bf16.msra.mxu0 %v843
      %853 = vmatprep.subr.bf16.mxu0 0
      %854 = vmatpush1.bf16.msra.mxu0 %v844
      %855 = vmatprep.subr.bf16.mxu0 0
      %856 = vmatpush1.bf16.msra.mxu0 0
      %857 = vmatprep.subr.bf16.mxu0 0
      %858 = vmatpush1.bf16.msra.mxu0 0
      %859 = vmatprep.subr.bf16.mxu0 0
      %860 = vmatpush1.bf16.msra.mxu0 0
      %861 = vmatprep.subr.bf16.mxu0 0
      %862 = vmatpush1.bf16.msra.mxu0 0
      %863 = vmatprep.subr.bf16.mxu0 0
      %864 = vmatpush1.bf16.msra.mxu0 0
      %865 = vmatprep.subr.bf16.mxu0 0
      %866 = vmatpush1.bf16.msra.mxu0 0
      %867 = vmatprep.subr.bf16.mxu0 0
      %868 = vmatpush1.bf16.msra.mxu0 0
      %869 = vmatprep.subr.bf16.mxu0 0
      %870 = vmatpush1.bf16.msra.mxu0 0
      %871 = vmatprep.subr.bf16.mxu0 0
      %872 = vmatpush1.bf16.msra.mxu0 0
      %873 = vmatprep.subr.bf16.mxu0 0
      %874 = vmatpush1.bf16.msra.mxu0 0
      %875 = vmatprep.subr.bf16.mxu0 0
      %876 = vmatpush1.bf16.msra.mxu0 0
      %877 = vmatprep.subr.bf16.mxu0 0
      %878 = vmatpush1.bf16.msra.mxu0 0
      %879 = vmatprep.subr.bf16.mxu0 0
      %880 = vmatpush1.bf16.msra.mxu0 0
      %881 = vmatprep.subr.bf16.mxu0 0
      %882 = vmatpush1.bf16.msra.mxu0 0
      %883 = vmatprep.mubr.bf16.mxu0 0
      %884 = vmatmul.mubr.bf16.gmra.mrb[0].mxu0 %v849
      %v885 = vpop.f32.mrb[0].mxu0
      %v886 = vadd.f32 %v833, %v885
      %v887 = vpop.f32.mrb[0].mxu0
      %v888 = vpop.f32.mrb[0].mxu0
      %v889 = vadd.f32 %v833, %v888
      %v890 = vpop.f32.mrb[0].mxu0
      %891 = vdwg.mxu0
      %v894 = vcombine.high %v886, %v886
      %v895 = vcombine.high %v889, %v889
      %v898 = vpack.c.bf16 %v886, %v886
      %v899 = vpack.c.bf16 %v894, %v894
      %v900 = vpack.c.bf16 %v889, %v889
      %v901 = vpack.c.bf16 %v895, %v895
      %903 = vrot.lane.b32.xlu0 %v898, 96
      %v904 = vpop.permute.xlu0 %903
      %vm905 = vcmask 130048
      %v907 = vsel %vm905, %v898, 0
      %v910 = vsel %vm905, %v904, 0
      %912 = vmatprep.subr.bf16.mxu0 0
      %913 = vmatpush1.bf16.xpose.msra.mxu0 %v910
      %914 = vmatprep.subr.bf16.mxu0 0
      %915 = vmatpush1.bf16.xpose.msra.mxu0 0
      %916 = vmatprep.subr.bf16.mxu0 0
      %917 = vmatpush1.bf16.xpose.msra.mxu0 0
      %918 = vmatprep.subr.bf16.mxu0 0
      %919 = vmatpush1.bf16.xpose.msra.mxu0 0
      %920 = vmatprep.subr.bf16.mxu0 0
      %921 = vmatpush1.bf16.xpose.msra.mxu0 0
      %922 = vmatprep.subr.bf16.mxu0 0
      %923 = vmatpush1.bf16.xpose.msra.mxu0 0
      %924 = vmatprep.subr.bf16.mxu0 0
      %925 = vmatpush1.bf16.xpose.msra.mxu0 0
      %926 = vmatprep.subr.bf16.mxu0 0
      %927 = vmatpush1.bf16.xpose.msra.mxu0 0
      %928 = vmatprep.subr.bf16.mxu0 0
      %929 = vmatpush1.bf16.xpose.msra.mxu0 0
      %930 = vmatprep.subr.bf16.mxu0 0
      %931 = vmatpush1.bf16.xpose.msra.mxu0 0
      %932 = vmatprep.subr.bf16.mxu0 0
      %933 = vmatpush1.bf16.xpose.msra.mxu0 0
      %934 = vmatprep.subr.bf16.mxu0 0
      %935 = vmatpush1.bf16.xpose.msra.mxu0 0
      %936 = vmatprep.subr.bf16.mxu0 0
      %937 = vmatpush1.bf16.xpose.msra.mxu0 0
      %938 = vmatprep.subr.bf16.mxu0 0
      %939 = vmatpush1.bf16.xpose.msra.mxu0 0
      %940 = vmatprep.subr.bf16.mxu0 0
      %941 = vmatpush1.bf16.xpose.msra.mxu0 0
      %942 = vmatprep.subr.bf16.mxu0 0
      %943 = vmatpush1.bf16.xpose.msra.mxu0 0
      %944 = vmatprep.mubr.bf16.mxu0 0
      %945 = vmatmul.mubr.bf16.gmra.mrb[0].mxu0 %v907
      %v946 = vpop.f32.mrb[0].mxu0
      %v947 = vadd.f32 0.0, %v946
      %v948 = vpop.f32.mrb[0].mxu0
      %v949 = vpop.f32.mrb[0].mxu0
      %v950 = vpop.f32.mrb[0].mxu0
      %951 = vdwg.mxu0
      %953 = vrot.lane.b32.xlu0 %v899, 96
      %v954 = vpop.permute.xlu0 %953
      %v956 = vsel %vm905, %v899, 0
      %v959 = vsel %vm905, %v954, 0
      %961 = vmatprep.subr.bf16.mxu0 0
      %962 = vmatpush1.bf16.xpose.msra.mxu0 %v959
      %963 = vmatprep.subr.bf16.mxu0 0
      %964 = vmatpush1.bf16.xpose.msra.mxu0 0
      %965 = vmatprep.subr.bf16.mxu0 0
      %966 = vmatpush1.bf16.xpose.msra.mxu0 0
      %967 = vmatprep.subr.bf16.mxu0 0
      %968 = vmatpush1.bf16.xpose.msra.mxu0 0
      %969 = vmatprep.subr.bf16.mxu0 0
      %970 = vmatpush1.bf16.xpose.msra.mxu0 0
      %971 = vmatprep.subr.bf16.mxu0 0
      %972 = vmatpush1.bf16.xpose.msra.mxu0 0
      %973 = vmatprep.subr.bf16.mxu0 0
      %974 = vmatpush1.bf16.xpose.msra.mxu0 0
      %975 = vmatprep.subr.bf16.mxu0 0
      %976 = vmatpush1.bf16.xpose.msra.mxu0 0
      %977 = vmatprep.subr.bf16.mxu0 0
      %978 = vmatpush1.bf16.xpose.msra.mxu0 0
      %979 = vmatprep.subr.bf16.mxu0 0
      %980 = vmatpush1.bf16.xpose.msra.mxu0 0
      %981 = vmatprep.subr.bf16.mxu0 0
      %982 = vmatpush1.bf16.xpose.msra.mxu0 0
      %983 = vmatprep.subr.bf16.mxu0 0
      %984 = vmatpush1.bf16.xpose.msra.mxu0 0
      %985 = vmatprep.subr.bf16.mxu0 0
      %986 = vmatpush1.bf16.xpose.msra.mxu0 0
      %987 = vmatprep.subr.bf16.mxu0 0
      %988 = vmatpush1.bf16.xpose.msra.mxu0 0
      %989 = vmatprep.subr.bf16.mxu0 0
      %990 = vmatpush1.bf16.xpose.msra.mxu0 0
      %991 = vmatprep.subr.bf16.mxu0 0
      %992 = vmatpush1.bf16.xpose.msra.mxu0 0
      %993 = vmatprep.mubr.bf16.mxu0 0
      %994 = vmatmul.mubr.bf16.gmra.mrb[0].mxu0 %v956
      %v995 = vpop.f32.mrb[0].mxu0
      %v996 = vadd.f32 0.0, %v995
      %v997 = vpop.f32.mrb[0].mxu0
      %v998 = vpop.f32.mrb[0].mxu0
      %v999 = vpop.f32.mrb[0].mxu0
      %1000 = vdwg.mxu0
      %1002 = vrot.lane.b32.xlu0 %v900, 96
      %v1003 = vpop.permute.xlu0 %1002
      %v1005 = vsel %vm905, %v900, 0
      %v1008 = vsel %vm905, %v1003, 0
      %1010 = vmatprep.subr.bf16.mxu0 0
      %1011 = vmatpush1.bf16.xpose.msra.mxu0 %v1008
      %1012 = vmatprep.subr.bf16.mxu0 0
      %1013 = vmatpush1.bf16.xpose.msra.mxu0 0
      %1014 = vmatprep.subr.bf16.mxu0 0
      %1015 = vmatpush1.bf16.xpose.msra.mxu0 0
      %1016 = vmatprep.subr.bf16.mxu0 0
      %1017 = vmatpush1.bf16.xpose.msra.mxu0 0
      %1018 = vmatprep.subr.bf16.mxu0 0
      %1019 = vmatpush1.bf16.xpose.msra.mxu0 0
      %1020 = vmatprep.subr.bf16.mxu0 0
      %1021 = vmatpush1.bf16.xpose.msra.mxu0 0
      %1022 = vmatprep.subr.bf16.mxu0 0
      %1023 = vmatpush1.bf16.xpose.msra.mxu0 0
      %1024 = vmatprep.subr.bf16.mxu0 0
      %1025 = vmatpush1.bf16.xpose.msra.mxu0 0
      %1026 = vmatprep.subr.bf16.mxu0 0
      %1027 = vmatpush1.bf16.xpose.msra.mxu0 0
      %1028 = vmatprep.subr.bf16.mxu0 0
      %1029 = vmatpush1.bf16.xpose.msra.mxu0 0
      %1030 = vmatprep.subr.bf16.mxu0 0
      %1031 = vmatpush1.bf16.xpose.msra.mxu0 0
      %1032 = vmatprep.subr.bf16.mxu0 0
      %1033 = vmatpush1.bf16.xpose.msra.mxu0 0
      %1034 = vmatprep.subr.bf16.mxu0 0
      %1035 = vmatpush1.bf16.xpose.msra.mxu0 0
      %1036 = vmatprep.subr.bf16.mxu0 0
      %1037 = vmatpush1.bf16.xpose.msra.mxu0 0
      %1038 = vmatprep.subr.bf16.mxu0 0
      %1039 = vmatpush1.bf16.xpose.msra.mxu0 0
      %1040 = vmatprep.subr.bf16.mxu0 0
      %1041 = vmatpush1.bf16.xpose.msra.mxu0 0
      %1042 = vmatprep.mubr.bf16.mxu0 0
      %1043 = vmatmul.mubr.bf16.gmra.mrb[0].mxu0 %v1005
      %v1044 = vpop.f32.mrb[0].mxu0
      %v1045 = vadd.f32 0.0, %v1044
      %v1046 = vpop.f32.mrb[0].mxu0
      %v1047 = vpop.f32.mrb[0].mxu0
      %v1048 = vpop.f32.mrb[0].mxu0
      %1049 = vdwg.mxu0
      %1051 = vrot.lane.b32.xlu0 %v901, 96
      %v1052 = vpop.permute.xlu0 %1051
      %v1054 = vsel %vm905, %v901, 0
      %v1057 = vsel %vm905, %v1052, 0
      %1059 = vmatprep.subr.bf16.mxu0 0
      %1060 = vmatpush1.bf16.xpose.msra.mxu0 %v1057
      %1061 = vmatprep.subr.bf16.mxu0 0
      %1062 = vmatpush1.bf16.xpose.msra.mxu0 0
      %1063 = vmatprep.subr.bf16.mxu0 0
      %1064 = vmatpush1.bf16.xpose.msra.mxu0 0
      %1065 = vmatprep.subr.bf16.mxu0 0
      %1066 = vmatpush1.bf16.xpose.msra.mxu0 0
      %1067 = vmatprep.subr.bf16.mxu0 0
      %1068 = vmatpush1.bf16.xpose.msra.mxu0 0
      %1069 = vmatprep.subr.bf16.mxu0 0
      %1070 = vmatpush1.bf16.xpose.msra.mxu0 0
      %1071 = vmatprep.subr.bf16.mxu0 0
      %1072 = vmatpush1.bf16.xpose.msra.mxu0 0
      %1073 = vmatprep.subr.bf16.mxu0 0
      %1074 = vmatpush1.bf16.xpose.msra.mxu0 0
      %1075 = vmatprep.subr.bf16.mxu0 0
      %1076 = vmatpush1.bf16.xpose.msra.mxu0 0
      %1077 = vmatprep.subr.bf16.mxu0 0
      %1078 = vmatpush1.bf16.xpose.msra.mxu0 0
      %1079 = vmatprep.subr.bf16.mxu0 0
      %1080 = vmatpush1.bf16.xpose.msra.mxu0 0
      %1081 = vmatprep.subr.bf16.mxu0 0
      %1082 = vmatpush1.bf16.xpose.msra.mxu0 0
      %1083 = vmatprep.subr.bf16.mxu0 0
      %1084 = vmatpush1.bf16.xpose.msra.mxu0 0
      %1085 = vmatprep.subr.bf16.mxu0 0
      %1086 = vmatpush1.bf16.xpose.msra.mxu0 0
      %1087 = vmatprep.subr.bf16.mxu0 0
      %1088 = vmatpush1.bf16.xpose.msra.mxu0 0
      %1089 = vmatprep.subr.bf16.mxu0 0
      %1090 = vmatpush1.bf16.xpose.msra.mxu0 0
      %1091 = vmatprep.mubr.bf16.mxu0 0
      %1092 = vmatmul.mubr.bf16.gmra.mrb[0].mxu0 %v1054
      %v1093 = vpop.f32.mrb[0].mxu0
      %v1094 = vadd.f32 0.0, %v1093
      %v1095 = vpop.f32.mrb[0].mxu0
      %v1096 = vpop.f32.mrb[0].mxu0
      %v1097 = vpop.f32.mrb[0].mxu0
      %1098 = vdwg.mxu0
      %vm1099 = vcmask 27648
      %v1100 = vsel %vm1099, %v947, -inf
      %1101 = vmax.xlane.f32.xlu0 %v1100
      %v1102 = vpop.xlane.xlu0 %1101
      %v1103 = vsel %vm1099, %v996, -inf
      %1104 = vmax.xlane.f32.xlu0 %v1103
      %v1105 = vpop.xlane.xlu0 %1104
      %v1106 = vsel %vm1099, %v1045, -inf
      %1107 = vmax.xlane.f32.xlu0 %v1106
      %v1108 = vpop.xlane.xlu0 %1107
      %v1109 = vsel %vm1099, %v1094, -inf
      %1110 = vmax.xlane.f32.xlu0 %v1109
      %v1111 = vpop.xlane.xlu0 %1110
      %v1112 = vsub.f32 %v947, %v1102
      %v1113 = vsub.f32 %v996, %v1105
      %v1114 = vsub.f32 %v1045, %v1108
      %v1115 = vsub.f32 %v1094, %v1111
      %v1116 = vmul.f32 %v1112, 1.442695
      %v1117 = vpow.pop %v1116
      %v1118 = vmul.f32 %v1113, 1.442695
      %v1119 = vpow.pop %v1118
      %v1120 = vmul.f32 %v1114, 1.442695
      %v1121 = vpow.pop %v1120
      %v1122 = vmul.f32 %v1115, 1.442695
      %v1123 = vpow.pop %v1122
      %v1124 = vsel %vm1099, %v1117, 0.0
      %1125 = vadd.xlane.f32.xlu0 %v1124
      %v1126 = vpop.xlane.xlu0 %1125
      %v1127 = vsel %vm1099, %v1119, 0.0
      %1128 = vadd.xlane.f32.xlu0 %v1127
      %v1129 = vpop.xlane.xlu0 %1128
      %v1130 = vsel %vm1099, %v1121, 0.0
      %1131 = vadd.xlane.f32.xlu0 %v1130
      %v1132 = vpop.xlane.xlu0 %1131
      %v1133 = vsel %vm1099, %v1123, 0.0
      %1134 = vadd.xlane.f32.xlu0 %v1133
      %v1135 = vpop.xlane.xlu0 %1134
      %v1136 = vrcp.pop %v1126
      %v1137 = vrcp.pop %v1129
      %v1138 = vrcp.pop %v1132
      %v1139 = vrcp.pop %v1135
      %v1140 = vmul.f32 %v1117, %v1136
      %v1141 = vmul.f32 %v1119, %v1137
      %v1142 = vmul.f32 %v1121, %v1138
      %v1143 = vmul.f32 %v1123, %v1139
      %v1144 = vpack.c.bf16 %v1140, %v1140
      %v1145 = vpack.c.bf16 %v1141, %v1141
      %v1146 = vpack.c.bf16 %v1142, %v1142
      %v1147 = vpack.c.bf16 %v1143, %v1143
      %1148 = vrot.lane.b32.xlu0 %v898, 64
      %v1149 = vpop.permute.xlu0 %1148
      %vm1150 = vcmask 31744
      %v1152 = vsel %vm1150, %v1144, 0
      %vm1154 = vcmask 1041408
      %v1156 = vsel %vm1154, %v1149, 0
      %1158 = vmatprep.subr.bf16.mxu0 0
      %1159 = vmatpush1.bf16.msra.mxu0 %v1156
      %1160 = vmatprep.subr.bf16.mxu0 0
      %1161 = vmatpush1.bf16.msra.mxu0 0
      %1162 = vmatprep.subr.bf16.mxu0 0
      %1163 = vmatpush1.bf16.msra.mxu0 0
      %1164 = vmatprep.subr.bf16.mxu0 0
      %1165 = vmatpush1.bf16.msra.mxu0 0
      %1166 = vmatprep.subr.bf16.mxu0 0
      %1167 = vmatpush1.bf16.msra.mxu0 0
      %1168 = vmatprep.subr.bf16.mxu0 0
      %1169 = vmatpush1.bf16.msra.mxu0 0
      %1170 = vmatprep.subr.bf16.mxu0 0
      %1171 = vmatpush1.bf16.msra.mxu0 0
      %1172 = vmatprep.subr.bf16.mxu0 0
      %1173 = vmatpush1.bf16.msra.mxu0 0
      %1174 = vmatprep.subr.bf16.mxu0 0
      %1175 = vmatpush1.bf16.msra.mxu0 0
      %1176 = vmatprep.subr.bf16.mxu0 0
      %1177 = vmatpush1.bf16.msra.mxu0 0
      %1178 = vmatprep.subr.bf16.mxu0 0
      %1179 = vmatpush1.bf16.msra.mxu0 0
      %1180 = vmatprep.subr.bf16.mxu0 0
      %1181 = vmatpush1.bf16.msra.mxu0 0
      %1182 = vmatprep.subr.bf16.mxu0 0
      %1183 = vmatpush1.bf16.msra.mxu0 0
      %1184 = vmatprep.subr.bf16.mxu0 0
      %1185 = vmatpush1.bf16.msra.mxu0 0
      %1186 = vmatprep.subr.bf16.mxu0 0
      %1187 = vmatpush1.bf16.msra.mxu0 0
      %1188 = vmatprep.subr.bf16.mxu0 0
      %1189 = vmatpush1.bf16.msra.mxu0 0
      %1190 = vmatprep.mubr.bf16.mxu0 0
      %1191 = vmatmul.mubr.bf16.gmra.mrb[0].mxu0 %v1152
      %v1192 = vpop.f32.mrb[0].mxu0
      %v1193 = vadd.f32 0.0, %v1192
      %v1194 = vpop.f32.mrb[0].mxu0
      %v1195 = vpop.f32.mrb[0].mxu0
      %v1196 = vpop.f32.mrb[0].mxu0
      %1197 = vdwg.mxu0
      %1198 = vrot.lane.b32.xlu0 %v899, 64
      %v1199 = vpop.permute.xlu0 %1198
      %v1201 = vsel %vm1150, %v1145, 0
      %v1204 = vsel %vm1154, %v1199, 0
      %1206 = vmatprep.subr.bf16.mxu0 0
      %1207 = vmatpush1.bf16.msra.mxu0 %v1204
      %1208 = vmatprep.subr.bf16.mxu0 0
      %1209 = vmatpush1.bf16.msra.mxu0 0
      %1210 = vmatprep.subr.bf16.mxu0 0
      %1211 = vmatpush1.bf16.msra.mxu0 0
      %1212 = vmatprep.subr.bf16.mxu0 0
      %1213 = vmatpush1.bf16.msra.mxu0 0
      %1214 = vmatprep.subr.bf16.mxu0 0
      %1215 = vmatpush1.bf16.msra.mxu0 0
      %1216 = vmatprep.subr.bf16.mxu0 0
      %1217 = vmatpush1.bf16.msra.mxu0 0
      %1218 = vmatprep.subr.bf16.mxu0 0
      %1219 = vmatpush1.bf16.msra.mxu0 0
      %1220 = vmatprep.subr.bf16.mxu0 0
      %1221 = vmatpush1.bf16.msra.mxu0 0
      %1222 = vmatprep.subr.bf16.mxu0 0
      %1223 = vmatpush1.bf16.msra.mxu0 0
      %1224 = vmatprep.subr.bf16.mxu0 0
      %1225 = vmatpush1.bf16.msra.mxu0 0
      %1226 = vmatprep.subr.bf16.mxu0 0
      %1227 = vmatpush1.bf16.msra.mxu0 0
      %1228 = vmatprep.subr.bf16.mxu0 0
      %1229 = vmatpush1.bf16.msra.mxu0 0
      %1230 = vmatprep.subr.bf16.mxu0 0
      %1231 = vmatpush1.bf16.msra.mxu0 0
      %1232 = vmatprep.subr.bf16.mxu0 0
      %1233 = vmatpush1.bf16.msra.mxu0 0
      %1234 = vmatprep.subr.bf16.mxu0 0
      %1235 = vmatpush1.bf16.msra.mxu0 0
      %1236 = vmatprep.subr.bf16.mxu0 0
      %1237 = vmatpush1.bf16.msra.mxu0 0
      %1238 = vmatprep.mubr.bf16.mxu0 0
      %1239 = vmatmul.mubr.bf16.gmra.mrb[0].mxu0 %v1201
      %v1240 = vpop.f32.mrb[0].mxu0
      %v1241 = vadd.f32 0.0, %v1240
      %v1242 = vpop.f32.mrb[0].mxu0
      %v1243 = vpop.f32.mrb[0].mxu0
      %v1244 = vpop.f32.mrb[0].mxu0
      %1245 = vdwg.mxu0
      %1246 = vrot.lane.b32.xlu0 %v900, 64
      %v1247 = vpop.permute.xlu0 %1246
      %v1249 = vsel %vm1150, %v1146, 0
      %v1252 = vsel %vm1154, %v1247, 0
      %1254 = vmatprep.subr.bf16.mxu0 0
      %1255 = vmatpush1.bf16.msra.mxu0 %v1252
      %1256 = vmatprep.subr.bf16.mxu0 0
      %1257 = vmatpush1.bf16.msra.mxu0 0
      %1258 = vmatprep.subr.bf16.mxu0 0
      %1259 = vmatpush1.bf16.msra.mxu0 0
      %1260 = vmatprep.subr.bf16.mxu0 0
      %1261 = vmatpush1.bf16.msra.mxu0 0
      %1262 = vmatprep.subr.bf16.mxu0 0
      %1263 = vmatpush1.bf16.msra.mxu0 0
      %1264 = vmatprep.subr.bf16.mxu0 0
      %1265 = vmatpush1.bf16.msra.mxu0 0
      %1266 = vmatprep.subr.bf16.mxu0 0
      %1267 = vmatpush1.bf16.msra.mxu0 0
      %1268 = vmatprep.subr.bf16.mxu0 0
      %1269 = vmatpush1.bf16.msra.mxu0 0
      %1270 = vmatprep.subr.bf16.mxu0 0
      %1271 = vmatpush1.bf16.msra.mxu0 0
      %1272 = vmatprep.subr.bf16.mxu0 0
      %1273 = vmatpush1.bf16.msra.mxu0 0
      %1274 = vmatprep.subr.bf16.mxu0 0
      %1275 = vmatpush1.bf16.msra.mxu0 0
      %1276 = vmatprep.subr.bf16.mxu0 0
      %1277 = vmatpush1.bf16.msra.mxu0 0
      %1278 = vmatprep.subr.bf16.mxu0 0
      %1279 = vmatpush1.bf16.msra.mxu0 0
      %1280 = vmatprep.subr.bf16.mxu0 0
      %1281 = vmatpush1.bf16.msra.mxu0 0
      %1282 = vmatprep.subr.bf16.mxu0 0
      %1283 = vmatpush1.bf16.msra.mxu0 0
      %1284 = vmatprep.subr.bf16.mxu0 0
      %1285 = vmatpush1.bf16.msra.mxu0 0
      %1286 = vmatprep.mubr.bf16.mxu0 0
      %1287 = vmatmul.mubr.bf16.gmra.mrb[0].mxu0 %v1249
      %v1288 = vpop.f32.mrb[0].mxu0
      %v1289 = vadd.f32 0.0, %v1288
      %v1290 = vpop.f32.mrb[0].mxu0
      %v1291 = vpop.f32.mrb[0].mxu0
      %v1292 = vpop.f32.mrb[0].mxu0
      %1293 = vdwg.mxu0
      %1294 = vrot.lane.b32.xlu0 %v901, 64
      %v1295 = vpop.permute.xlu0 %1294
      %v1297 = vsel %vm1150, %v1147, 0
      %v1300 = vsel %vm1154, %v1295, 0
      %1302 = vmatprep.subr.bf16.mxu0 0
      %1303 = vmatpush1.bf16.msra.mxu0 %v1300
      %1304 = vmatprep.subr.bf16.mxu0 0
      %1305 = vmatpush1.bf16.msra.mxu0 0
      %1306 = vmatprep.subr.bf16.mxu0 0
      %1307 = vmatpush1.bf16.msra.mxu0 0
      %1308 = vmatprep.subr.bf16.mxu0 0
      %1309 = vmatpush1.bf16.msra.mxu0 0
      %1310 = vmatprep.subr.bf16.mxu0 0
      %1311 = vmatpush1.bf16.msra.mxu0 0
      %1312 = vmatprep.subr.bf16.mxu0 0
      %1313 = vmatpush1.bf16.msra.mxu0 0
      %1314 = vmatprep.subr.bf16.mxu0 0
      %1315 = vmatpush1.bf16.msra.mxu0 0
      %1316 = vmatprep.subr.bf16.mxu0 0
      %1317 = vmatpush1.bf16.msra.mxu0 0
      %1318 = vmatprep.subr.bf16.mxu0 0
      %1319 = vmatpush1.bf16.msra.mxu0 0
      %1320 = vmatprep.subr.bf16.mxu0 0
      %1321 = vmatpush1.bf16.msra.mxu0 0
      %1322 = vmatprep.subr.bf16.mxu0 0
      %1323 = vmatpush1.bf16.msra.mxu0 0
      %1324 = vmatprep.subr.bf16.mxu0 0
      %1325 = vmatpush1.bf16.msra.mxu0 0
      %1326 = vmatprep.subr.bf16.mxu0 0
      %1327 = vmatpush1.bf16.msra.mxu0 0
      %1328 = vmatprep.subr.bf16.mxu0 0
      %1329 = vmatpush1.bf16.msra.mxu0 0
      %1330 = vmatprep.subr.bf16.mxu0 0
      %1331 = vmatpush1.bf16.msra.mxu0 0
      %1332 = vmatprep.subr.bf16.mxu0 0
      %1333 = vmatpush1.bf16.msra.mxu0 0
      %1334 = vmatprep.mubr.bf16.mxu0 0
      %1335 = vmatmul.mubr.bf16.gmra.mrb[0].mxu0 %v1297
      %v1336 = vpop.f32.mrb[0].mxu0
      %v1337 = vadd.f32 0.0, %v1336
      %v1338 = vpop.f32.mrb[0].mxu0
      %v1339 = vpop.f32.mrb[0].mxu0
      %v1340 = vpop.f32.mrb[0].mxu0
      %1341 = vdwg.mxu0
      %1342 = vrot.lane.b32.xlu0 %v898, 112
      %v1343 = vpop.permute.xlu0 %1342
      %1344 = vrot.lane.b32.xlu0 %v898, 80
      %v1345 = vpop.permute.xlu0 %1344
      %v1347 = vsel %vm905, %v1343, 0
      %v1350 = vsel %vm905, %v1345, 0
      %1352 = vmatprep.subr.bf16.mxu0 0
      %1353 = vmatpush1.bf16.xpose.msra.mxu0 %v1350
      %1354 = vmatprep.subr.bf16.mxu0 0
      %1355 = vmatpush1.bf16.xpose.msra.mxu0 0
      %1356 = vmatprep.subr.bf16.mxu0 0
      %1357 = vmatpush1.bf16.xpose.msra.mxu0 0
      %1358 = vmatprep.subr.bf16.mxu0 0
      %1359 = vmatpush1.bf16.xpose.msra.mxu0 0
      %1360 = vmatprep.subr.bf16.mxu0 0
      %1361 = vmatpush1.bf16.xpose.msra.mxu0 0
      %1362 = vmatprep.subr.bf16.mxu0 0
      %1363 = vmatpush1.bf16.xpose.msra.mxu0 0
      %1364 = vmatprep.subr.bf16.mxu0 0
      %1365 = vmatpush1.bf16.xpose.msra.mxu0 0
      %1366 = vmatprep.subr.bf16.mxu0 0
      %1367 = vmatpush1.bf16.xpose.msra.mxu0 0
      %1368 = vmatprep.subr.bf16.mxu0 0
      %1369 = vmatpush1.bf16.xpose.msra.mxu0 0
      %1370 = vmatprep.subr.bf16.mxu0 0
      %1371 = vmatpush1.bf16.xpose.msra.mxu0 0
      %1372 = vmatprep.subr.bf16.mxu0 0
      %1373 = vmatpush1.bf16.xpose.msra.mxu0 0
      %1374 = vmatprep.subr.bf16.mxu0 0
      %1375 = vmatpush1.bf16.xpose.msra.mxu0 0
      %1376 = vmatprep.subr.bf16.mxu0 0
      %1377 = vmatpush1.bf16.xpose.msra.mxu0 0
      %1378 = vmatprep.subr.bf16.mxu0 0
      %1379 = vmatpush1.bf16.xpose.msra.mxu0 0
      %1380 = vmatprep.subr.bf16.mxu0 0
      %1381 = vmatpush1.bf16.xpose.msra.mxu0 0
      %1382 = vmatprep.subr.bf16.mxu0 0
      %1383 = vmatpush1.bf16.xpose.msra.mxu0 0
      %1384 = vmatprep.mubr.bf16.mxu0 0
      %1385 = vmatmul.mubr.bf16.gmra.mrb[0].mxu0 %v1347
      %v1386 = vpop.f32.mrb[0].mxu0
      %v1387 = vadd.f32 0.0, %v1386
      %v1388 = vpop.f32.mrb[0].mxu0
      %v1389 = vpop.f32.mrb[0].mxu0
      %v1390 = vpop.f32.mrb[0].mxu0
      %1391 = vdwg.mxu0
      %1392 = vrot.lane.b32.xlu0 %v899, 112
      %v1393 = vpop.permute.xlu0 %1392
      %1394 = vrot.lane.b32.xlu0 %v899, 80
      %v1395 = vpop.permute.xlu0 %1394
      %v1397 = vsel %vm905, %v1393, 0
      %v1400 = vsel %vm905, %v1395, 0
      %1402 = vmatprep.subr.bf16.mxu0 0
      %1403 = vmatpush1.bf16.xpose.msra.mxu0 %v1400
      %1404 = vmatprep.subr.bf16.mxu0 0
      %1405 = vmatpush1.bf16.xpose.msra.mxu0 0
      %1406 = vmatprep.subr.bf16.mxu0 0
      %1407 = vmatpush1.bf16.xpose.msra.mxu0 0
      %1408 = vmatprep.subr.bf16.mxu0 0
      %1409 = vmatpush1.bf16.xpose.msra.mxu0 0
      %1410 = vmatprep.subr.bf16.mxu0 0
      %1411 = vmatpush1.bf16.xpose.msra.mxu0 0
      %1412 = vmatprep.subr.bf16.mxu0 0
      %1413 = vmatpush1.bf16.xpose.msra.mxu0 0
      %1414 = vmatprep.subr.bf16.mxu0 0
      %1415 = vmatpush1.bf16.xpose.msra.mxu0 0
      %1416 = vmatprep.subr.bf16.mxu0 0
      %1417 = vmatpush1.bf16.xpose.msra.mxu0 0
      %1418 = vmatprep.subr.bf16.mxu0 0
      %1419 = vmatpush1.bf16.xpose.msra.mxu0 0
      %1420 = vmatprep.subr.bf16.mxu0 0
      %1421 = vmatpush1.bf16.xpose.msra.mxu0 0
      %1422 = vmatprep.subr.bf16.mxu0 0
      %1423 = vmatpush1.bf16.xpose.msra.mxu0 0
      %1424 = vmatprep.subr.bf16.mxu0 0
      %1425 = vmatpush1.bf16.xpose.msra.mxu0 0
      %1426 = vmatprep.subr.bf16.mxu0 0
      %1427 = vmatpush1.bf16.xpose.msra.mxu0 0
      %1428 = vmatprep.subr.bf16.mxu0 0
      %1429 = vmatpush1.bf16.xpose.msra.mxu0 0
      %1430 = vmatprep.subr.bf16.mxu0 0
      %1431 = vmatpush1.bf16.xpose.msra.mxu0 0
      %1432 = vmatprep.subr.bf16.mxu0 0
      %1433 = vmatpush1.bf16.xpose.msra.mxu0 0
      %1434 = vmatprep.mubr.bf16.mxu0 0
      %1435 = vmatmul.mubr.bf16.gmra.mrb[0].mxu0 %v1397
      %v1436 = vpop.f32.mrb[0].mxu0
      %v1437 = vadd.f32 0.0, %v1436
      %v1438 = vpop.f32.mrb[0].mxu0
      %v1439 = vpop.f32.mrb[0].mxu0
      %v1440 = vpop.f32.mrb[0].mxu0
      %1441 = vdwg.mxu0
      %1442 = vrot.lane.b32.xlu0 %v900, 112
      %v1443 = vpop.permute.xlu0 %1442
      %1444 = vrot.lane.b32.xlu0 %v900, 80
      %v1445 = vpop.permute.xlu0 %1444
      %v1447 = vsel %vm905, %v1443, 0
      %v1450 = vsel %vm905, %v1445, 0
      %1452 = vmatprep.subr.bf16.mxu0 0
      %1453 = vmatpush1.bf16.xpose.msra.mxu0 %v1450
      %1454 = vmatprep.subr.bf16.mxu0 0
      %1455 = vmatpush1.bf16.xpose.msra.mxu0 0
      %1456 = vmatprep.subr.bf16.mxu0 0
      %1457 = vmatpush1.bf16.xpose.msra.mxu0 0
      %1458 = vmatprep.subr.bf16.mxu0 0
      %1459 = vmatpush1.bf16.xpose.msra.mxu0 0
      %1460 = vmatprep.subr.bf16.mxu0 0
      %1461 = vmatpush1.bf16.xpose.msra.mxu0 0
      %1462 = vmatprep.subr.bf16.mxu0 0
      %1463 = vmatpush1.bf16.xpose.msra.mxu0 0
      %1464 = vmatprep.subr.bf16.mxu0 0
      %1465 = vmatpush1.bf16.xpose.msra.mxu0 0
      %1466 = vmatprep.subr.bf16.mxu0 0
      %1467 = vmatpush1.bf16.xpose.msra.mxu0 0
      %1468 = vmatprep.subr.bf16.mxu0 0
      %1469 = vmatpush1.bf16.xpose.msra.mxu0 0
      %1470 = vmatprep.subr.bf16.mxu0 0
      %1471 = vmatpush1.bf16.xpose.msra.mxu0 0
      %1472 = vmatprep.subr.bf16.mxu0 0
      %1473 = vmatpush1.bf16.xpose.msra.mxu0 0
      %1474 = vmatprep.subr.bf16.mxu0 0
      %1475 = vmatpush1.bf16.xpose.msra.mxu0 0
      %1476 = vmatprep.subr.bf16.mxu0 0
      %1477 = vmatpush1.bf16.xpose.msra.mxu0 0
      %1478 = vmatprep.subr.bf16.mxu0 0
      %1479 = vmatpush1.bf16.xpose.msra.mxu0 0
      %1480 = vmatprep.subr.bf16.mxu0 0
      %1481 = vmatpush1.bf16.xpose.msra.mxu0 0
      %1482 = vmatprep.subr.bf16.mxu0 0
      %1483 = vmatpush1.bf16.xpose.msra.mxu0 0
      %1484 = vmatprep.mubr.bf16.mxu0 0
      %1485 = vmatmul.mubr.bf16.gmra.mrb[0].mxu0 %v1447
      %v1486 = vpop.f32.mrb[0].mxu0
      %v1487 = vadd.f32 0.0, %v1486
      %v1488 = vpop.f32.mrb[0].mxu0
      %v1489 = vpop.f32.mrb[0].mxu0
      %v1490 = vpop.f32.mrb[0].mxu0
      %1491 = vdwg.mxu0
      %1492 = vrot.lane.b32.xlu0 %v901, 112
      %v1493 = vpop.permute.xlu0 %1492
      %1494 = vrot.lane.b32.xlu0 %v901, 80
      %v1495 = vpop.permute.xlu0 %1494
      %v1497 = vsel %vm905, %v1493, 0
      %v1500 = vsel %vm905, %v1495, 0
      %1502 = vmatprep.subr.bf16.mxu0 0
      %1503 = vmatpush1.bf16.xpose.msra.mxu0 %v1500
      %1504 = vmatprep.subr.bf16.mxu0 0
      %1505 = vmatpush1.bf16.xpose.msra.mxu0 0
      %1506 = vmatprep.subr.bf16.mxu0 0
      %1507 = vmatpush1.bf16.xpose.msra.mxu0 0
      %1508 = vmatprep.subr.bf16.mxu0 0
      %1509 = vmatpush1.bf16.xpose.msra.mxu0 0
      %1510 = vmatprep.subr.bf16.mxu0 0
      %1511 = vmatpush1.bf16.xpose.msra.mxu0 0
      %1512 = vmatprep.subr.bf16.mxu0 0
      %1513 = vmatpush1.bf16.xpose.msra.mxu0 0
      %1514 = vmatprep.subr.bf16.mxu0 0
      %1515 = vmatpush1.bf16.xpose.msra.mxu0 0
      %1516 = vmatprep.subr.bf16.mxu0 0
      %1517 = vmatpush1.bf16.xpose.msra.mxu0 0
      %1518 = vmatprep.subr.bf16.mxu0 0
      %1519 = vmatpush1.bf16.xpose.msra.mxu0 0
      %1520 = vmatprep.subr.bf16.mxu0 0
      %1521 = vmatpush1.bf16.xpose.msra.mxu0 0
      %1522 = vmatprep.subr.bf16.mxu0 0
      %1523 = vmatpush1.bf16.xpose.msra.mxu0 0
      %1524 = vmatprep.subr.bf16.mxu0 0
      %1525 = vmatpush1.bf16.xpose.msra.mxu0 0
      %1526 = vmatprep.subr.bf16.mxu0 0
      %1527 = vmatpush1.bf16.xpose.msra.mxu0 0
      %1528 = vmatprep.subr.bf16.mxu0 0
      %1529 = vmatpush1.bf16.xpose.msra.mxu0 0
      %1530 = vmatprep.subr.bf16.mxu0 0
      %1531 = vmatpush1.bf16.xpose.msra.mxu0 0
      %1532 = vmatprep.subr.bf16.mxu0 0
      %1533 = vmatpush1.bf16.xpose.msra.mxu0 0
      %1534 = vmatprep.mubr.bf16.mxu0 0
      %1535 = vmatmul.mubr.bf16.gmra.mrb[0].mxu0 %v1497
      %v1536 = vpop.f32.mrb[0].mxu0
      %v1537 = vadd.f32 0.0, %v1536
      %v1538 = vpop.f32.mrb[0].mxu0
      %v1539 = vpop.f32.mrb[0].mxu0
      %v1540 = vpop.f32.mrb[0].mxu0
      %1541 = vdwg.mxu0
      %v1542 = vsel %vm1099, %v1387, -inf
      %1543 = vmax.xlane.f32.xlu0 %v1542
      %v1544 = vpop.xlane.xlu0 %1543
      %v1545 = vsel %vm1099, %v1437, -inf
      %1546 = vmax.xlane.f32.xlu0 %v1545
      %v1547 = vpop.xlane.xlu0 %1546
      %v1548 = vsel %vm1099, %v1487, -inf
      %1549 = vmax.xlane.f32.xlu0 %v1548
      %v1550 = vpop.xlane.xlu0 %1549
      %v1551 = vsel %vm1099, %v1537, -inf
      %1552 = vmax.xlane.f32.xlu0 %v1551
      %v1553 = vpop.xlane.xlu0 %1552
      %v1554 = vsub.f32 %v1387, %v1544
      %v1555 = vsub.f32 %v1437, %v1547
      %v1556 = vsub.f32 %v1487, %v1550
      %v1557 = vsub.f32 %v1537, %v1553
      %v1558 = vmul.f32 %v1554, 1.442695
      %v1559 = vpow.pop %v1558
      %v1560 = vmul.f32 %v1555, 1.442695
      %v1561 = vpow.pop %v1560
      %v1562 = vmul.f32 %v1556, 1.442695
      %v1563 = vpow.pop %v1562
      %v1564 = vmul.f32 %v1557, 1.442695
      %v1565 = vpow.pop %v1564
      %v1566 = vsel %vm1099, %v1559, 0.0
      %1567 = vadd.xlane.f32.xlu0 %v1566
      %v1568 = vpop.xlane.xlu0 %1567
      %v1569 = vsel %vm1099, %v1561, 0.0
      %1570 = vadd.xlane.f32.xlu0 %v1569
      %v1571 = vpop.xlane.xlu0 %1570
      %v1572 = vsel %vm1099, %v1563, 0.0
      %1573 = vadd.xlane.f32.xlu0 %v1572
      %v1574 = vpop.xlane.xlu0 %1573
      %v1575 = vsel %vm1099, %v1565, 0.0
      %1576 = vadd.xlane.f32.xlu0 %v1575
      %v1577 = vpop.xlane.xlu0 %1576
      %v1578 = vrcp.pop %v1568
      %v1579 = vrcp.pop %v1571
      %v1580 = vrcp.pop %v1574
      %v1581 = vrcp.pop %v1577
      %v1582 = vmul.f32 %v1559, %v1578
      %v1583 = vmul.f32 %v1561, %v1579
      %v1584 = vmul.f32 %v1563, %v1580
      %v1585 = vmul.f32 %v1565, %v1581
      %v1586 = vpack.c.bf16 %v1582, %v1582
      %v1587 = vpack.c.bf16 %v1583, %v1583
      %v1588 = vpack.c.bf16 %v1584, %v1584
      %v1589 = vpack.c.bf16 %v1585, %v1585
      %1590 = vrot.lane.b32.xlu0 %v898, 48
      %v1591 = vpop.permute.xlu0 %1590
      %v1593 = vsel %vm1150, %v1586, 0
      %v1596 = vsel %vm1154, %v1591, 0
      %1598 = vmatprep.subr.bf16.mxu0 0
      %1599 = vmatpush1.bf16.msra.mxu0 %v1596
      %1600 = vmatprep.subr.bf16.mxu0 0
      %1601 = vmatpush1.bf16.msra.mxu0 0
      %1602 = vmatprep.subr.bf16.mxu0 0
      %1603 = vmatpush1.bf16.msra.mxu0 0
      %1604 = vmatprep.subr.bf16.mxu0 0
      %1605 = vmatpush1.bf16.msra.mxu0 0
      %1606 = vmatprep.subr.bf16.mxu0 0
      %1607 = vmatpush1.bf16.msra.mxu0 0
      %1608 = vmatprep.subr.bf16.mxu0 0
      %1609 = vmatpush1.bf16.msra.mxu0 0
      %1610 = vmatprep.subr.bf16.mxu0 0
      %1611 = vmatpush1.bf16.msra.mxu0 0
      %1612 = vmatprep.subr.bf16.mxu0 0
      %1613 = vmatpush1.bf16.msra.mxu0 0
      %1614 = vmatprep.subr.bf16.mxu0 0
      %1615 = vmatpush1.bf16.msra.mxu0 0
      %1616 = vmatprep.subr.bf16.mxu0 0
      %1617 = vmatpush1.bf16.msra.mxu0 0
      %1618 = vmatprep.subr.bf16.mxu0 0
      %1619 = vmatpush1.bf16.msra.mxu0 0
      %1620 = vmatprep.subr.bf16.mxu0 0
      %1621 = vmatpush1.bf16.msra.mxu0 0
      %1622 = vmatprep.subr.bf16.mxu0 0
      %1623 = vmatpush1.bf16.msra.mxu0 0
      %1624 = vmatprep.subr.bf16.mxu0 0
      %1625 = vmatpush1.bf16.msra.mxu0 0
      %1626 = vmatprep.subr.bf16.mxu0 0
      %1627 = vmatpush1.bf16.msra.mxu0 0
      %1628 = vmatprep.subr.bf16.mxu0 0
      %1629 = vmatpush1.bf16.msra.mxu0 0
      %1630 = vmatprep.mubr.bf16.mxu0 0
      %1631 = vmatmul.mubr.bf16.gmra.mrb[0].mxu0 %v1593
      %v1632 = vpop.f32.mrb[0].mxu0
      %v1633 = vadd.f32 0.0, %v1632
      %v1634 = vpop.f32.mrb[0].mxu0
      %v1635 = vpop.f32.mrb[0].mxu0
      %v1636 = vpop.f32.mrb[0].mxu0
      %1637 = vdwg.mxu0
      %1638 = vrot.lane.b32.xlu0 %v899, 48
      %v1639 = vpop.permute.xlu0 %1638
      %v1641 = vsel %vm1150, %v1587, 0
      %v1644 = vsel %vm1154, %v1639, 0
      %1646 = vmatprep.subr.bf16.mxu0 0
      %1647 = vmatpush1.bf16.msra.mxu0 %v1644
      %1648 = vmatprep.subr.bf16.mxu0 0
      %1649 = vmatpush1.bf16.msra.mxu0 0
      %1650 = vmatprep.subr.bf16.mxu0 0
      %1651 = vmatpush1.bf16.msra.mxu0 0
      %1652 = vmatprep.subr.bf16.mxu0 0
      %1653 = vmatpush1.bf16.msra.mxu0 0
      %1654 = vmatprep.subr.bf16.mxu0 0
      %1655 = vmatpush1.bf16.msra.mxu0 0
      %1656 = vmatprep.subr.bf16.mxu0 0
      %1657 = vmatpush1.bf16.msra.mxu0 0
      %1658 = vmatprep.subr.bf16.mxu0 0
      %1659 = vmatpush1.bf16.msra.mxu0 0
      %1660 = vmatprep.subr.bf16.mxu0 0
      %1661 = vmatpush1.bf16.msra.mxu0 0
      %1662 = vmatprep.subr.bf16.mxu0 0
      %1663 = vmatpush1.bf16.msra.mxu0 0
      %1664 = vmatprep.subr.bf16.mxu0 0
      %1665 = vmatpush1.bf16.msra.mxu0 0
      %1666 = vmatprep.subr.bf16.mxu0 0
      %1667 = vmatpush1.bf16.msra.mxu0 0
      %1668 = vmatprep.subr.bf16.mxu0 0
      %1669 = vmatpush1.bf16.msra.mxu0 0
      %1670 = vmatprep.subr.bf16.mxu0 0
      %1671 = vmatpush1.bf16.msra.mxu0 0
      %1672 = vmatprep.subr.bf16.mxu0 0
      %1673 = vmatpush1.bf16.msra.mxu0 0
      %1674 = vmatprep.subr.bf16.mxu0 0
      %1675 = vmatpush1.bf16.msra.mxu0 0
      %1676 = vmatprep.subr.bf16.mxu0 0
      %1677 = vmatpush1.bf16.msra.mxu0 0
      %1678 = vmatprep.mubr.bf16.mxu0 0
      %1679 = vmatmul.mubr.bf16.gmra.mrb[0].mxu0 %v1641
      %v1680 = vpop.f32.mrb[0].mxu0
      %v1681 = vadd.f32 0.0, %v1680
      %v1682 = vpop.f32.mrb[0].mxu0
      %v1683 = vpop.f32.mrb[0].mxu0
      %v1684 = vpop.f32.mrb[0].mxu0
      %1685 = vdwg.mxu0
      %1686 = vrot.lane.b32.xlu0 %v900, 48
      %v1687 = vpop.permute.xlu0 %1686
      %v1689 = vsel %vm1150, %v1588, 0
      %v1692 = vsel %vm1154, %v1687, 0
      %1694 = vmatprep.subr.bf16.mxu0 0
      %1695 = vmatpush1.bf16.msra.mxu0 %v1692
      %1696 = vmatprep.subr.bf16.mxu0 0
      %1697 = vmatpush1.bf16.msra.mxu0 0
      %1698 = vmatprep.subr.bf16.mxu0 0
      %1699 = vmatpush1.bf16.msra.mxu0 0
      %1700 = vmatprep.subr.bf16.mxu0 0
      %1701 = vmatpush1.bf16.msra.mxu0 0
      %1702 = vmatprep.subr.bf16.mxu0 0
      %1703 = vmatpush1.bf16.msra.mxu0 0
      %1704 = vmatprep.subr.bf16.mxu0 0
      %1705 = vmatpush1.bf16.msra.mxu0 0
      %1706 = vmatprep.subr.bf16.mxu0 0
      %1707 = vmatpush1.bf16.msra.mxu0 0
      %1708 = vmatprep.subr.bf16.mxu0 0
      %1709 = vmatpush1.bf16.msra.mxu0 0
      %1710 = vmatprep.subr.bf16.mxu0 0
      %1711 = vmatpush1.bf16.msra.mxu0 0
      %1712 = vmatprep.subr.bf16.mxu0 0
      %1713 = vmatpush1.bf16.msra.mxu0 0
      %1714 = vmatprep.subr.bf16.mxu0 0
      %1715 = vmatpush1.bf16.msra.mxu0 0
      %1716 = vmatprep.subr.bf16.mxu0 0
      %1717 = vmatpush1.bf16.msra.mxu0 0
      %1718 = vmatprep.subr.bf16.mxu0 0
      %1719 = vmatpush1.bf16.msra.mxu0 0
      %1720 = vmatprep.subr.bf16.mxu0 0
      %1721 = vmatpush1.bf16.msra.mxu0 0
      %1722 = vmatprep.subr.bf16.mxu0 0
      %1723 = vmatpush1.bf16.msra.mxu0 0
      %1724 = vmatprep.subr.bf16.mxu0 0
      %1725 = vmatpush1.bf16.msra.mxu0 0
      %1726 = vmatprep.mubr.bf16.mxu0 0
      %1727 = vmatmul.mubr.bf16.gmra.mrb[0].mxu0 %v1689
      %v1728 = vpop.f32.mrb[0].mxu0
      %v1729 = vadd.f32 0.0, %v1728
      %v1730 = vpop.f32.mrb[0].mxu0
      %v1731 = vpop.f32.mrb[0].mxu0
      %v1732 = vpop.f32.mrb[0].mxu0
      %1733 = vdwg.mxu0
      %1734 = vrot.lane.b32.xlu0 %v901, 48
      %v1735 = vpop.permute.xlu0 %1734
      %v1737 = vsel %vm1150, %v1589, 0
      %v1740 = vsel %vm1154, %v1735, 0
      %1742 = vmatprep.subr.bf16.mxu0 0
      %1743 = vmatpush1.bf16.msra.mxu0 %v1740
      %1744 = vmatprep.subr.bf16.mxu0 0
      %1745 = vmatpush1.bf16.msra.mxu0 0
      %1746 = vmatprep.subr.bf16.mxu0 0
      %1747 = vmatpush1.bf16.msra.mxu0 0
      %1748 = vmatprep.subr.bf16.mxu0 0
      %1749 = vmatpush1.bf16.msra.mxu0 0
      %1750 = vmatprep.subr.bf16.mxu0 0
      %1751 = vmatpush1.bf16.msra.mxu0 0
      %1752 = vmatprep.subr.bf16.mxu0 0
      %1753 = vmatpush1.bf16.msra.mxu0 0
      %1754 = vmatprep.subr.bf16.mxu0 0
      %1755 = vmatpush1.bf16.msra.mxu0 0
      %1756 = vmatprep.subr.bf16.mxu0 0
      %1757 = vmatpush1.bf16.msra.mxu0 0
      %1758 = vmatprep.subr.bf16.mxu0 0
      %1759 = vmatpush1.bf16.msra.mxu0 0
      %1760 = vmatprep.subr.bf16.mxu0 0
      %1761 = vmatpush1.bf16.msra.mxu0 0
      %1762 = vmatprep.subr.bf16.mxu0 0
      %1763 = vmatpush1.bf16.msra.mxu0 0
      %1764 = vmatprep.subr.bf16.mxu0 0
      %1765 = vmatpush1.bf16.msra.mxu0 0
      %1766 = vmatprep.subr.bf16.mxu0 0
      %1767 = vmatpush1.bf16.msra.mxu0 0
      %1768 = vmatprep.subr.bf16.mxu0 0
      %1769 = vmatpush1.bf16.msra.mxu0 0
      %1770 = vmatprep.subr.bf16.mxu0 0
      %1771 = vmatpush1.bf16.msra.mxu0 0
      %1772 = vmatprep.subr.bf16.mxu0 0
      %1773 = vmatpush1.bf16.msra.mxu0 0
      %1774 = vmatprep.mubr.bf16.mxu0 0
      %1775 = vmatmul.mubr.bf16.gmra.mrb[0].mxu0 %v1737
      %v1776 = vpop.f32.mrb[0].mxu0
      %v1777 = vadd.f32 0.0, %v1776
      %v1778 = vpop.f32.mrb[0].mxu0
      %v1779 = vpop.f32.mrb[0].mxu0
      %v1780 = vpop.f32.mrb[0].mxu0
      %1781 = vdwg.mxu0
      %1786 = vrot.lane.b32.xlu0 %v1633, 16
      %v1787 = vpop.permute.xlu0 %1786
      %1788 = vrot.lane.b32.xlu0 %v1681, 16
      %v1789 = vpop.permute.xlu0 %1788
      %1790 = vrot.lane.b32.xlu0 %v1729, 16
      %v1791 = vpop.permute.xlu0 %1790
      %1792 = vrot.lane.b32.xlu0 %v1777, 16
      %v1793 = vpop.permute.xlu0 %1792
      %v1798 = vsel %vm905, %v1193, %v1787
      %v1799 = vsel %vm905, %v1241, %v1789
      %v1800 = vsel %vm905, %v1289, %v1791
      %v1801 = vsel %vm905, %v1337, %v1793
      %v1806 = vcombine.low %v1798, %v1799
      %v1807 = vcombine.low %v1800, %v1801
      %v1810 = vpack.c.bf16 %v1807, %v1806
      %v1811 = vld [vmem:[%s691] sm:$0xf]
      %v1812 = vld [vmem:[%s691 + $0x4] sm:$0xf]
      %v1813 = vld [vmem:[%s691 + $0x8] sm:$0xf]
      %v1814 = vld [vmem:[%s691 + $0xc] sm:$0xf]
      %v1815 = vld [vmem:[%s694] sm:$0x1]
      %v1817 = vlaneseq
      %v1818 = vshrl.u32 %v1817, 7
      %v1819 = vsub.s32 0, %v1818
      %v1820 = vrot.slane %v1815, %v1819
      %v1826 = vunpack.c.l.b16 %v1811
      %v1827 = vunpack.c.l.b16 %v1812
      %v1828 = vunpack.c.l.b16 %v1813
      %v1829 = vunpack.c.l.b16 %v1814
      %v1830 = vpack.c.b16 %v1827, %v1826
      %v1831 = vpack.c.b16 %v1829, %v1828
      %v1835 = vsel %vm847, %v1810, 0
      %1837 = vmatprep.subr.bf16.mxu0 0
      %1838 = vmatpush1.bf16.msra.mxu0 %v1830
      %1839 = vmatprep.subr.bf16.mxu0 0
      %1840 = vmatpush1.bf16.msra.mxu0 %v1831
      %1841 = vmatprep.subr.bf16.mxu0 0
      %1842 = vmatpush1.bf16.msra.mxu0 0
      %1843 = vmatprep.subr.bf16.mxu0 0
      %1844 = vmatpush1.bf16.msra.mxu0 0
      %1845 = vmatprep.subr.bf16.mxu0 0
      %1846 = vmatpush1.bf16.msra.mxu0 0
      %1847 = vmatprep.subr.bf16.mxu0 0
      %1848 = vmatpush1.bf16.msra.mxu0 0
      %1849 = vmatprep.subr.bf16.mxu0 0
      %1850 = vmatpush1.bf16.msra.mxu0 0
      %1851 = vmatprep.subr.bf16.mxu0 0
      %1852 = vmatpush1.bf16.msra.mxu0 0
      %1853 = vmatprep.subr.bf16.mxu0 0
      %1854 = vmatpush1.bf16.msra.mxu0 0
      %1855 = vmatprep.subr.bf16.mxu0 0
      %1856 = vmatpush1.bf16.msra.mxu0 0
      %1857 = vmatprep.subr.bf16.mxu0 0
      %1858 = vmatpush1.bf16.msra.mxu0 0
      %1859 = vmatprep.subr.bf16.mxu0 0
      %1860 = vmatpush1.bf16.msra.mxu0 0
      %1861 = vmatprep.subr.bf16.mxu0 0
      %1862 = vmatpush1.bf16.msra.mxu0 0
      %1863 = vmatprep.subr.bf16.mxu0 0
      %1864 = vmatpush1.bf16.msra.mxu0 0
      %1865 = vmatprep.subr.bf16.mxu0 0
      %1866 = vmatpush1.bf16.msra.mxu0 0
      %1867 = vmatprep.subr.bf16.mxu0 0
      %1868 = vmatpush1.bf16.msra.mxu0 0
      %1869 = vmatprep.mubr.bf16.mxu0 0
      %1870 = vmatmul.mubr.bf16.gmra.mrb[0].mxu0 %v1835
      %v1871 = vpop.f32.mrb[0].mxu0
      %v1872 = vadd.f32 %v1820, %v1871
      %v1873 = vpop.f32.mrb[0].mxu0
      %v1874 = vpop.f32.mrb[0].mxu0
      %v1875 = vadd.f32 %v1820, %v1874
      %v1876 = vpop.f32.mrb[0].mxu0
      %1877 = vdwg.mxu0
      %v1878 = vadd.f32 %v821, %v1872
      %v1879 = vadd.f32 %v822, %v1875
      %v1880 = vld [vmem:[%s697] sm:$0x1]
      %v1881 = vld [vmem:[%s700] sm:$0x1]
      %v1882 = vsel %vm847, %v1878, 0.0
      %1883 = vadd.xlane.f32.xlu0 %v1882
      %v1884 = vpop.xlane.xlu0 %1883
      %v1885 = vsel %vm847, %v1879, 0.0
      %1886 = vadd.xlane.f32.xlu0 %v1885
      %v1887 = vpop.xlane.xlu0 %1886
      %v1888 = vrcp.pop 32.0
      %v1889 = vmul.f32 %v1884, %v1888
      %v1890 = vmul.f32 %v1887, %v1888
      %v1891 = vsub.f32 %v1878, %v1889
      %v1892 = vsub.f32 %v1879, %v1890
      %v1893 = vmul.f32 %v1891, %v1891
      %v1894 = vmul.f32 %v1892, %v1892
      %v1895 = vsel %vm847, %v1893, 0.0
      %1896 = vadd.xlane.f32.xlu0 %v1895
      %v1897 = vpop.xlane.xlu0 %1896
      %v1898 = vsel %vm847, %v1894, 0.0
      %1899 = vadd.xlane.f32.xlu0 %v1898
      %v1900 = vpop.xlane.xlu0 %1899
      %v1901 = vmul.f32 %v1897, %v1888
      %v1902 = vmul.f32 %v1900, %v1888
      %v1903 = vadd.f32 %v1901, 1e-05
      %v1904 = vadd.f32 %v1902, 1e-05
      %v1905 = vrsqrt.pop %v1903
      %v1906 = vrsqrt.pop %v1904
      %v1907 = vmul.f32 %v1891, %v1905
      %v1908 = vmul.f32 %v1892, %v1906
      %v1910 = vlaneseq
      %v1911 = vshrl.u32 %v1910, 7
      %v1912 = vsub.s32 0, %v1911
      %v1913 = vrot.slane %v1880, %v1912
      %v1915 = vmul.f32 %v1907, %v1913
      %v1916 = vmul.f32 %v1908, %v1913
      %v1918 = vlaneseq
      %v1919 = vshrl.u32 %v1918, 7
      %v1920 = vsub.s32 0, %v1919
      %v1921 = vrot.slane %v1881, %v1920
      %v1923 = vadd.f32 %v1915, %v1921
      %v1924 = vadd.f32 %v1916, %v1921
      %v1925 = vpack.c.bf16 %v1924, %v1923
      %v1926 = vld [vmem:[%s705] sm:$0xf]
      %v1927 = vld [vmem:[%s705 + $0x4] sm:$0xf]
      %v1928 = vld [vmem:[%s705 + $0x8] sm:$0xf]
      %v1929 = vld [vmem:[%s705 + $0xc] sm:$0xf]
      %v1930 = vld [vmem:[%s708] sm:$0x1]
      %v1932 = vlaneseq
      %v1933 = vshrl.u32 %v1932, 7
      %v1934 = vsub.s32 0, %v1933
      %v1935 = vrot.slane %v1930, %v1934
      %v1941 = vunpack.c.l.b16 %v1926
      %v1942 = vunpack.c.l.b16 %v1927
      %v1943 = vunpack.c.l.b16 %v1928
      %v1944 = vunpack.c.l.b16 %v1929
      %v1945 = vpack.c.b16 %v1942, %v1941
      %v1946 = vpack.c.b16 %v1944, %v1943
      %v1950 = vsel %vm847, %v1925, 0
      %1952 = vmatprep.subr.bf16.mxu0 0
      %1953 = vmatpush1.bf16.msra.mxu0 %v1945
      %1954 = vmatprep.subr.bf16.mxu0 0
      %1955 = vmatpush1.bf16.msra.mxu0 %v1946
      %1956 = vmatprep.subr.bf16.mxu0 0
      %1957 = vmatpush1.bf16.msra.mxu0 0
      %1958 = vmatprep.subr.bf16.mxu0 0
      %1959 = vmatpush1.bf16.msra.mxu0 0
      %1960 = vmatprep.subr.bf16.mxu0 0
      %1961 = vmatpush1.bf16.msra.mxu0 0
      %1962 = vmatprep.subr.bf16.mxu0 0
      %1963 = vmatpush1.bf16.msra.mxu0 0
      %1964 = vmatprep.subr.bf16.mxu0 0
      %1965 = vmatpush1.bf16.msra.mxu0 0
      %1966 = vmatprep.subr.bf16.mxu0 0
      %1967 = vmatpush1.bf16.msra.mxu0 0
      %1968 = vmatprep.subr.bf16.mxu0 0
      %1969 = vmatpush1.bf16.msra.mxu0 0
      %1970 = vmatprep.subr.bf16.mxu0 0
      %1971 = vmatpush1.bf16.msra.mxu0 0
      %1972 = vmatprep.subr.bf16.mxu0 0
      %1973 = vmatpush1.bf16.msra.mxu0 0
      %1974 = vmatprep.subr.bf16.mxu0 0
      %1975 = vmatpush1.bf16.msra.mxu0 0
      %1976 = vmatprep.subr.bf16.mxu0 0
      %1977 = vmatpush1.bf16.msra.mxu0 0
      %1978 = vmatprep.subr.bf16.mxu0 0
      %1979 = vmatpush1.bf16.msra.mxu0 0
      %1980 = vmatprep.subr.bf16.mxu0 0
      %1981 = vmatpush1.bf16.msra.mxu0 0
      %1982 = vmatprep.subr.bf16.mxu0 0
      %1983 = vmatpush1.bf16.msra.mxu0 0
      %1984 = vmatprep.mubr.bf16.mxu0 0
      %1985 = vmatmul.mubr.bf16.gmra.mrb[0].mxu0 %v1950
      %v1986 = vpop.f32.mrb[0].mxu0
      %v1987 = vadd.f32 %v1935, %v1986
      %v1988 = vpop.f32.mrb[0].mxu0
      %v1989 = vpop.f32.mrb[0].mxu0
      %v1990 = vadd.f32 %v1935, %v1989
      %v1991 = vpop.f32.mrb[0].mxu0
      %1992 = vdwg.mxu0
      %v1993 = vmax.f32 %v1987, 0.0
      %v1994 = vmax.f32 %v1990, 0.0
      %v1995 = vpack.c.bf16 %v1994, %v1993
      %v1996 = vld [vmem:[%s713] sm:$0xf]
      %v1997 = vld [vmem:[%s713 + $0x4] sm:$0xf]
      %v1998 = vld [vmem:[%s713 + $0x8] sm:$0xf]
      %v1999 = vld [vmem:[%s713 + $0xc] sm:$0xf]
      %v2000 = vld [vmem:[%s716] sm:$0x1]
      %v2002 = vlaneseq
      %v2003 = vshrl.u32 %v2002, 7
      %v2004 = vsub.s32 0, %v2003
      %v2005 = vrot.slane %v2000, %v2004
      %v2011 = vunpack.c.l.b16 %v1996
      %v2012 = vunpack.c.l.b16 %v1997
      %v2013 = vunpack.c.l.b16 %v1998
      %v2014 = vunpack.c.l.b16 %v1999
      %v2015 = vpack.c.b16 %v2012, %v2011
      %v2016 = vpack.c.b16 %v2014, %v2013
      %v2020 = vsel %vm847, %v1995, 0
      %2022 = vmatprep.subr.bf16.mxu0 0
      %2023 = vmatpush1.bf16.msra.mxu0 %v2015
      %2024 = vmatprep.subr.bf16.mxu0 0
      %2025 = vmatpush1.bf16.msra.mxu0 %v2016
      %2026 = vmatprep.subr.bf16.mxu0 0
      %2027 = vmatpush1.bf16.msra.mxu0 0
      %2028 = vmatprep.subr.bf16.mxu0 0
      %2029 = vmatpush1.bf16.msra.mxu0 0
      %2030 = vmatprep.subr.bf16.mxu0 0
      %2031 = vmatpush1.bf16.msra.mxu0 0
      %2032 = vmatprep.subr.bf16.mxu0 0
      %2033 = vmatpush1.bf16.msra.mxu0 0
      %2034 = vmatprep.subr.bf16.mxu0 0
      %2035 = vmatpush1.bf16.msra.mxu0 0
      %2036 = vmatprep.subr.bf16.mxu0 0
      %2037 = vmatpush1.bf16.msra.mxu0 0
      %2038 = vmatprep.subr.bf16.mxu0 0
      %2039 = vmatpush1.bf16.msra.mxu0 0
      %2040 = vmatprep.subr.bf16.mxu0 0
      %2041 = vmatpush1.bf16.msra.mxu0 0
      %2042 = vmatprep.subr.bf16.mxu0 0
      %2043 = vmatpush1.bf16.msra.mxu0 0
      %2044 = vmatprep.subr.bf16.mxu0 0
      %2045 = vmatpush1.bf16.msra.mxu0 0
      %2046 = vmatprep.subr.bf16.mxu0 0
      %2047 = vmatpush1.bf16.msra.mxu0 0
      %2048 = vmatprep.subr.bf16.mxu0 0
      %2049 = vmatpush1.bf16.msra.mxu0 0
      %2050 = vmatprep.subr.bf16.mxu0 0
      %2051 = vmatpush1.bf16.msra.mxu0 0
      %2052 = vmatprep.subr.bf16.mxu0 0
      %2053 = vmatpush1.bf16.msra.mxu0 0
      %2054 = vmatprep.mubr.bf16.mxu0 0
      %2055 = vmatmul.mubr.bf16.gmra.mrb[0].mxu0 %v2020
      %v2056 = vpop.f32.mrb[0].mxu0
      %v2057 = vadd.f32 %v2005, %v2056
      %v2058 = vpop.f32.mrb[0].mxu0
      %v2059 = vpop.f32.mrb[0].mxu0
      %v2060 = vadd.f32 %v2005, %v2059
      %v2061 = vpop.f32.mrb[0].mxu0
      %2062 = vdwg.mxu0
      %v2063 = vadd.f32 %v1923, %v2057
      %v2064 = vadd.f32 %v1924, %v2060
      %v2065 = vld [vmem:[%s719] sm:$0x1]
      %v2066 = vld [vmem:[%s722] sm:$0x1]
      %v2067 = vsel %vm847, %v2063, 0.0
      %2068 = vadd.xlane.f32.xlu0 %v2067
      %v2069 = vpop.xlane.xlu0 %2068
      %v2070 = vsel %vm847, %v2064, 0.0
      %2071 = vadd.xlane.f32.xlu0 %v2070
      %v2072 = vpop.xlane.xlu0 %2071
      %v2073 = vmul.f32 %v2069, %v1888
      %v2074 = vmul.f32 %v2072, %v1888
      %v2075 = vsub.f32 %v2063, %v2073
      %v2076 = vsub.f32 %v2064, %v2074
      %v2077 = vmul.f32 %v2075, %v2075
      %v2078 = vmul.f32 %v2076, %v2076
      %v2079 = vsel %vm847, %v2077, 0.0
      %2080 = vadd.xlane.f32.xlu0 %v2079
      %v2081 = vpop.xlane.xlu0 %2080
      %v2082 = vsel %vm847, %v2078, 0.0
      %2083 = vadd.xlane.f32.xlu0 %v2082
      %v2084 = vpop.xlane.xlu0 %2083
      %v2085 = vmul.f32 %v2081, %v1888
      %v2086 = vmul.f32 %v2084, %v1888
      %v2087 = vadd.f32 %v2085, 1e-05
      %v2088 = vadd.f32 %v2086, 1e-05
      %v2089 = vrsqrt.pop %v2087
      %v2090 = vrsqrt.pop %v2088
      %v2091 = vmul.f32 %v2075, %v2089
      %v2092 = vmul.f32 %v2076, %v2090
      %v2094 = vlaneseq
      %v2095 = vshrl.u32 %v2094, 7
      %v2096 = vsub.s32 0, %v2095
      %v2097 = vrot.slane %v2065, %v2096
      %v2099 = vmul.f32 %v2091, %v2097
      %v2100 = vmul.f32 %v2092, %v2097
      %v2102 = vlaneseq
      %v2103 = vshrl.u32 %v2102, 7
      %v2104 = vsub.s32 0, %v2103
      %v2105 = vrot.slane %v2066, %v2104
      %v2107 = vadd.f32 %v2099, %v2105
      %v2108 = vadd.f32 %v2100, %v2105
      %2109 = vst.msk [vmem:[%s727] sm:$0xff] %vm847, %v2107
      %2110 = vst.msk [vmem:[%s727 + $0x8] sm:$0xff] %vm847, %v2108
      %s2111 = smul.u32 2, %s31
      %p2112 = scmp.lt.s32.totalorder %s2111, 3
      %s2113 = scalar_select %p2112, %s2111, 3
      %s2114 = smul.addr %s2113, 8
      %s2115 = scalar_lea.vmem %s16, %s2114
      // Predicated region
      $region89: #{transformer_lstm_forward.2} parent=83 // pred_check
        %p2116 = pneg %p458
      $region90: #{transformer_lstm_forward.2} parent=83 // pred_check_branch
        %2118 = sbr.rel (%p2116) target = $region92
      $region91: #{transformer_lstm_forward.2} parent=83 // pred_region
        %s2119 = smul.u32 2, %s31
      $region92: #{transformer_lstm_forward.2} parent=83 // pred_fallthru
        _
    $region84: #{transformer_lstm_forward.2} parent=5 // pred_fallthru
      _
    %p2120 = scmp.le.s32.totalorder 2, %s22
    // Predicated region
    $region93: #{transformer_lstm_forward.2} parent=5 // pred_check
      %p2121 = pneg %p2120
    $region94: #{transformer_lstm_forward.2} parent=5 // pred_check_branch
      %2123 = sbr.rel (%p2121) target = $region96
    $region95: #{transformer_lstm_forward.2} parent=5 // pred_region
      %s2124 = ssub.s32 %s22, 2
      // Predicated region
      $region97: #{transformer_lstm_forward.2} parent=95 // pred_check
        %p2125 = pneg %p464
      $region98: #{transformer_lstm_forward.2} parent=95 // pred_check_branch
        %2127 = sbr.rel (%p2125) target = $region100
      $region99: #{transformer_lstm_forward.2} parent=95 // pred_region
        %s2128 = smul.u32 2, %s33
        %p2129 = scmp.lt.s32.totalorder %s2128, 3
        %s2130 = scalar_select %p2129, %s2128, 3
        %s2131 = smul.addr %s2130, 8
        %s2132 = scalar_lea.vmem %s16, %s2131
      $region100: #{transformer_lstm_forward.2} parent=95 // pred_fallthru
        _
    $region96: #{transformer_lstm_forward.2} parent=5 // pred_fallthru
      _
  $region6: #{transformer_lstm_forward.2} parent=0 // loop_footer
    %s26 = sadd.s32 1, %s22
  $region7: #{transformer_lstm_forward.2} parent=0 // loop_footer_branch
    %21 = sbr.rel target = $region3
  $region8: #{transformer_lstm_forward.2} parent=0 // loop_exit
    _

</llo_original>
